<compile_context>
chip_gen: v5e
topology: v5e:2x2
jax: 0.10.0
libtpu: 0.0.40
codegen_flags: <defaults>
</compile_context>

<pallas_src>
import math

import jax
import jax.numpy as jnp
import numpy as np
from jax import lax
from jax.experimental import pallas as pl
from jax.experimental.pallas import tpu as pltpu


# ----------------------------- helpers --------------------------------------
def _largest_divisor_leq(n, target):
    target = max(1, min(n, target))
    for c in range(target, 0, -1):
        if n % c == 0:
            return c
    return 1


def _pick_head_t_blk(T, B, target_rows=256, max_rows=2048):
    """Smallest divisor of T giving >= target_rows MXU rows, bounded by max_rows."""
    divs = [d for d in range(1, T + 1) if T % d == 0]
    ok = [d for d in divs if d * B <= max_rows] or [divs[0]]
    for d in ok:
        if d * B >= target_rows:
            return d
    return ok[-1]


def _compiler_params(dimension_semantics, vmem_bytes_estimate):
    kwargs = {"dimension_semantics": dimension_semantics}
    if vmem_bytes_estimate > 32 * 1024 * 1024:
        # Raise the scoped-VMEM limit explicitly for big configs; cap at v7x's
        # 64 MiB physical VMEM.
        kwargs["vmem_limit_bytes"] = min(int(vmem_bytes_estimate), 64 * 1024 * 1024)
    return pltpu.CompilerParams(**kwargs)


# ----------------------------- LSTM recurrence ------------------------------
def _lstm_chunk(x_ref, h0_ref, c0_ref, wih_ref, whh_ref, b_ref,
                gx_sc, y_sc, h_sc, c_sc):
    """Run this T-chunk's recurrence; per-step hidden states land in y_sc (f32)."""
    B, H = h_sc.shape
    t_chunk = y_sc.shape[0]

    # h/c live in VMEM scratch and persist across grid steps (chunks).
    @pl.when(pl.program_id(0) == 0)
    def _():
        h_sc[...] = h0_ref[...]
        c_sc[...] = c0_ref[...]

    # Chunk-local batched input projection (off the recurrent critical path):
    # (t_chunk*B, E) x (E, 4H), bf16 operands, f32 accumulation.
    gx_sc[...] = (jnp.dot(x_ref[...], wih_ref[...],
                          preferred_element_type=jnp.float32) + b_ref[...])

    def step(t, carry):
        row = pl.multiple_of(t * B, B)
        gates = (gx_sc[pl.ds(row, B), :]
                 + jnp.dot(h_sc[...].astype(jnp.bfloat16), whh_ref[...],
                           preferred_element_type=jnp.float32))   # (B, 4H): i,f,g,o
        i_g = jax.nn.sigmoid(gates[:, 0 * H:1 * H])
        f_g = jax.nn.sigmoid(gates[:, 1 * H:2 * H])
        g_g = jnp.tanh(gates[:, 2 * H:3 * H])
        o_g = jax.nn.sigmoid(gates[:, 3 * H:4 * H])

        c = f_g * c_sc[...] + i_g * g_g
        h = o_g * jnp.tanh(c)
        h_sc[...] = h
        c_sc[...] = c
        y_sc[t] = h
        return carry

    # Bounded unroll: keeps scheduler-visible ILP without code-size blowup at
    # large T (full unroll would explode compile time / vreg live ranges).
    lax.fori_loop(0, t_chunk, step, 0, unroll=min(t_chunk, 8))


def lstm_kernel(x_ref, h0_ref, c0_ref, wih_ref, whh_ref, b_ref,
                y_ref, hN_ref, cN_ref, gx_sc, y_sc, h_sc, c_sc):
    _lstm_chunk(x_ref, h0_ref, c0_ref, wih_ref, whh_ref, b_ref,
                gx_sc, y_sc, h_sc, c_sc)
    # Chunk's hidden states written back once, as bf16 (halves HBM writeback;
    # the head casts to bf16 for the MXU anyway).
    y_ref[...] = y_sc[...].astype(y_ref.dtype)
    hN_ref[...] = h_sc[...]
    cN_ref[...] = c_sc[...]


def lstm_head_fused_kernel(x_ref, h0_ref, c0_ref, wih_ref, whh_ref, b_ref,
                           wlin_ref, blin_ref,
                           out_ref, hN_ref, cN_ref,
                           gx_sc, y_sc, h_sc, c_sc):
    _lstm_chunk(x_ref, h0_ref, c0_ref, wih_ref, whh_ref, b_ref,
                gx_sc, y_sc, h_sc, c_sc)
    hN_ref[...] = h_sc[...]
    cN_ref[...] = c_sc[...]

    # Fused head epilogue: one (t_chunk*B, H) x (H, V) MXU matmul + log-softmax.
    t_chunk, B, H = y_sc.shape
    h2 = y_sc[...].reshape(t_chunk * B, H).astype(jnp.bfloat16)
    logits = (jnp.dot(h2, wlin_ref[...], preferred_element_type=jnp.float32)
              .reshape(t_chunk, B, -1) + blin_ref[...])           # (t_chunk, B, V)
    # LogSoftmax over dim=1 of (T, B, V) -> the batch axis, fully inside the block.
    m = jnp.max(logits, axis=1, keepdims=True)
    z = logits - m
    lse = jnp.log(jnp.sum(jnp.exp(z), axis=1, keepdims=True))
    out_ref[...] = (z - lse).astype(out_ref.dtype)


def _lstm_vmem_estimate(t_chunk, B, E, H, V=0):
    bx = t_chunk * B * E * 2                       # x chunk (bf16)
    by = t_chunk * B * (V * 4 if V else H * 2)     # out chunk (f32) or y chunk (bf16)
    w = (E * 4 * H + H * 4 * H) * 2                # W_ih^T + W_hh^T (bf16)
    wlin = H * V * 2 + V * 4 if V else 0           # W_lin^T (bf16) + b_lin
    misc = 2 * B * H * 4 + 4 * H * 4
    scr = t_chunk * B * 4 * H * 4 + t_chunk * B * H * 4 + 2 * B * H * 4
    return 2 * (bx + by) + 2 * (w + wlin) + misc + scr


def run_lstm(x_flat_bf16, h0, c0, w_ih_t, w_hh_t, b, *, t_chunk=None):
    """x_flat_bf16: (T*B, E) bf16; h0/c0: (B, H) f32; weights bf16; b: (1, 4H) f32."""
    TB, E = x_flat_bf16.shape
    B, H = h0.shape
    T = TB // B
    if t_chunk is None:
        t_chunk = _largest_divisor_leq(T, 64)
    assert T % t_chunk == 0
    n_chunks = T // t_chunk
    est = _lstm_vmem_estimate(t_chunk, B, E, H)
    return pl.pallas_call(
        lstm_kernel,
        out_shape=(jax.ShapeDtypeStruct((T, B, H), jnp.bfloat16),
                   jax.ShapeDtypeStruct((B, H), jnp.float32),
                   jax.ShapeDtypeStruct((B, H), jnp.float32)),
        grid_spec=pltpu.PrefetchScalarGridSpec(
            num_scalar_prefetch=0,
            grid=(n_chunks,),
            in_specs=[
                pl.BlockSpec((t_chunk * B, E), lambda i: (i, 0)),   # x chunk
                pl.BlockSpec((B, H), lambda i: (0, 0)),             # h0
                pl.BlockSpec((B, H), lambda i: (0, 0)),             # c0
                pl.BlockSpec((E, 4 * H), lambda i: (0, 0)),         # W_ih^T (bf16)
                pl.BlockSpec((H, 4 * H), lambda i: (0, 0)),         # W_hh^T (bf16)
                pl.BlockSpec((1, 4 * H), lambda i: (0, 0)),         # b_ih + b_hh
            ],
            out_specs=[
                pl.BlockSpec((t_chunk, B, H), lambda i: (i, 0, 0)), # h_t chunk (bf16)
                pl.BlockSpec((B, H), lambda i: (0, 0)),             # h_T
                pl.BlockSpec((B, H), lambda i: (0, 0)),             # c_T
            ],
            scratch_shapes=[
                pltpu.VMEM((t_chunk * B, 4 * H), jnp.float32),      # gates_x chunk
                pltpu.VMEM((t_chunk, B, H), jnp.float32),           # chunk hidden states
                pltpu.VMEM((B, H), jnp.float32),                    # h state
                pltpu.VMEM((B, H), jnp.float32),                    # c state
            ],
        ),
        compiler_params=_compiler_params(("arbitrary",), est),
    )(x_flat_bf16, h0, c0, w_ih_t, w_hh_t, b)


def run_lstm_fused_head(x_flat_bf16, h0, c0, w_ih_t, w_hh_t, b,
                        w_lin_t, b_lin, *, t_chunk=None):
    """Small-vocab path: LSTM + Linear + LogSoftmax in one kernel (no y round trip)."""
    TB, E = x_flat_bf16.shape
    B, H = h0.shape
    V = w_lin_t.shape[-1]
    T = TB // B
    if t_chunk is None:
        t_chunk = _largest_divisor_leq(T, 64)
    assert T % t_chunk == 0
    n_chunks = T // t_chunk
    est = _lstm_vmem_estimate(t_chunk, B, E, H, V)
    return pl.pallas_call(
        lstm_head_fused_kernel,
        out_shape=(jax.ShapeDtypeStruct((T, B, V), jnp.float32),
                   jax.ShapeDtypeStruct((B, H), jnp.float32),
                   jax.ShapeDtypeStruct((B, H), jnp.float32)),
        grid_spec=pltpu.PrefetchScalarGridSpec(
            num_scalar_prefetch=0,
            grid=(n_chunks,),
            in_specs=[
                pl.BlockSpec((t_chunk * B, E), lambda i: (i, 0)),   # x chunk
                pl.BlockSpec((B, H), lambda i: (0, 0)),             # h0
                pl.BlockSpec((B, H), lambda i: (0, 0)),             # c0
                pl.BlockSpec((E, 4 * H), lambda i: (0, 0)),         # W_ih^T (bf16)
                pl.BlockSpec((H, 4 * H), lambda i: (0, 0)),         # W_hh^T (bf16)
                pl.BlockSpec((1, 4 * H), lambda i: (0, 0)),         # b_ih + b_hh
                pl.BlockSpec((H, V), lambda i: (0, 0)),             # W_lin^T (bf16)
                pl.BlockSpec((1, V), lambda i: (0, 0)),             # b_lin
            ],
            out_specs=[
                pl.BlockSpec((t_chunk, B, V), lambda i: (i, 0, 0)), # log-probs chunk
                pl.BlockSpec((B, H), lambda i: (0, 0)),             # h_T
                pl.BlockSpec((B, H), lambda i: (0, 0)),             # c_T
            ],
            scratch_shapes=[
                pltpu.VMEM((t_chunk * B, 4 * H), jnp.float32),      # gates_x chunk
                pltpu.VMEM((t_chunk, B, H), jnp.float32),           # chunk hidden states
                pltpu.VMEM((B, H), jnp.float32),                    # h state
                pltpu.VMEM((B, H), jnp.float32),                    # c state
            ],
        ),
        compiler_params=_compiler_params(("arbitrary",), est),
    )(x_flat_bf16, h0, c0, w_ih_t, w_hh_t, b, w_lin_t, b_lin)


# ----------------------- Linear + LogSoftmax kernel (large V) ----------------
def head_kernel(y_ref, w_ref, b_ref, o_ref):
    t_blk, B, H = y_ref.shape
    # One fused matmul over all timesteps in this block: (t_blk*B, H) x (H, v_blk);
    # y already arrives as bf16.
    h2 = y_ref[...].reshape(t_blk * B, H)
    logits = (jnp.dot(h2, w_ref[...], preferred_element_type=jnp.float32)
              .reshape(t_blk, B, -1) + b_ref[...])                 # (t_blk, B, v_blk)
    # LogSoftmax over dim=1 (batch axis): reduction fully inside the block,
    # so V-tiling needs no cross-tile combine.
    m = jnp.max(logits, axis=1, keepdims=True)
    z = logits - m
    lse = jnp.log(jnp.sum(jnp.exp(z), axis=1, keepdims=True))
    o_ref[...] = (z - lse).astype(o_ref.dtype)


def run_head(y, w_t_bf16, b, *, t_blk=None, v_blk=None):
    T, B, H = y.shape
    V = w_t_bf16.shape[-1]
    if t_blk is None:
        t_blk = _pick_head_t_blk(T, B)          # aim for >=256 MXU rows when T allows
    assert T % t_blk == 0
    if v_blk is None:
        v_blk = min(pl.cdiv(V, 128) * 128, 2048)
    assert v_blk % 128 == 0
    # Pad V up to a multiple of v_blk (log-softmax is over the batch axis, so
    # padded vocab columns never mix with real ones); slice them off at the end.
    V_pad = pl.cdiv(V, v_blk) * v_blk
    if V_pad != V:
        w_t_bf16 = jnp.pad(w_t_bf16, ((0, 0), (0, V_pad - V)))
        b = jnp.pad(b, ((0, 0), (0, V_pad - V)))
    # V-blocks on the OUTER (slow) axis -> the (H, v_blk) weight block index is
    # constant across the inner T loop, so W_lin is DMA'd from HBM exactly once.
    grid = (V_pad // v_blk, T // t_blk)
    est = 2 * (t_blk * B * H * 2 + H * v_blk * 2 + v_blk * 4 + t_blk * B * v_blk * 4)
    out = pl.pallas_call(
        head_kernel,
        out_shape=jax.ShapeDtypeStruct((T, B, V_pad), jnp.float32),
        grid_spec=pltpu.PrefetchScalarGridSpec(
            num_scalar_prefetch=0,
            grid=grid,
            in_specs=[
                pl.BlockSpec((t_blk, B, H), lambda vb, tb: (tb, 0, 0)),
                pl.BlockSpec((H, v_blk), lambda vb, tb: (0, vb)),
                pl.BlockSpec((1, v_blk), lambda vb, tb: (0, vb)),
            ],
            out_specs=pl.BlockSpec((t_blk, B, v_blk), lambda vb, tb: (tb, 0, vb)),
        ),
        compiler_params=_compiler_params(("parallel", "parallel"), est),
    )(y, w_t_bf16, b)
    return out[..., :V] if V_pad != V else out


# ------------------------------- Model ---------------------------------------
def lstm_lm_forward(tokens, hidden, params, *, head_mode="auto",
                    t_chunk=None, v_blk=None):
    """tokens: (T, B) int32; hidden: (h0, c0) each (1, B, H)."""
    h0, c0 = hidden
    T, B = tokens.shape
    V = params["w_lin_t"].shape[-1]
    # Embedding gather (glue in plain JAX).
    embedded = jnp.take(params["emb"], tokens, axis=0)               # (T, B, E)
    x_flat = embedded.reshape(T * B, -1).astype(jnp.bfloat16)        # MXU operand
    w_ih = params["w_ih_t"].astype(jnp.bfloat16)
    w_hh = params["w_hh_t"].astype(jnp.bfloat16)
    w_lin = params["w_lin_t"].astype(jnp.bfloat16)

    fuse = head_mode == "fused" or (head_mode == "auto" and V <= 1024)
    # Dropout -> identity (eval mode).
    if fuse:
        out, hN, cN = run_lstm_fused_head(x_flat, h0[0], c0[0], w_ih, w_hh,
                                          params["b_lstm"], w_lin, params["b_lin"],
                                          t_chunk=t_chunk)
    else:
        y, hN, cN = run_lstm(x_flat, h0[0], c0[0], w_ih, w_hh, params["b_lstm"],
                             t_chunk=t_chunk)
        out = run_head(y, w_lin, params["b_lin"], v_blk=v_blk)
    return out, (hN[None], cN[None])


# --------------------------- Pure-JAX reference ------------------------------
def reference_forward(tokens, hidden, params):
    """Mirrors the kernel's mixed precision (bf16 MXU operands, f32 accum/state)."""
    h0, c0 = hidden
    T, B = tokens.shape
    H = h0.shape[-1]
    emb = jnp.take(params["emb"], tokens, axis=0)
    x_bf = emb.astype(jnp.bfloat16)
    w_ih = params["w_ih_t"].astype(jnp.bfloat16)
    w_hh = params["w_hh_t"].astype(jnp.bfloat16)
    w_lin = params["w_lin_t"].astype(jnp.bfloat16)

    gx = (jnp.dot(x_bf.reshape(T * B, -1), w_ih,
                  preferred_element_type=jnp.float32)
          + params["b_lstm"]).reshape(T, B, 4 * H)

    def step(carry, g_t):
        h, c = carry
        gates = g_t + jnp.dot(h.astype(jnp.bfloat16), w_hh,
                              preferred_element_type=jnp.float32)
        i = jax.nn.sigmoid(gates[:, :H])
        f = jax.nn.sigmoid(gates[:, H:2 * H])
        g = jnp.tanh(gates[:, 2 * H:3 * H])
        o = jax.nn.sigmoid(gates[:, 3 * H:])
        c = f * c + i * g
        h = o * jnp.tanh(c)
        return (h, c), h

    (hN, cN), ys = lax.scan(step, (h0[0], c0[0]), gx)
    logits = (jnp.dot(ys.reshape(T * B, H).astype(jnp.bfloat16), w_lin,
                      preferred_element_type=jnp.float32).reshape(T, B, -1)
              + params["b_lin"])
    logp = jax.nn.log_softmax(logits, axis=1)                        # dim=1 == batch
    return logp, (hN[None], cN[None])


# -------------------------------- Main ---------------------------------------
if __name__ == "__main__":
    SEQ, BATCH = 8, 8
    EMB, HID, VOCAB = 128, 128, 256

    key = jax.random.PRNGKey(0)
    ks = jax.random.split(key, 10)
    stdv = 1.0 / math.sqrt(HID)

    params = {
        "emb": jax.random.normal(ks[0], (VOCAB, EMB), jnp.float32),
        # PyTorch stores W_ih (4H,E) / W_hh (4H,H); we pre-transpose for x @ W^T.
        "w_ih_t": jax.random.uniform(ks[1], (EMB, 4 * HID), jnp.float32, -stdv, stdv),
        "w_hh_t": jax.random.uniform(ks[2], (HID, 4 * HID), jnp.float32, -stdv, stdv),
        "b_lstm": (jax.random.uniform(ks[3], (1, 4 * HID), jnp.float32, -stdv, stdv)
                   + jax.random.uniform(ks[4], (1, 4 * HID), jnp.float32, -stdv, stdv)),
        "w_lin_t": jax.random.uniform(ks[5], (HID, VOCAB), jnp.float32, -stdv, stdv),
        "b_lin": jax.random.uniform(ks[6], (1, VOCAB), jnp.float32, -stdv, stdv),
    }

    tokens = jax.random.randint(ks[7], (SEQ, BATCH), 0, VOCAB, jnp.int32)
    h0 = jax.random.normal(ks[8], (1, BATCH, HID), jnp.float32)
    c0 = jax.random.normal(ks[9], (1, BATCH, HID), jnp.float32)

    ref_out, (ref_h, ref_c) = reference_forward(tokens, (h0, c0), params)

    # Fused head path (default for small vocabularies).
    fwd_fused = jax.jit(lambda t, h, p: lstm_lm_forward(t, h, p, head_mode="fused"))
    out, (hN, cN) = fwd_fused(tokens, (h0, c0), params)
    jax.block_until_ready((out, hN, cN))
    np.testing.assert_allclose(np.asarray(out), np.asarray(ref_out), atol=2e-4, rtol=2e-4)
    np.testing.assert_allclose(np.asarray(hN), np.asarray(ref_h), atol=2e-4, rtol=2e-4)
    np.testing.assert_allclose(np.asarray(cN), np.asarray(ref_c), atol=2e-4, rtol=2e-4)

    # Separate V-tiled head path (large-vocab configuration), forced here with
    # v_blk=128 so the T-chunked LSTM + bf16 y + tiled head are all exercised.
    fwd_split = jax.jit(lambda t, h, p: lstm_lm_forward(
        t, h, p, head_mode="separate", t_chunk=4, v_blk=128))
    out2, (hN2, cN2) = fwd_split(tokens, (h0, c0), params)
    jax.block_until_ready((out2, hN2, cN2))
    np.testing.assert_allclose(np.asarray(out2), np.asarray(ref_out), atol=2e-4, rtol=2e-4)
    np.testing.assert_allclose(np.asarray(hN2), np.asarray(ref_h), atol=2e-4, rtol=2e-4)
    np.testing.assert_allclose(np.asarray(cN2), np.asarray(ref_c), atol=2e-4, rtol=2e-4)

    print("KERNEL_OK")
</pallas_src>

<mosaic_0001>
module attributes {stable_mosaic.version = 11 : i64} {
  func.func @lstm_head_fused_kernel(%arg0: i32, %arg1: memref<64x128xbf16, #tpu.memory_space<vmem>>, %arg2: memref<8x128xf32, #tpu.memory_space<vmem>>, %arg3: memref<8x128xf32, #tpu.memory_space<vmem>>, %arg4: memref<128x512xbf16, #tpu.memory_space<vmem>>, %arg5: memref<128x512xbf16, #tpu.memory_space<vmem>>, %arg6: memref<1x512xf32, #tpu.memory_space<vmem>>, %arg7: memref<128x256xbf16, #tpu.memory_space<vmem>>, %arg8: memref<1x256xf32, #tpu.memory_space<vmem>>, %arg9: memref<8x8x256xf32, #tpu.memory_space<vmem>>, %arg10: memref<8x128xf32, #tpu.memory_space<vmem>>, %arg11: memref<8x128xf32, #tpu.memory_space<vmem>>, %arg12: memref<64x512xf32, #tpu.memory_space<vmem>>, %arg13: memref<8x8x128xf32, #tpu.memory_space<vmem>>, %arg14: memref<8x128xf32, #tpu.memory_space<vmem>>, %arg15: memref<8x128xf32, #tpu.memory_space<vmem>>) attributes {dimension_semantics = [#tpu.dimension_semantics<arbitrary>], iteration_bounds = array<i64: 1>, scalar_prefetch = 0 : i64, scratch_operands = 4 : i64, tpu.core_type = #tpu.core_type<tc>, window_params = [{transform_indices = @transform_0, window_bounds = array<i64: 64, 128>}, {pipeline_mode = #tpu.pipeline_mode<synchronous>, transform_indices = @transform_1, window_bounds = array<i64: 8, 128>}, {pipeline_mode = #tpu.pipeline_mode<synchronous>, transform_indices = @transform_2, window_bounds = array<i64: 8, 128>}, {pipeline_mode = #tpu.pipeline_mode<synchronous>, transform_indices = @transform_3, window_bounds = array<i64: 128, 512>}, {pipeline_mode = #tpu.pipeline_mode<synchronous>, transform_indices = @transform_4, window_bounds = array<i64: 128, 512>}, {pipeline_mode = #tpu.pipeline_mode<synchronous>, transform_indices = @transform_5, window_bounds = array<i64: 1, 512>}, {pipeline_mode = #tpu.pipeline_mode<synchronous>, transform_indices = @transform_6, window_bounds = array<i64: 128, 256>}, {pipeline_mode = #tpu.pipeline_mode<synchronous>, transform_indices = @transform_7, window_bounds = array<i64: 1, 256>}, {transform_indices = @transform_8, window_bounds = array<i64: 8, 8, 256>}, {pipeline_mode = #tpu.pipeline_mode<synchronous>, transform_indices = @transform_9, window_bounds = array<i64: 8, 128>}, {pipeline_mode = #tpu.pipeline_mode<synchronous>, transform_indices = @transform_10, window_bounds = array<i64: 8, 128>}]} {
    %c0_i32 = arith.constant 0 : i32
    %0 = arith.cmpi eq, %arg0, %c0_i32 : i32
    %1 = arith.extui %0 : i1 to i32
    %c0_i32_0 = arith.constant 0 : i32
    %2 = arith.cmpi ne, %1, %c0_i32_0 : i32
    scf.if %2 {
      %c0_174 = arith.constant 0 : index
      %c0_175 = arith.constant 0 : index
      %363 = vector.load %arg2[%c0_174, %c0_175] : memref<8x128xf32, #tpu.memory_space<vmem>>, vector<8x128xf32>
      %c0_176 = arith.constant 0 : index
      %c0_177 = arith.constant 0 : index
      %364 = vector.load %arg14[%c0_176, %c0_177] : memref<8x128xf32, #tpu.memory_space<vmem>>, vector<8x128xf32>
      tpu.vector_store %arg14[%c0_176, %c0_177], %363 {strides = array<i32>} : memref<8x128xf32, #tpu.memory_space<vmem>>, vector<8x128xf32>,
      %c0_178 = arith.constant 0 : index
      %c0_179 = arith.constant 0 : index
      %365 = vector.load %arg3[%c0_178, %c0_179] : memref<8x128xf32, #tpu.memory_space<vmem>>, vector<8x128xf32>
      %c0_180 = arith.constant 0 : index
      %c0_181 = arith.constant 0 : index
      %366 = vector.load %arg15[%c0_180, %c0_181] : memref<8x128xf32, #tpu.memory_space<vmem>>, vector<8x128xf32>
      tpu.vector_store %arg15[%c0_180, %c0_181], %365 {strides = array<i32>} : memref<8x128xf32, #tpu.memory_space<vmem>>, vector<8x128xf32>,
    } else {
    }
    %c0 = arith.constant 0 : index
    %c0_1 = arith.constant 0 : index
    %3 = vector.load %arg1[%c0, %c0_1] : memref<64x128xbf16, #tpu.memory_space<vmem>>, vector<64x128xbf16>
    %c0_2 = arith.constant 0 : index
    %c0_3 = arith.constant 0 : index
    %4 = vector.load %arg4[%c0_2, %c0_3] : memref<128x512xbf16, #tpu.memory_space<vmem>>, vector<128x512xbf16>
    %cst = arith.constant dense<0.000000e+00> : vector<64x512xf32>
    %5 = tpu.matmul %3, %4, %cst {dimension_numbers = #tpu.dot_dimension_numbers<[1], [0], [0], [1], [0, 0, 1, 1], [], []>} : vector<64x128xbf16>, vector<128x512xbf16>, vector<64x512xf32> -> vector<64x512xf32>
    %c0_4 = arith.constant 0 : index
    %c0_5 = arith.constant 0 : index
    %6 = vector.load %arg6[%c0_4, %c0_5] : memref<1x512xf32, #tpu.memory_space<vmem>>, vector<1x512xf32>
    %7 = vector.broadcast %6 : vector<1x512xf32> to vector<64x512xf32>
    %8 = arith.addf %5, %7 : vector<64x512xf32>
    %c0_6 = arith.constant 0 : index
    %c0_7 = arith.constant 0 : index
    %9 = vector.load %arg12[%c0_6, %c0_7] : memref<64x512xf32, #tpu.memory_space<vmem>>, vector<64x512xf32>
    tpu.vector_store %arg12[%c0_6, %c0_7], %8 {strides = array<i32>} : memref<64x512xf32, #tpu.memory_space<vmem>>, vector<64x512xf32>,
    %c0_i32_8 = arith.constant 0 : i32
    %c8_i32 = arith.constant 8 : i32
    %10 = arith.muli %c0_i32_8, %c8_i32 : i32
    %11 = tpu.assume_multiple %10, 8 : i32
    %12 = arith.index_cast %11 : i32 to index
    %c0_9 = arith.constant 0 : index
    %13 = vector.load %arg12[%12, %c0_9] : memref<64x512xf32, #tpu.memory_space<vmem>>, vector<8x512xf32>
    %c0_10 = arith.constant 0 : index
    %c0_11 = arith.constant 0 : index
    %14 = vector.load %arg14[%c0_10, %c0_11] : memref<8x128xf32, #tpu.memory_space<vmem>>, vector<8x128xf32>
    %15 = arith.truncf %14 : vector<8x128xf32> to vector<8x128xbf16>
    %c0_12 = arith.constant 0 : index
    %c0_13 = arith.constant 0 : index
    %16 = vector.load %arg5[%c0_12, %c0_13] : memref<128x512xbf16, #tpu.memory_space<vmem>>, vector<128x512xbf16>
    %cst_14 = arith.constant dense<0.000000e+00> : vector<8x512xf32>
    %17 = tpu.matmul %15, %16, %cst_14 {dimension_numbers = #tpu.dot_dimension_numbers<[1], [0], [0], [1], [0, 0, 1, 1], [], []>} : vector<8x128xbf16>, vector<128x512xbf16>, vector<8x512xf32> -> vector<8x512xf32>
    %18 = arith.addf %13, %17 : vector<8x512xf32>
    %19 = vector.extract_strided_slice %18 {offsets = [0, 0], sizes = [8, 128], strides = [1, 1]} : vector<8x512xf32> to vector<8x128xf32>
    %20 = arith.negf %19 : vector<8x128xf32>
    %21 = math.exp %20 : vector<8x128xf32>
    %cst_15 = arith.constant 1.000000e+00 : f32
    %22 = vector.broadcast %cst_15 : f32 to vector<8x128xf32>
    %23 = arith.addf %22, %21 : vector<8x128xf32>
    %24 = arith.divf %22, %23 : vector<8x128xf32>
    %25 = vector.extract_strided_slice %18 {offsets = [0, 128], sizes = [8, 128], strides = [1, 1]} : vector<8x512xf32> to vector<8x128xf32>
    %26 = arith.negf %25 : vector<8x128xf32>
    %27 = math.exp %26 : vector<8x128xf32>
    %cst_16 = arith.constant 1.000000e+00 : f32
    %28 = vector.broadcast %cst_16 : f32 to vector<8x128xf32>
    %29 = arith.addf %28, %27 : vector<8x128xf32>
    %30 = arith.divf %28, %29 : vector<8x128xf32>
    %31 = vector.extract_strided_slice %18 {offsets = [0, 256], sizes = [8, 128], strides = [1, 1]} : vector<8x512xf32> to vector<8x128xf32>
    %32 = math.tanh %31 : vector<8x128xf32>
    %33 = vector.extract_strided_slice %18 {offsets = [0, 384], sizes = [8, 128], strides = [1, 1]} : vector<8x512xf32> to vector<8x128xf32>
    %34 = arith.negf %33 : vector<8x128xf32>
    %35 = math.exp %34 : vector<8x128xf32>
    %cst_17 = arith.constant 1.000000e+00 : f32
    %36 = vector.broadcast %cst_17 : f32 to vector<8x128xf32>
    %37 = arith.addf %36, %35 : vector<8x128xf32>
    %38 = arith.divf %36, %37 : vector<8x128xf32>
    %c0_18 = arith.constant 0 : index
    %c0_19 = arith.constant 0 : index
    %39 = vector.load %arg15[%c0_18, %c0_19] : memref<8x128xf32, #tpu.memory_space<vmem>>, vector<8x128xf32>
    %40 = arith.mulf %30, %39 : vector<8x128xf32>
    %41 = arith.mulf %24, %32 : vector<8x128xf32>
    %42 = arith.addf %40, %41 : vector<8x128xf32>
    %43 = math.tanh %42 : vector<8x128xf32>
    %44 = arith.mulf %38, %43 : vector<8x128xf32>
    %c0_20 = arith.constant 0 : index
    %c0_21 = arith.constant 0 : index
    %45 = vector.load %arg14[%c0_20, %c0_21] : memref<8x128xf32, #tpu.memory_space<vmem>>, vector<8x128xf32>
    tpu.vector_store %arg14[%c0_20, %c0_21], %44 {strides = array<i32>} : memref<8x128xf32, #tpu.memory_space<vmem>>, vector<8x128xf32>,
    %c0_22 = arith.constant 0 : index
    %c0_23 = arith.constant 0 : index
    %46 = vector.load %arg15[%c0_22, %c0_23] : memref<8x128xf32, #tpu.memory_space<vmem>>, vector<8x128xf32>
    tpu.vector_store %arg15[%c0_22, %c0_23], %42 {strides = array<i32>} : memref<8x128xf32, #tpu.memory_space<vmem>>, vector<8x128xf32>,
    %47 = arith.index_cast %c0_i32_8 : i32 to index
    %c0_24 = arith.constant 0 : index
    %c0_25 = arith.constant 0 : index
    %48 = vector.load %arg13[%47, %c0_24, %c0_25] : memref<8x8x128xf32, #tpu.memory_space<vmem>>, vector<1x8x128xf32>
    %49 = vector.shape_cast %48 : vector<1x8x128xf32> to vector<8x128xf32>
    %50 = vector.shape_cast %44 : vector<8x128xf32> to vector<1x8x128xf32>
    tpu.vector_store %arg13[%47, %c0_24, %c0_25], %50 {strides = array<i32>} : memref<8x8x128xf32, #tpu.memory_space<vmem>>, vector<1x8x128xf32>,
    %c1_i32 = arith.constant 1 : i32
    %c8_i32_26 = arith.constant 8 : i32
    %51 = arith.muli %c1_i32, %c8_i32_26 : i32
    %52 = tpu.assume_multiple %51, 8 : i32
    %53 = arith.index_cast %52 : i32 to index
    %c0_27 = arith.constant 0 : index
    %54 = vector.load %arg12[%53, %c0_27] : memref<64x512xf32, #tpu.memory_space<vmem>>, vector<8x512xf32>
    %c0_28 = arith.constant 0 : index
    %c0_29 = arith.constant 0 : index
    %55 = vector.load %arg14[%c0_28, %c0_29] : memref<8x128xf32, #tpu.memory_space<vmem>>, vector<8x128xf32>
    %56 = arith.truncf %55 : vector<8x128xf32> to vector<8x128xbf16>
    %c0_30 = arith.constant 0 : index
    %c0_31 = arith.constant 0 : index
    %57 = vector.load %arg5[%c0_30, %c0_31] : memref<128x512xbf16, #tpu.memory_space<vmem>>, vector<128x512xbf16>
    %cst_32 = arith.constant dense<0.000000e+00> : vector<8x512xf32>
    %58 = tpu.matmul %56, %57, %cst_32 {dimension_numbers = #tpu.dot_dimension_numbers<[1], [0], [0], [1], [0, 0, 1, 1], [], []>} : vector<8x128xbf16>, vector<128x512xbf16>, vector<8x512xf32> -> vector<8x512xf32>
    %59 = arith.addf %54, %58 : vector<8x512xf32>
    %60 = vector.extract_strided_slice %59 {offsets = [0, 0], sizes = [8, 128], strides = [1, 1]} : vector<8x512xf32> to vector<8x128xf32>
    %61 = arith.negf %60 : vector<8x128xf32>
    %62 = math.exp %61 : vector<8x128xf32>
    %cst_33 = arith.constant 1.000000e+00 : f32
    %63 = vector.broadcast %cst_33 : f32 to vector<8x128xf32>
    %64 = arith.addf %63, %62 : vector<8x128xf32>
    %65 = arith.divf %63, %64 : vector<8x128xf32>
    %66 = vector.extract_strided_slice %59 {offsets = [0, 128], sizes = [8, 128], strides = [1, 1]} : vector<8x512xf32> to vector<8x128xf32>
    %67 = arith.negf %66 : vector<8x128xf32>
    %68 = math.exp %67 : vector<8x128xf32>
    %cst_34 = arith.constant 1.000000e+00 : f32
    %69 = vector.broadcast %cst_34 : f32 to vector<8x128xf32>
    %70 = arith.addf %69, %68 : vector<8x128xf32>
    %71 = arith.divf %69, %70 : vector<8x128xf32>
    %72 = vector.extract_strided_slice %59 {offsets = [0, 256], sizes = [8, 128], strides = [1, 1]} : vector<8x512xf32> to vector<8x128xf32>
    %73 = math.tanh %72 : vector<8x128xf32>
    %74 = vector.extract_strided_slice %59 {offsets = [0, 384], sizes = [8, 128], strides = [1, 1]} : vector<8x512xf32> to vector<8x128xf32>
    %75 = arith.negf %74 : vector<8x128xf32>
    %76 = math.exp %75 : vector<8x128xf32>
    %cst_35 = arith.constant 1.000000e+00 : f32
    %77 = vector.broadcast %cst_35 : f32 to vector<8x128xf32>
    %78 = arith.addf %77, %76 : vector<8x128xf32>
    %79 = arith.divf %77, %78 : vector<8x128xf32>
    %c0_36 = arith.constant 0 : index
    %c0_37 = arith.constant 0 : index
    %80 = vector.load %arg15[%c0_36, %c0_37] : memref<8x128xf32, #tpu.memory_space<vmem>>, vector<8x128xf32>
    %81 = arith.mulf %71, %80 : vector<8x128xf32>
    %82 = arith.mulf %65, %73 : vector<8x128xf32>
    %83 = arith.addf %81, %82 : vector<8x128xf32>
    %84 = math.tanh %83 : vector<8x128xf32>
    %85 = arith.mulf %79, %84 : vector<8x128xf32>
    %c0_38 = arith.constant 0 : index
    %c0_39 = arith.constant 0 : index
    %86 = vector.load %arg14[%c0_38, %c0_39] : memref<8x128xf32, #tpu.memory_space<vmem>>, vector<8x128xf32>
    tpu.vector_store %arg14[%c0_38, %c0_39], %85 {strides = array<i32>} : memref<8x128xf32, #tpu.memory_space<vmem>>, vector<8x128xf32>,
    %c0_40 = arith.constant 0 : index
    %c0_41 = arith.constant 0 : index
    %87 = vector.load %arg15[%c0_40, %c0_41] : memref<8x128xf32, #tpu.memory_space<vmem>>, vector<8x128xf32>
    tpu.vector_store %arg15[%c0_40, %c0_41], %83 {strides = array<i32>} : memref<8x128xf32, #tpu.memory_space<vmem>>, vector<8x128xf32>,
    %88 = arith.index_cast %c1_i32 : i32 to index
    %c0_42 = arith.constant 0 : index
    %c0_43 = arith.constant 0 : index
    %89 = vector.load %arg13[%88, %c0_42, %c0_43] : memref<8x8x128xf32, #tpu.memory_space<vmem>>, vector<1x8x128xf32>
    %90 = vector.shape_cast %89 : vector<1x8x128xf32> to vector<8x128xf32>
    %91 = vector.shape_cast %85 : vector<8x128xf32> to vector<1x8x128xf32>
    tpu.vector_store %arg13[%88, %c0_42, %c0_43], %91 {strides = array<i32>} : memref<8x8x128xf32, #tpu.memory_space<vmem>>, vector<1x8x128xf32>,
    %c2_i32 = arith.constant 2 : i32
    %c8_i32_44 = arith.constant 8 : i32
    %92 = arith.muli %c2_i32, %c8_i32_44 : i32
    %93 = tpu.assume_multiple %92, 8 : i32
    %94 = arith.index_cast %93 : i32 to index
    %c0_45 = arith.constant 0 : index
    %95 = vector.load %arg12[%94, %c0_45] : memref<64x512xf32, #tpu.memory_space<vmem>>, vector<8x512xf32>
    %c0_46 = arith.constant 0 : index
    %c0_47 = arith.constant 0 : index
    %96 = vector.load %arg14[%c0_46, %c0_47] : memref<8x128xf32, #tpu.memory_space<vmem>>, vector<8x128xf32>
    %97 = arith.truncf %96 : vector<8x128xf32> to vector<8x128xbf16>
    %c0_48 = arith.constant 0 : index
    %c0_49 = arith.constant 0 : index
    %98 = vector.load %arg5[%c0_48, %c0_49] : memref<128x512xbf16, #tpu.memory_space<vmem>>, vector<128x512xbf16>
    %cst_50 = arith.constant dense<0.000000e+00> : vector<8x512xf32>
    %99 = tpu.matmul %97, %98, %cst_50 {dimension_numbers = #tpu.dot_dimension_numbers<[1], [0], [0], [1], [0, 0, 1, 1], [], []>} : vector<8x128xbf16>, vector<128x512xbf16>, vector<8x512xf32> -> vector<8x512xf32>
    %100 = arith.addf %95, %99 : vector<8x512xf32>
    %101 = vector.extract_strided_slice %100 {offsets = [0, 0], sizes = [8, 128], strides = [1, 1]} : vector<8x512xf32> to vector<8x128xf32>
    %102 = arith.negf %101 : vector<8x128xf32>
    %103 = math.exp %102 : vector<8x128xf32>
    %cst_51 = arith.constant 1.000000e+00 : f32
    %104 = vector.broadcast %cst_51 : f32 to vector<8x128xf32>
    %105 = arith.addf %104, %103 : vector<8x128xf32>
    %106 = arith.divf %104, %105 : vector<8x128xf32>
    %107 = vector.extract_strided_slice %100 {offsets = [0, 128], sizes = [8, 128], strides = [1, 1]} : vector<8x512xf32> to vector<8x128xf32>
    %108 = arith.negf %107 : vector<8x128xf32>
    %109 = math.exp %108 : vector<8x128xf32>
    %cst_52 = arith.constant 1.000000e+00 : f32
    %110 = vector.broadcast %cst_52 : f32 to vector<8x128xf32>
    %111 = arith.addf %110, %109 : vector<8x128xf32>
    %112 = arith.divf %110, %111 : vector<8x128xf32>
    %113 = vector.extract_strided_slice %100 {offsets = [0, 256], sizes = [8, 128], strides = [1, 1]} : vector<8x512xf32> to vector<8x128xf32>
    %114 = math.tanh %113 : vector<8x128xf32>
    %115 = vector.extract_strided_slice %100 {offsets = [0, 384], sizes = [8, 128], strides = [1, 1]} : vector<8x512xf32> to vector<8x128xf32>
    %116 = arith.negf %115 : vector<8x128xf32>
    %117 = math.exp %116 : vector<8x128xf32>
    %cst_53 = arith.constant 1.000000e+00 : f32
    %118 = vector.broadcast %cst_53 : f32 to vector<8x128xf32>
    %119 = arith.addf %118, %117 : vector<8x128xf32>
    %120 = arith.divf %118, %119 : vector<8x128xf32>
    %c0_54 = arith.constant 0 : index
    %c0_55 = arith.constant 0 : index
    %121 = vector.load %arg15[%c0_54, %c0_55] : memref<8x128xf32, #tpu.memory_space<vmem>>, vector<8x128xf32>
    %122 = arith.mulf %112, %121 : vector<8x128xf32>
    %123 = arith.mulf %106, %114 : vector<8x128xf32>
    %124 = arith.addf %122, %123 : vector<8x128xf32>
    %125 = math.tanh %124 : vector<8x128xf32>
    %126 = arith.mulf %120, %125 : vector<8x128xf32>
    %c0_56 = arith.constant 0 : index
    %c0_57 = arith.constant 0 : index
    %127 = vector.load %arg14[%c0_56, %c0_57] : memref<8x128xf32, #tpu.memory_space<vmem>>, vector<8x128xf32>
    tpu.vector_store %arg14[%c0_56, %c0_57], %126 {strides = array<i32>} : memref<8x128xf32, #tpu.memory_space<vmem>>, vector<8x128xf32>,
    %c0_58 = arith.constant 0 : index
    %c0_59 = arith.constant 0 : index
    %128 = vector.load %arg15[%c0_58, %c0_59] : memref<8x128xf32, #tpu.memory_space<vmem>>, vector<8x128xf32>
    tpu.vector_store %arg15[%c0_58, %c0_59], %124 {strides = array<i32>} : memref<8x128xf32, #tpu.memory_space<vmem>>, vector<8x128xf32>,
    %129 = arith.index_cast %c2_i32 : i32 to index
    %c0_60 = arith.constant 0 : index
    %c0_61 = arith.constant 0 : index
    %130 = vector.load %arg13[%129, %c0_60, %c0_61] : memref<8x8x128xf32, #tpu.memory_space<vmem>>, vector<1x8x128xf32>
    %131 = vector.shape_cast %130 : vector<1x8x128xf32> to vector<8x128xf32>
    %132 = vector.shape_cast %126 : vector<8x128xf32> to vector<1x8x128xf32>
    tpu.vector_store %arg13[%129, %c0_60, %c0_61], %132 {strides = array<i32>} : memref<8x8x128xf32, #tpu.memory_space<vmem>>, vector<1x8x128xf32>,
    %c3_i32 = arith.constant 3 : i32
    %c8_i32_62 = arith.constant 8 : i32
    %133 = arith.muli %c3_i32, %c8_i32_62 : i32
    %134 = tpu.assume_multiple %133, 8 : i32
    %135 = arith.index_cast %134 : i32 to index
    %c0_63 = arith.constant 0 : index
    %136 = vector.load %arg12[%135, %c0_63] : memref<64x512xf32, #tpu.memory_space<vmem>>, vector<8x512xf32>
    %c0_64 = arith.constant 0 : index
    %c0_65 = arith.constant 0 : index
    %137 = vector.load %arg14[%c0_64, %c0_65] : memref<8x128xf32, #tpu.memory_space<vmem>>, vector<8x128xf32>
    %138 = arith.truncf %137 : vector<8x128xf32> to vector<8x128xbf16>
    %c0_66 = arith.constant 0 : index
    %c0_67 = arith.constant 0 : index
    %139 = vector.load %arg5[%c0_66, %c0_67] : memref<128x512xbf16, #tpu.memory_space<vmem>>, vector<128x512xbf16>
    %cst_68 = arith.constant dense<0.000000e+00> : vector<8x512xf32>
    %140 = tpu.matmul %138, %139, %cst_68 {dimension_numbers = #tpu.dot_dimension_numbers<[1], [0], [0], [1], [0, 0, 1, 1], [], []>} : vector<8x128xbf16>, vector<128x512xbf16>, vector<8x512xf32> -> vector<8x512xf32>
    %141 = arith.addf %136, %140 : vector<8x512xf32>
    %142 = vector.extract_strided_slice %141 {offsets = [0, 0], sizes = [8, 128], strides = [1, 1]} : vector<8x512xf32> to vector<8x128xf32>
    %143 = arith.negf %142 : vector<8x128xf32>
    %144 = math.exp %143 : vector<8x128xf32>
    %cst_69 = arith.constant 1.000000e+00 : f32
    %145 = vector.broadcast %cst_69 : f32 to vector<8x128xf32>
    %146 = arith.addf %145, %144 : vector<8x128xf32>
    %147 = arith.divf %145, %146 : vector<8x128xf32>
    %148 = vector.extract_strided_slice %141 {offsets = [0, 128], sizes = [8, 128], strides = [1, 1]} : vector<8x512xf32> to vector<8x128xf32>
    %149 = arith.negf %148 : vector<8x128xf32>
    %150 = math.exp %149 : vector<8x128xf32>
    %cst_70 = arith.constant 1.000000e+00 : f32
    %151 = vector.broadcast %cst_70 : f32 to vector<8x128xf32>
    %152 = arith.addf %151, %150 : vector<8x128xf32>
    %153 = arith.divf %151, %152 : vector<8x128xf32>
    %154 = vector.extract_strided_slice %141 {offsets = [0, 256], sizes = [8, 128], strides = [1, 1]} : vector<8x512xf32> to vector<8x128xf32>
    %155 = math.tanh %154 : vector<8x128xf32>
    %156 = vector.extract_strided_slice %141 {offsets = [0, 384], sizes = [8, 128], strides = [1, 1]} : vector<8x512xf32> to vector<8x128xf32>
    %157 = arith.negf %156 : vector<8x128xf32>
    %158 = math.exp %157 : vector<8x128xf32>
    %cst_71 = arith.constant 1.000000e+00 : f32
    %159 = vector.broadcast %cst_71 : f32 to vector<8x128xf32>
    %160 = arith.addf %159, %158 : vector<8x128xf32>
    %161 = arith.divf %159, %160 : vector<8x128xf32>
    %c0_72 = arith.constant 0 : index
    %c0_73 = arith.constant 0 : index
    %162 = vector.load %arg15[%c0_72, %c0_73] : memref<8x128xf32, #tpu.memory_space<vmem>>, vector<8x128xf32>
    %163 = arith.mulf %153, %162 : vector<8x128xf32>
    %164 = arith.mulf %147, %155 : vector<8x128xf32>
    %165 = arith.addf %163, %164 : vector<8x128xf32>
    %166 = math.tanh %165 : vector<8x128xf32>
    %167 = arith.mulf %161, %166 : vector<8x128xf32>
    %c0_74 = arith.constant 0 : index
    %c0_75 = arith.constant 0 : index
    %168 = vector.load %arg14[%c0_74, %c0_75] : memref<8x128xf32, #tpu.memory_space<vmem>>, vector<8x128xf32>
    tpu.vector_store %arg14[%c0_74, %c0_75], %167 {strides = array<i32>} : memref<8x128xf32, #tpu.memory_space<vmem>>, vector<8x128xf32>,
    %c0_76 = arith.constant 0 : index
    %c0_77 = arith.constant 0 : index
    %169 = vector.load %arg15[%c0_76, %c0_77] : memref<8x128xf32, #tpu.memory_space<vmem>>, vector<8x128xf32>
    tpu.vector_store %arg15[%c0_76, %c0_77], %165 {strides = array<i32>} : memref<8x128xf32, #tpu.memory_space<vmem>>, vector<8x128xf32>,
    %170 = arith.index_cast %c3_i32 : i32 to index
    %c0_78 = arith.constant 0 : index
    %c0_79 = arith.constant 0 : index
    %171 = vector.load %arg13[%170, %c0_78, %c0_79] : memref<8x8x128xf32, #tpu.memory_space<vmem>>, vector<1x8x128xf32>
    %172 = vector.shape_cast %171 : vector<1x8x128xf32> to vector<8x128xf32>
    %173 = vector.shape_cast %167 : vector<8x128xf32> to vector<1x8x128xf32>
    tpu.vector_store %arg13[%170, %c0_78, %c0_79], %173 {strides = array<i32>} : memref<8x8x128xf32, #tpu.memory_space<vmem>>, vector<1x8x128xf32>,
    %c4_i32 = arith.constant 4 : i32
    %c8_i32_80 = arith.constant 8 : i32
    %174 = arith.muli %c4_i32, %c8_i32_80 : i32
    %175 = tpu.assume_multiple %174, 8 : i32
    %176 = arith.index_cast %175 : i32 to index
    %c0_81 = arith.constant 0 : index
    %177 = vector.load %arg12[%176, %c0_81] : memref<64x512xf32, #tpu.memory_space<vmem>>, vector<8x512xf32>
    %c0_82 = arith.constant 0 : index
    %c0_83 = arith.constant 0 : index
    %178 = vector.load %arg14[%c0_82, %c0_83] : memref<8x128xf32, #tpu.memory_space<vmem>>, vector<8x128xf32>
    %179 = arith.truncf %178 : vector<8x128xf32> to vector<8x128xbf16>
    %c0_84 = arith.constant 0 : index
    %c0_85 = arith.constant 0 : index
    %180 = vector.load %arg5[%c0_84, %c0_85] : memref<128x512xbf16, #tpu.memory_space<vmem>>, vector<128x512xbf16>
    %cst_86 = arith.constant dense<0.000000e+00> : vector<8x512xf32>
    %181 = tpu.matmul %179, %180, %cst_86 {dimension_numbers = #tpu.dot_dimension_numbers<[1], [0], [0], [1], [0, 0, 1, 1], [], []>} : vector<8x128xbf16>, vector<128x512xbf16>, vector<8x512xf32> -> vector<8x512xf32>
    %182 = arith.addf %177, %181 : vector<8x512xf32>
    %183 = vector.extract_strided_slice %182 {offsets = [0, 0], sizes = [8, 128], strides = [1, 1]} : vector<8x512xf32> to vector<8x128xf32>
    %184 = arith.negf %183 : vector<8x128xf32>
    %185 = math.exp %184 : vector<8x128xf32>
    %cst_87 = arith.constant 1.000000e+00 : f32
    %186 = vector.broadcast %cst_87 : f32 to vector<8x128xf32>
    %187 = arith.addf %186, %185 : vector<8x128xf32>
    %188 = arith.divf %186, %187 : vector<8x128xf32>
    %189 = vector.extract_strided_slice %182 {offsets = [0, 128], sizes = [8, 128], strides = [1, 1]} : vector<8x512xf32> to vector<8x128xf32>
    %190 = arith.negf %189 : vector<8x128xf32>
    %191 = math.exp %190 : vector<8x128xf32>
    %cst_88 = arith.constant 1.000000e+00 : f32
    %192 = vector.broadcast %cst_88 : f32 to vector<8x128xf32>
    %193 = arith.addf %192, %191 : vector<8x128xf32>
    %194 = arith.divf %192, %193 : vector<8x128xf32>
    %195 = vector.extract_strided_slice %182 {offsets = [0, 256], sizes = [8, 128], strides = [1, 1]} : vector<8x512xf32> to vector<8x128xf32>
    %196 = math.tanh %195 : vector<8x128xf32>
    %197 = vector.extract_strided_slice %182 {offsets = [0, 384], sizes = [8, 128], strides = [1, 1]} : vector<8x512xf32> to vector<8x128xf32>
    %198 = arith.negf %197 : vector<8x128xf32>
    %199 = math.exp %198 : vector<8x128xf32>
    %cst_89 = arith.constant 1.000000e+00 : f32
    %200 = vector.broadcast %cst_89 : f32 to vector<8x128xf32>
    %201 = arith.addf %200, %199 : vector<8x128xf32>
    %202 = arith.divf %200, %201 : vector<8x128xf32>
    %c0_90 = arith.constant 0 : index
    %c0_91 = arith.constant 0 : index
    %203 = vector.load %arg15[%c0_90, %c0_91] : memref<8x128xf32, #tpu.memory_space<vmem>>, vector<8x128xf32>
    %204 = arith.mulf %194, %203 : vector<8x128xf32>
    %205 = arith.mulf %188, %196 : vector<8x128xf32>
    %206 = arith.addf %204, %205 : vector<8x128xf32>
    %207 = math.tanh %206 : vector<8x128xf32>
    %208 = arith.mulf %202, %207 : vector<8x128xf32>
    %c0_92 = arith.constant 0 : index
    %c0_93 = arith.constant 0 : index
    %209 = vector.load %arg14[%c0_92, %c0_93] : memref<8x128xf32, #tpu.memory_space<vmem>>, vector<8x128xf32>
    tpu.vector_store %arg14[%c0_92, %c0_93], %208 {strides = array<i32>} : memref<8x128xf32, #tpu.memory_space<vmem>>, vector<8x128xf32>,
    %c0_94 = arith.constant 0 : index
    %c0_95 = arith.constant 0 : index
    %210 = vector.load %arg15[%c0_94, %c0_95] : memref<8x128xf32, #tpu.memory_space<vmem>>, vector<8x128xf32>
    tpu.vector_store %arg15[%c0_94, %c0_95], %206 {strides = array<i32>} : memref<8x128xf32, #tpu.memory_space<vmem>>, vector<8x128xf32>,
    %211 = arith.index_cast %c4_i32 : i32 to index
    %c0_96 = arith.constant 0 : index
    %c0_97 = arith.constant 0 : index
    %212 = vector.load %arg13[%211, %c0_96, %c0_97] : memref<8x8x128xf32, #tpu.memory_space<vmem>>, vector<1x8x128xf32>
    %213 = vector.shape_cast %212 : vector<1x8x128xf32> to vector<8x128xf32>
    %214 = vector.shape_cast %208 : vector<8x128xf32> to vector<1x8x128xf32>
    tpu.vector_store %arg13[%211, %c0_96, %c0_97], %214 {strides = array<i32>} : memref<8x8x128xf32, #tpu.memory_space<vmem>>, vector<1x8x128xf32>,
    %c5_i32 = arith.constant 5 : i32
    %c8_i32_98 = arith.constant 8 : i32
    %215 = arith.muli %c5_i32, %c8_i32_98 : i32
    %216 = tpu.assume_multiple %215, 8 : i32
    %217 = arith.index_cast %216 : i32 to index
    %c0_99 = arith.constant 0 : index
    %218 = vector.load %arg12[%217, %c0_99] : memref<64x512xf32, #tpu.memory_space<vmem>>, vector<8x512xf32>
    %c0_100 = arith.constant 0 : index
    %c0_101 = arith.constant 0 : index
    %219 = vector.load %arg14[%c0_100, %c0_101] : memref<8x128xf32, #tpu.memory_space<vmem>>, vector<8x128xf32>
    %220 = arith.truncf %219 : vector<8x128xf32> to vector<8x128xbf16>
    %c0_102 = arith.constant 0 : index
    %c0_103 = arith.constant 0 : index
    %221 = vector.load %arg5[%c0_102, %c0_103] : memref<128x512xbf16, #tpu.memory_space<vmem>>, vector<128x512xbf16>
    %cst_104 = arith.constant dense<0.000000e+00> : vector<8x512xf32>
    %222 = tpu.matmul %220, %221, %cst_104 {dimension_numbers = #tpu.dot_dimension_numbers<[1], [0], [0], [1], [0, 0, 1, 1], [], []>} : vector<8x128xbf16>, vector<128x512xbf16>, vector<8x512xf32> -> vector<8x512xf32>
    %223 = arith.addf %218, %222 : vector<8x512xf32>
    %224 = vector.extract_strided_slice %223 {offsets = [0, 0], sizes = [8, 128], strides = [1, 1]} : vector<8x512xf32> to vector<8x128xf32>
    %225 = arith.negf %224 : vector<8x128xf32>
    %226 = math.exp %225 : vector<8x128xf32>
    %cst_105 = arith.constant 1.000000e+00 : f32
    %227 = vector.broadcast %cst_105 : f32 to vector<8x128xf32>
    %228 = arith.addf %227, %226 : vector<8x128xf32>
    %229 = arith.divf %227, %228 : vector<8x128xf32>
    %230 = vector.extract_strided_slice %223 {offsets = [0, 128], sizes = [8, 128], strides = [1, 1]} : vector<8x512xf32> to vector<8x128xf32>
    %231 = arith.negf %230 : vector<8x128xf32>
    %232 = math.exp %231 : vector<8x128xf32>
    %cst_106 = arith.constant 1.000000e+00 : f32
    %233 = vector.broadcast %cst_106 : f32 to vector<8x128xf32>
    %234 = arith.addf %233, %232 : vector<8x128xf32>
    %235 = arith.divf %233, %234 : vector<8x128xf32>
    %236 = vector.extract_strided_slice %223 {offsets = [0, 256], sizes = [8, 128], strides = [1, 1]} : vector<8x512xf32> to vector<8x128xf32>
    %237 = math.tanh %236 : vector<8x128xf32>
    %238 = vector.extract_strided_slice %223 {offsets = [0, 384], sizes = [8, 128], strides = [1, 1]} : vector<8x512xf32> to vector<8x128xf32>
    %239 = arith.negf %238 : vector<8x128xf32>
    %240 = math.exp %239 : vector<8x128xf32>
    %cst_107 = arith.constant 1.000000e+00 : f32
    %241 = vector.broadcast %cst_107 : f32 to vector<8x128xf32>
    %242 = arith.addf %241, %240 : vector<8x128xf32>
    %243 = arith.divf %241, %242 : vector<8x128xf32>
    %c0_108 = arith.constant 0 : index
    %c0_109 = arith.constant 0 : index
    %244 = vector.load %arg15[%c0_108, %c0_109] : memref<8x128xf32, #tpu.memory_space<vmem>>, vector<8x128xf32>
    %245 = arith.mulf %235, %244 : vector<8x128xf32>
    %246 = arith.mulf %229, %237 : vector<8x128xf32>
    %247 = arith.addf %245, %246 : vector<8x128xf32>
    %248 = math.tanh %247 : vector<8x128xf32>
    %249 = arith.mulf %243, %248 : vector<8x128xf32>
    %c0_110 = arith.constant 0 : index
    %c0_111 = arith.constant 0 : index
    %250 = vector.load %arg14[%c0_110, %c0_111] : memref<8x128xf32, #tpu.memory_space<vmem>>, vector<8x128xf32>
    tpu.vector_store %arg14[%c0_110, %c0_111], %249 {strides = array<i32>} : memref<8x128xf32, #tpu.memory_space<vmem>>, vector<8x128xf32>,
    %c0_112 = arith.constant 0 : index
    %c0_113 = arith.constant 0 : index
    %251 = vector.load %arg15[%c0_112, %c0_113] : memref<8x128xf32, #tpu.memory_space<vmem>>, vector<8x128xf32>
    tpu.vector_store %arg15[%c0_112, %c0_113], %247 {strides = array<i32>} : memref<8x128xf32, #tpu.memory_space<vmem>>, vector<8x128xf32>,
    %252 = arith.index_cast %c5_i32 : i32 to index
    %c0_114 = arith.constant 0 : index
    %c0_115 = arith.constant 0 : index
    %253 = vector.load %arg13[%252, %c0_114, %c0_115] : memref<8x8x128xf32, #tpu.memory_space<vmem>>, vector<1x8x128xf32>
    %254 = vector.shape_cast %253 : vector<1x8x128xf32> to vector<8x128xf32>
    %255 = vector.shape_cast %249 : vector<8x128xf32> to vector<1x8x128xf32>
    tpu.vector_store %arg13[%252, %c0_114, %c0_115], %255 {strides = array<i32>} : memref<8x8x128xf32, #tpu.memory_space<vmem>>, vector<1x8x128xf32>,
    %c6_i32 = arith.constant 6 : i32
    %c8_i32_116 = arith.constant 8 : i32
    %256 = arith.muli %c6_i32, %c8_i32_116 : i32
    %257 = tpu.assume_multiple %256, 8 : i32
    %258 = arith.index_cast %257 : i32 to index
    %c0_117 = arith.constant 0 : index
    %259 = vector.load %arg12[%258, %c0_117] : memref<64x512xf32, #tpu.memory_space<vmem>>, vector<8x512xf32>
    %c0_118 = arith.constant 0 : index
    %c0_119 = arith.constant 0 : index
    %260 = vector.load %arg14[%c0_118, %c0_119] : memref<8x128xf32, #tpu.memory_space<vmem>>, vector<8x128xf32>
    %261 = arith.truncf %260 : vector<8x128xf32> to vector<8x128xbf16>
    %c0_120 = arith.constant 0 : index
    %c0_121 = arith.constant 0 : index
    %262 = vector.load %arg5[%c0_120, %c0_121] : memref<128x512xbf16, #tpu.memory_space<vmem>>, vector<128x512xbf16>
    %cst_122 = arith.constant dense<0.000000e+00> : vector<8x512xf32>
    %263 = tpu.matmul %261, %262, %cst_122 {dimension_numbers = #tpu.dot_dimension_numbers<[1], [0], [0], [1], [0, 0, 1, 1], [], []>} : vector<8x128xbf16>, vector<128x512xbf16>, vector<8x512xf32> -> vector<8x512xf32>
    %264 = arith.addf %259, %263 : vector<8x512xf32>
    %265 = vector.extract_strided_slice %264 {offsets = [0, 0], sizes = [8, 128], strides = [1, 1]} : vector<8x512xf32> to vector<8x128xf32>
    %266 = arith.negf %265 : vector<8x128xf32>
    %267 = math.exp %266 : vector<8x128xf32>
    %cst_123 = arith.constant 1.000000e+00 : f32
    %268 = vector.broadcast %cst_123 : f32 to vector<8x128xf32>
    %269 = arith.addf %268, %267 : vector<8x128xf32>
    %270 = arith.divf %268, %269 : vector<8x128xf32>
    %271 = vector.extract_strided_slice %264 {offsets = [0, 128], sizes = [8, 128], strides = [1, 1]} : vector<8x512xf32> to vector<8x128xf32>
    %272 = arith.negf %271 : vector<8x128xf32>
    %273 = math.exp %272 : vector<8x128xf32>
    %cst_124 = arith.constant 1.000000e+00 : f32
    %274 = vector.broadcast %cst_124 : f32 to vector<8x128xf32>
    %275 = arith.addf %274, %273 : vector<8x128xf32>
    %276 = arith.divf %274, %275 : vector<8x128xf32>
    %277 = vector.extract_strided_slice %264 {offsets = [0, 256], sizes = [8, 128], strides = [1, 1]} : vector<8x512xf32> to vector<8x128xf32>
    %278 = math.tanh %277 : vector<8x128xf32>
    %279 = vector.extract_strided_slice %264 {offsets = [0, 384], sizes = [8, 128], strides = [1, 1]} : vector<8x512xf32> to vector<8x128xf32>
    %280 = arith.negf %279 : vector<8x128xf32>
    %281 = math.exp %280 : vector<8x128xf32>
    %cst_125 = arith.constant 1.000000e+00 : f32
    %282 = vector.broadcast %cst_125 : f32 to vector<8x128xf32>
    %283 = arith.addf %282, %281 : vector<8x128xf32>
    %284 = arith.divf %282, %283 : vector<8x128xf32>
    %c0_126 = arith.constant 0 : index
    %c0_127 = arith.constant 0 : index
    %285 = vector.load %arg15[%c0_126, %c0_127] : memref<8x128xf32, #tpu.memory_space<vmem>>, vector<8x128xf32>
    %286 = arith.mulf %276, %285 : vector<8x128xf32>
    %287 = arith.mulf %270, %278 : vector<8x128xf32>
    %288 = arith.addf %286, %287 : vector<8x128xf32>
    %289 = math.tanh %288 : vector<8x128xf32>
    %290 = arith.mulf %284, %289 : vector<8x128xf32>
    %c0_128 = arith.constant 0 : index
    %c0_129 = arith.constant 0 : index
    %291 = vector.load %arg14[%c0_128, %c0_129] : memref<8x128xf32, #tpu.memory_space<vmem>>, vector<8x128xf32>
    tpu.vector_store %arg14[%c0_128, %c0_129], %290 {strides = array<i32>} : memref<8x128xf32, #tpu.memory_space<vmem>>, vector<8x128xf32>,
    %c0_130 = arith.constant 0 : index
    %c0_131 = arith.constant 0 : index
    %292 = vector.load %arg15[%c0_130, %c0_131] : memref<8x128xf32, #tpu.memory_space<vmem>>, vector<8x128xf32>
    tpu.vector_store %arg15[%c0_130, %c0_131], %288 {strides = array<i32>} : memref<8x128xf32, #tpu.memory_space<vmem>>, vector<8x128xf32>,
    %293 = arith.index_cast %c6_i32 : i32 to index
    %c0_132 = arith.constant 0 : index
    %c0_133 = arith.constant 0 : index
    %294 = vector.load %arg13[%293, %c0_132, %c0_133] : memref<8x8x128xf32, #tpu.memory_space<vmem>>, vector<1x8x128xf32>
    %295 = vector.shape_cast %294 : vector<1x8x128xf32> to vector<8x128xf32>
    %296 = vector.shape_cast %290 : vector<8x128xf32> to vector<1x8x128xf32>
    tpu.vector_store %arg13[%293, %c0_132, %c0_133], %296 {strides = array<i32>} : memref<8x8x128xf32, #tpu.memory_space<vmem>>, vector<1x8x128xf32>,
    %c7_i32 = arith.constant 7 : i32
    %c8_i32_134 = arith.constant 8 : i32
    %297 = arith.muli %c7_i32, %c8_i32_134 : i32
    %298 = tpu.assume_multiple %297, 8 : i32
    %299 = arith.index_cast %298 : i32 to index
    %c0_135 = arith.constant 0 : index
    %300 = vector.load %arg12[%299, %c0_135] : memref<64x512xf32, #tpu.memory_space<vmem>>, vector<8x512xf32>
    %c0_136 = arith.constant 0 : index
    %c0_137 = arith.constant 0 : index
    %301 = vector.load %arg14[%c0_136, %c0_137] : memref<8x128xf32, #tpu.memory_space<vmem>>, vector<8x128xf32>
    %302 = arith.truncf %301 : vector<8x128xf32> to vector<8x128xbf16>
    %c0_138 = arith.constant 0 : index
    %c0_139 = arith.constant 0 : index
    %303 = vector.load %arg5[%c0_138, %c0_139] : memref<128x512xbf16, #tpu.memory_space<vmem>>, vector<128x512xbf16>
    %cst_140 = arith.constant dense<0.000000e+00> : vector<8x512xf32>
    %304 = tpu.matmul %302, %303, %cst_140 {dimension_numbers = #tpu.dot_dimension_numbers<[1], [0], [0], [1], [0, 0, 1, 1], [], []>} : vector<8x128xbf16>, vector<128x512xbf16>, vector<8x512xf32> -> vector<8x512xf32>
    %305 = arith.addf %300, %304 : vector<8x512xf32>
    %306 = vector.extract_strided_slice %305 {offsets = [0, 0], sizes = [8, 128], strides = [1, 1]} : vector<8x512xf32> to vector<8x128xf32>
    %307 = arith.negf %306 : vector<8x128xf32>
    %308 = math.exp %307 : vector<8x128xf32>
    %cst_141 = arith.constant 1.000000e+00 : f32
    %309 = vector.broadcast %cst_141 : f32 to vector<8x128xf32>
    %310 = arith.addf %309, %308 : vector<8x128xf32>
    %311 = arith.divf %309, %310 : vector<8x128xf32>
    %312 = vector.extract_strided_slice %305 {offsets = [0, 128], sizes = [8, 128], strides = [1, 1]} : vector<8x512xf32> to vector<8x128xf32>
    %313 = arith.negf %312 : vector<8x128xf32>
    %314 = math.exp %313 : vector<8x128xf32>
    %cst_142 = arith.constant 1.000000e+00 : f32
    %315 = vector.broadcast %cst_142 : f32 to vector<8x128xf32>
    %316 = arith.addf %315, %314 : vector<8x128xf32>
    %317 = arith.divf %315, %316 : vector<8x128xf32>
    %318 = vector.extract_strided_slice %305 {offsets = [0, 256], sizes = [8, 128], strides = [1, 1]} : vector<8x512xf32> to vector<8x128xf32>
    %319 = math.tanh %318 : vector<8x128xf32>
    %320 = vector.extract_strided_slice %305 {offsets = [0, 384], sizes = [8, 128], strides = [1, 1]} : vector<8x512xf32> to vector<8x128xf32>
    %321 = arith.negf %320 : vector<8x128xf32>
    %322 = math.exp %321 : vector<8x128xf32>
    %cst_143 = arith.constant 1.000000e+00 : f32
    %323 = vector.broadcast %cst_143 : f32 to vector<8x128xf32>
    %324 = arith.addf %323, %322 : vector<8x128xf32>
    %325 = arith.divf %323, %324 : vector<8x128xf32>
    %c0_144 = arith.constant 0 : index
    %c0_145 = arith.constant 0 : index
    %326 = vector.load %arg15[%c0_144, %c0_145] : memref<8x128xf32, #tpu.memory_space<vmem>>, vector<8x128xf32>
    %327 = arith.mulf %317, %326 : vector<8x128xf32>
    %328 = arith.mulf %311, %319 : vector<8x128xf32>
    %329 = arith.addf %327, %328 : vector<8x128xf32>
    %330 = math.tanh %329 : vector<8x128xf32>
    %331 = arith.mulf %325, %330 : vector<8x128xf32>
    %c0_146 = arith.constant 0 : index
    %c0_147 = arith.constant 0 : index
    %332 = vector.load %arg14[%c0_146, %c0_147] : memref<8x128xf32, #tpu.memory_space<vmem>>, vector<8x128xf32>
    tpu.vector_store %arg14[%c0_146, %c0_147], %331 {strides = array<i32>} : memref<8x128xf32, #tpu.memory_space<vmem>>, vector<8x128xf32>,
    %c0_148 = arith.constant 0 : index
    %c0_149 = arith.constant 0 : index
    %333 = vector.load %arg15[%c0_148, %c0_149] : memref<8x128xf32, #tpu.memory_space<vmem>>, vector<8x128xf32>
    tpu.vector_store %arg15[%c0_148, %c0_149], %329 {strides = array<i32>} : memref<8x128xf32, #tpu.memory_space<vmem>>, vector<8x128xf32>,
    %334 = arith.index_cast %c7_i32 : i32 to index
    %c0_150 = arith.constant 0 : index
    %c0_151 = arith.constant 0 : index
    %335 = vector.load %arg13[%334, %c0_150, %c0_151] : memref<8x8x128xf32, #tpu.memory_space<vmem>>, vector<1x8x128xf32>
    %336 = vector.shape_cast %335 : vector<1x8x128xf32> to vector<8x128xf32>
    %337 = vector.shape_cast %331 : vector<8x128xf32> to vector<1x8x128xf32>
    tpu.vector_store %arg13[%334, %c0_150, %c0_151], %337 {strides = array<i32>} : memref<8x8x128xf32, #tpu.memory_space<vmem>>, vector<1x8x128xf32>,
    %c8_i32_152 = arith.constant 8 : i32
    %c0_153 = arith.constant 0 : index
    %c0_154 = arith.constant 0 : index
    %338 = vector.load %arg14[%c0_153, %c0_154] : memref<8x128xf32, #tpu.memory_space<vmem>>, vector<8x128xf32>
    %c0_155 = arith.constant 0 : index
    %c0_156 = arith.constant 0 : index
    %339 = vector.load %arg10[%c0_155, %c0_156] : memref<8x128xf32, #tpu.memory_space<vmem>>, vector<8x128xf32>
    tpu.vector_store %arg10[%c0_155, %c0_156], %338 {strides = array<i32>} : memref<8x128xf32, #tpu.memory_space<vmem>>, vector<8x128xf32>,
    %c0_157 = arith.constant 0 : index
    %c0_158 = arith.constant 0 : index
    %340 = vector.load %arg15[%c0_157, %c0_158] : memref<8x128xf32, #tpu.memory_space<vmem>>, vector<8x128xf32>
    %c0_159 = arith.constant 0 : index
    %c0_160 = arith.constant 0 : index
    %341 = vector.load %arg11[%c0_159, %c0_160] : memref<8x128xf32, #tpu.memory_space<vmem>>, vector<8x128xf32>
    tpu.vector_store %arg11[%c0_159, %c0_160], %340 {strides = array<i32>} : memref<8x128xf32, #tpu.memory_space<vmem>>, vector<8x128xf32>,
    %c0_161 = arith.constant 0 : index
    %c0_162 = arith.constant 0 : index
    %c0_163 = arith.constant 0 : index
    %342 = vector.load %arg13[%c0_161, %c0_162, %c0_163] : memref<8x8x128xf32, #tpu.memory_space<vmem>>, vector<8x8x128xf32>
    %343 = vector.shape_cast %342 : vector<8x8x128xf32> to vector<64x128xf32>
    %344 = arith.truncf %343 : vector<64x128xf32> to vector<64x128xbf16>
    %c0_164 = arith.constant 0 : index
    %c0_165 = arith.constant 0 : index
    %345 = vector.load %arg7[%c0_164, %c0_165] : memref<128x256xbf16, #tpu.memory_space<vmem>>, vector<128x256xbf16>
    %cst_166 = arith.constant dense<0.000000e+00> : vector<64x256xf32>
    %346 = tpu.matmul %344, %345, %cst_166 {dimension_numbers = #tpu.dot_dimension_numbers<[1], [0], [0], [1], [0, 0, 1, 1], [], []>} : vector<64x128xbf16>, vector<128x256xbf16>, vector<64x256xf32> -> vector<64x256xf32>
    %347 = vector.shape_cast %346 : vector<64x256xf32> to vector<8x8x256xf32>
    %c0_167 = arith.constant 0 : index
    %c0_168 = arith.constant 0 : index
    %348 = vector.load %arg8[%c0_167, %c0_168] : memref<1x256xf32, #tpu.memory_space<vmem>>, vector<1x256xf32>
    %349 = vector.shape_cast %348 : vector<1x256xf32> to vector<1x1x256xf32>
    %350 = vector.broadcast %349 : vector<1x1x256xf32> to vector<8x8x256xf32>
    %351 = arith.addf %347, %350 : vector<8x8x256xf32>
    %cst_169 = arith.constant dense<0xFF800000> : vector<8x256xf32>
    %352 = vector.multi_reduction <maximumf>, %351, %cst_169 [1] : vector<8x8x256xf32> to vector<8x256xf32>
    %353 = vector.shape_cast %352 : vector<8x256xf32> to vector<8x1x256xf32>
    %354 = vector.broadcast %353 : vector<8x1x256xf32> to vector<8x8x256xf32>
    %355 = arith.subf %351, %354 : vector<8x8x256xf32>
    %356 = math.exp %355 : vector<8x8x256xf32>
    %cst_170 = arith.constant dense<0.000000e+00> : vector<8x256xf32>
    %357 = vector.multi_reduction <add>, %356, %cst_170 [1] : vector<8x8x256xf32> to vector<8x256xf32>
    %358 = vector.shape_cast %357 : vector<8x256xf32> to vector<8x1x256xf32>
    %359 = math.log %358 : vector<8x1x256xf32>
    %360 = vector.broadcast %359 : vector<8x1x256xf32> to vector<8x8x256xf32>
    %361 = arith.subf %355, %360 : vector<8x8x256xf32>
    %c0_171 = arith.constant 0 : index
    %c0_172 = arith.constant 0 : index
    %c0_173 = arith.constant 0 : index
    %362 = vector.load %arg9[%c0_171, %c0_172, %c0_173] : memref<8x8x256xf32, #tpu.memory_space<vmem>>, vector<8x8x256xf32>
    tpu.vector_store %arg9[%c0_171, %c0_172, %c0_173], %361 {strides = array<i32>} : memref<8x8x256xf32, #tpu.memory_space<vmem>>, vector<8x8x256xf32>,
    return
  }
  func.func @transform_0(%arg0: i32) -> (i32, i32) {
    %c0_i32 = arith.constant 0 : i32
    %c0_i32_0 = arith.constant 0 : i32
    return %arg0, %c0_i32 : i32, i32
  }
  func.func @transform_1(%arg0: i32) -> (i32, i32) {
    %c0_i32 = arith.constant 0 : i32
    %c0_i32_0 = arith.constant 0 : i32
    %c0_i32_1 = arith.constant 0 : i32
    return %c0_i32, %c0_i32_0 : i32, i32
  }
  func.func @transform_2(%arg0: i32) -> (i32, i32) {
    %c0_i32 = arith.constant 0 : i32
    %c0_i32_0 = arith.constant 0 : i32
    %c0_i32_1 = arith.constant 0 : i32
    return %c0_i32, %c0_i32_0 : i32, i32
  }
  func.func @transform_3(%arg0: i32) -> (i32, i32) {
    %c0_i32 = arith.constant 0 : i32
    %c0_i32_0 = arith.constant 0 : i32
    %c0_i32_1 = arith.constant 0 : i32
    return %c0_i32, %c0_i32_0 : i32, i32
  }
  func.func @transform_4(%arg0: i32) -> (i32, i32) {
    %c0_i32 = arith.constant 0 : i32
    %c0_i32_0 = arith.constant 0 : i32
    %c0_i32_1 = arith.constant 0 : i32
    return %c0_i32, %c0_i32_0 : i32, i32
  }
  func.func @transform_5(%arg0: i32) -> (i32, i32) {
    %c0_i32 = arith.constant 0 : i32
    %c0_i32_0 = arith.constant 0 : i32
    %c0_i32_1 = arith.constant 0 : i32
    return %c0_i32, %c0_i32_0 : i32, i32
  }
  func.func @transform_6(%arg0: i32) -> (i32, i32) {
    %c0_i32 = arith.constant 0 : i32
    %c0_i32_0 = arith.constant 0 : i32
    %c0_i32_1 = arith.constant 0 : i32
    return %c0_i32, %c0_i32_0 : i32, i32
  }
  func.func @transform_7(%arg0: i32) -> (i32, i32) {
    %c0_i32 = arith.constant 0 : i32
    %c0_i32_0 = arith.constant 0 : i32
    %c0_i32_1 = arith.constant 0 : i32
    return %c0_i32, %c0_i32_0 : i32, i32
  }
  func.func @transform_8(%arg0: i32) -> (i32, i32, i32) {
    %c0_i32 = arith.constant 0 : i32
    %c0_i32_0 = arith.constant 0 : i32
    %c0_i32_1 = arith.constant 0 : i32
    return %arg0, %c0_i32, %c0_i32_0 : i32, i32, i32
  }
  func.func @transform_9(%arg0: i32) -> (i32, i32) {
    %c0_i32 = arith.constant 0 : i32
    %c0_i32_0 = arith.constant 0 : i32
    %c0_i32_1 = arith.constant 0 : i32
    return %c0_i32, %c0_i32_0 : i32, i32
  }
  func.func @transform_10(%arg0: i32) -> (i32, i32) {
    %c0_i32 = arith.constant 0 : i32
    %c0_i32_0 = arith.constant 0 : i32
    %c0_i32_1 = arith.constant 0 : i32
    return %c0_i32, %c0_i32_0 : i32, i32
  }
}

</mosaic_0001>

<llo_original>
// kernel: _lambda_.1
$region0: #{_lambda_.1}
  #allocation0 [shape = 'u32[]', space=smem, size = 0x4, offset = 0x4, fixed_abs, tag = 'smem constant byte address 0x4 - core index']
  #allocation1 [shape = 'u32[72,128]{1,0:T(1,128)}', space=vmem, size = 0x9000, scoped, tag = 'internal scratch']
  #allocation2 [shape = 'f32[64,512]{1,0:T(8,128)}', space=vmem, size = 0x20000, scoped, tag = 'scratch operand']
  #allocation3 [shape = 'f32[8,8,128]{2,1,0:T(8,128)}', space=vmem, size = 0x8000, scoped, tag = 'scratch operand']
  #allocation4 [shape = 'f32[8,128]{1,0:T(8,128)}', space=vmem, size = 0x1000, scoped, tag = 'scratch operand']
  #allocation5 [shape = 'f32[8,128]{1,0:T(8,128)}', space=vmem, size = 0x1000, scoped, tag = 'scratch operand']
  %s0 = inlined_call_operand.vmem [shape: bf16[64,128], index: 0, kind: input, shape index: {}]
  %s1 = inlined_call_operand.vmem [shape: f32[8,128], index: 1, kind: input, shape index: {}]
  %s2 = inlined_call_operand.vmem [shape: f32[8,128], index: 2, kind: input, shape index: {}]
  %s3 = inlined_call_operand.vmem [shape: bf16[128,512], index: 3, kind: input, shape index: {}]
  %s4 = inlined_call_operand.vmem [shape: bf16[128,512], index: 4, kind: input, shape index: {}]
  %s5 = inlined_call_operand.vmem [shape: f32[1,512], index: 5, kind: input, shape index: {}]
  %s6 = inlined_call_operand.vmem [shape: bf16[128,256], index: 6, kind: input, shape index: {}]
  %s7 = inlined_call_operand.vmem [shape: f32[1,256], index: 7, kind: input, shape index: {}]
  %s8 = inlined_call_operand.hbm [shape: f32[8,8,256], index: 8, kind: output, shape index: {0}]
  %s9 = inlined_call_operand.hbm [shape: f32[8,128], index: 9, kind: output, shape index: {1}]
  %s10 = inlined_call_operand.hbm [shape: f32[8,128], index: 10, kind: output, shape index: {2}]
  %11 = xla_tuple %s8, %s9, %s10
  %s12 = sld [smem:[#allocation0]]
  $region62: #{_lambda_.1} parent=0
    _
  %s14 = ssub.s32 1, %s12
  %s15 = scalar_select 0, %s14, %s12
  $region1: #{_lambda_.1} parent=0
    #allocation6 [shape = 'u8[65536]{0}', space=vmem, size = 0x10000, scoped, tag = 'output window, operand 0, single buffered']
    #allocation7 [shape = 's32[1]{0}', space=sflag, size = 0x4, scoped, tag = 'scoped memory for _lambda_.1']
    #allocation8 [shape = 'u8[4096]{0}', space=vmem, size = 0x1000, scoped, tag = 'output window, operand 1, single buffered']
    #allocation9 [shape = 's32[1]{0}', space=sflag, size = 0x4, scoped, tag = 'scoped memory for _lambda_.1']
    #allocation10 [shape = 'u8[4096]{0}', space=vmem, size = 0x1000, scoped, tag = 'output window, operand 2, single buffered']
    %16 = vsyncpa [#allocation7], 0
    %17 = vsyncpa [#allocation9], 0
    // Predicated region
    $region2: #{_lambda_.1} parent=1 // pred_check
      _
    $region3: #{_lambda_.1} parent=1 // pred_check_branch
      %19 = sbr.rel (0) target = $region5
    $region4: #{_lambda_.1} parent=1 // pred_region
      _
    $region5: #{_lambda_.1} parent=1 // pred_fallthru
      _
    // Predicated region
    $region6: #{_lambda_.1} parent=1 // pred_check
      _
    $region7: #{_lambda_.1} parent=1 // pred_check_branch
      %21 = sbr.rel (0) target = $region9
    $region8: #{_lambda_.1} parent=1 // pred_region
      _
    $region9: #{_lambda_.1} parent=1 // pred_fallthru
      _
    // Predicated region
    $region10: #{_lambda_.1} parent=1 // pred_check
      _
    $region11: #{_lambda_.1} parent=1 // pred_check_branch
      %23 = sbr.rel (0) target = $region13
    $region12: #{_lambda_.1} parent=1 // pred_region
      _
    $region13: #{_lambda_.1} parent=1 // pred_fallthru
      _
    // Predicated region
    $region14: #{_lambda_.1} parent=1 // pred_check
      _
    $region15: #{_lambda_.1} parent=1 // pred_check_branch
      %25 = sbr.rel (0) target = $region17
    $region16: #{_lambda_.1} parent=1 // pred_region
      _
    $region17: #{_lambda_.1} parent=1 // pred_fallthru
      _
    // Predicated region
    $region18: #{_lambda_.1} parent=1 // pred_check
      _
    $region19: #{_lambda_.1} parent=1 // pred_check_branch
      %27 = sbr.rel (0) target = $region21
    $region20: #{_lambda_.1} parent=1 // pred_region
      _
    $region21: #{_lambda_.1} parent=1 // pred_fallthru
      _
    // Predicated region
    $region22: #{_lambda_.1} parent=1 // pred_check
      _
    $region23: #{_lambda_.1} parent=1 // pred_check_branch
      %29 = sbr.rel (0) target = $region25
    $region24: #{_lambda_.1} parent=1 // pred_region
      _
    $region25: #{_lambda_.1} parent=1 // pred_fallthru
      _
    // Predicated region
    $region26: #{_lambda_.1} parent=1 // pred_check
      _
    $region27: #{_lambda_.1} parent=1 // pred_check_branch
      %31 = sbr.rel (0) target = $region29
    $region28: #{_lambda_.1} parent=1 // pred_region
      _
    $region29: #{_lambda_.1} parent=1 // pred_fallthru
      _
    // Predicated region
    $region30: #{_lambda_.1} parent=1 // pred_check
      _
    $region31: #{_lambda_.1} parent=1 // pred_check_branch
      %33 = sbr.rel (0) target = $region33
    $region32: #{_lambda_.1} parent=1 // pred_region
      _
    $region33: #{_lambda_.1} parent=1 // pred_fallthru
      _
    %p34 = scmp.eq.s32.totalorder 0, 0
    // Predicated region
    $region34: #{_lambda_.1} parent=1 // pred_check
      %p35 = pneg %p34
    $region35: #{_lambda_.1} parent=1 // pred_check_branch
      %37 = sbr.rel (%p35) target = $region37
    $region36: #{_lambda_.1} parent=1 // pred_region
      %v38 = vld [vmem:[%s1] sm:$0xff]
      %39 = vst [vmem:[#allocation4] sm:$0xff] %v38
      %v40 = vld [vmem:[%s2] sm:$0xff]
      %41 = vst [vmem:[#allocation5] sm:$0xff] %v40
    $region37: #{_lambda_.1} parent=1 // pred_fallthru
      _
    %v42 = vld [vmem:[%s0] sm:$0xf]
    %v43 = vld [vmem:[%s0 + $0x4] sm:$0xf]
    %v44 = vld [vmem:[%s0 + $0x8] sm:$0xf]
    %v45 = vld [vmem:[%s0 + $0xc] sm:$0xf]
    %v46 = vld [vmem:[%s0 + $0x10] sm:$0xf]
    %v47 = vld [vmem:[%s0 + $0x14] sm:$0xf]
    %v48 = vld [vmem:[%s0 + $0x18] sm:$0xf]
    %v49 = vld [vmem:[%s0 + $0x1c] sm:$0xf]
    %v50 = vld [vmem:[%s3] sm:$0xff]
    %v51 = vld [vmem:[%s3 + $0x8] sm:$0xff]
    %v52 = vld [vmem:[%s3 + $0x10] sm:$0xff]
    %v53 = vld [vmem:[%s3 + $0x18] sm:$0xff]
    %v54 = vld [vmem:[%s3 + $0x20] sm:$0xff]
    %v55 = vld [vmem:[%s3 + $0x28] sm:$0xff]
    %v56 = vld [vmem:[%s3 + $0x30] sm:$0xff]
    %v57 = vld [vmem:[%s3 + $0x38] sm:$0xff]
    %v58 = vld [vmem:[%s3 + $0x40] sm:$0xff]
    %v59 = vld [vmem:[%s3 + $0x48] sm:$0xff]
    %v60 = vld [vmem:[%s3 + $0x50] sm:$0xff]
    %v61 = vld [vmem:[%s3 + $0x58] sm:$0xff]
    %v62 = vld [vmem:[%s3 + $0x60] sm:$0xff]
    %v63 = vld [vmem:[%s3 + $0x68] sm:$0xff]
    %v64 = vld [vmem:[%s3 + $0x70] sm:$0xff]
    %v65 = vld [vmem:[%s3 + $0x78] sm:$0xff]
    %v66 = vld [vmem:[%s3 + $0x80] sm:$0xff]
    %v67 = vld [vmem:[%s3 + $0x88] sm:$0xff]
    %v68 = vld [vmem:[%s3 + $0x90] sm:$0xff]
    %v69 = vld [vmem:[%s3 + $0x98] sm:$0xff]
    %v70 = vld [vmem:[%s3 + $0xa0] sm:$0xff]
    %v71 = vld [vmem:[%s3 + $0xa8] sm:$0xff]
    %v72 = vld [vmem:[%s3 + $0xb0] sm:$0xff]
    %v73 = vld [vmem:[%s3 + $0xb8] sm:$0xff]
    %v74 = vld [vmem:[%s3 + $0xc0] sm:$0xff]
    %v75 = vld [vmem:[%s3 + $0xc8] sm:$0xff]
    %v76 = vld [vmem:[%s3 + $0xd0] sm:$0xff]
    %v77 = vld [vmem:[%s3 + $0xd8] sm:$0xff]
    %v78 = vld [vmem:[%s3 + $0xe0] sm:$0xff]
    %v79 = vld [vmem:[%s3 + $0xe8] sm:$0xff]
    %v80 = vld [vmem:[%s3 + $0xf0] sm:$0xff]
    %v81 = vld [vmem:[%s3 + $0xf8] sm:$0xff]
    %v82 = vld [vmem:[%s5] sm:$0xf]
    %v84 = vperm.slane %v82, 0
    %v85 = vperm.slane %v82, 1
    %v86 = vperm.slane %v82, 2
    %v87 = vperm.slane %v82, 3
    %v100 = vunpack.c.l.b16 %v42
    %v101 = vunpack.c.l.b16 %v43
    %v102 = vunpack.c.l.b16 %v44
    %v103 = vunpack.c.l.b16 %v45
    %v104 = vunpack.c.l.b16 %v46
    %v105 = vunpack.c.l.b16 %v47
    %v106 = vunpack.c.l.b16 %v48
    %v107 = vunpack.c.l.b16 %v49
    %v108 = vpack.c.b16 %v101, %v100
    %v109 = vpack.c.b16 %v103, %v102
    %v110 = vpack.c.b16 %v105, %v104
    %v111 = vpack.c.b16 %v107, %v106
    %v148 = vunpack.c.l.b16 %v50
    %v149 = vunpack.c.h.b16 %v50
    %v150 = vunpack.c.l.b16 %v51
    %v151 = vunpack.c.h.b16 %v51
    %v152 = vunpack.c.l.b16 %v52
    %v153 = vunpack.c.h.b16 %v52
    %v154 = vunpack.c.l.b16 %v53
    %v155 = vunpack.c.h.b16 %v53
    %v156 = vunpack.c.l.b16 %v54
    %v157 = vunpack.c.h.b16 %v54
    %v158 = vunpack.c.l.b16 %v55
    %v159 = vunpack.c.h.b16 %v55
    %v160 = vunpack.c.l.b16 %v56
    %v161 = vunpack.c.h.b16 %v56
    %v162 = vunpack.c.l.b16 %v57
    %v163 = vunpack.c.h.b16 %v57
    %v164 = vunpack.c.l.b16 %v58
    %v165 = vunpack.c.h.b16 %v58
    %v166 = vunpack.c.l.b16 %v59
    %v167 = vunpack.c.h.b16 %v59
    %v168 = vunpack.c.l.b16 %v60
    %v169 = vunpack.c.h.b16 %v60
    %v170 = vunpack.c.l.b16 %v61
    %v171 = vunpack.c.h.b16 %v61
    %v172 = vunpack.c.l.b16 %v62
    %v173 = vunpack.c.h.b16 %v62
    %v174 = vunpack.c.l.b16 %v63
    %v175 = vunpack.c.h.b16 %v63
    %v176 = vunpack.c.l.b16 %v64
    %v177 = vunpack.c.h.b16 %v64
    %v178 = vunpack.c.l.b16 %v65
    %v179 = vunpack.c.h.b16 %v65
    %v180 = vunpack.c.l.b16 %v66
    %v181 = vunpack.c.h.b16 %v66
    %v182 = vunpack.c.l.b16 %v67
    %v183 = vunpack.c.h.b16 %v67
    %v184 = vunpack.c.l.b16 %v68
    %v185 = vunpack.c.h.b16 %v68
    %v186 = vunpack.c.l.b16 %v69
    %v187 = vunpack.c.h.b16 %v69
    %v188 = vunpack.c.l.b16 %v70
    %v189 = vunpack.c.h.b16 %v70
    %v190 = vunpack.c.l.b16 %v71
    %v191 = vunpack.c.h.b16 %v71
    %v192 = vunpack.c.l.b16 %v72
    %v193 = vunpack.c.h.b16 %v72
    %v194 = vunpack.c.l.b16 %v73
    %v195 = vunpack.c.h.b16 %v73
    %v196 = vunpack.c.l.b16 %v74
    %v197 = vunpack.c.h.b16 %v74
    %v198 = vunpack.c.l.b16 %v75
    %v199 = vunpack.c.h.b16 %v75
    %v200 = vunpack.c.l.b16 %v76
    %v201 = vunpack.c.h.b16 %v76
    %v202 = vunpack.c.l.b16 %v77
    %v203 = vunpack.c.h.b16 %v77
    %v204 = vunpack.c.l.b16 %v78
    %v205 = vunpack.c.h.b16 %v78
    %v206 = vunpack.c.l.b16 %v79
    %v207 = vunpack.c.h.b16 %v79
    %v208 = vunpack.c.l.b16 %v80
    %v209 = vunpack.c.h.b16 %v80
    %v210 = vunpack.c.l.b16 %v81
    %v211 = vunpack.c.h.b16 %v81
    %v212 = vpack.c.b16 %v152, %v148
    %v213 = vpack.c.b16 %v153, %v149
    %v214 = vpack.c.b16 %v154, %v150
    %v215 = vpack.c.b16 %v155, %v151
    %v216 = vpack.c.b16 %v160, %v156
    %v217 = vpack.c.b16 %v161, %v157
    %v218 = vpack.c.b16 %v162, %v158
    %v219 = vpack.c.b16 %v163, %v159
    %v220 = vpack.c.b16 %v168, %v164
    %v221 = vpack.c.b16 %v169, %v165
    %v222 = vpack.c.b16 %v170, %v166
    %v223 = vpack.c.b16 %v171, %v167
    %v224 = vpack.c.b16 %v176, %v172
    %v225 = vpack.c.b16 %v177, %v173
    %v226 = vpack.c.b16 %v178, %v174
    %v227 = vpack.c.b16 %v179, %v175
    %v228 = vpack.c.b16 %v184, %v180
    %v229 = vpack.c.b16 %v185, %v181
    %v230 = vpack.c.b16 %v186, %v182
    %v231 = vpack.c.b16 %v187, %v183
    %v232 = vpack.c.b16 %v192, %v188
    %v233 = vpack.c.b16 %v193, %v189
    %v234 = vpack.c.b16 %v194, %v190
    %v235 = vpack.c.b16 %v195, %v191
    %v236 = vpack.c.b16 %v200, %v196
    %v237 = vpack.c.b16 %v201, %v197
    %v238 = vpack.c.b16 %v202, %v198
    %v239 = vpack.c.b16 %v203, %v199
    %v240 = vpack.c.b16 %v208, %v204
    %v241 = vpack.c.b16 %v209, %v205
    %v242 = vpack.c.b16 %v210, %v206
    %v243 = vpack.c.b16 %v211, %v207
    %276 = vmatpush.bf16.msra.mxu0 %v240
    %277 = vmatpush.bf16.msra.mxu0 %v236
    %278 = vmatpush.bf16.msra.mxu0 %v232
    %279 = vmatpush.bf16.msra.mxu0 %v228
    %280 = vmatpush.bf16.msra.mxu0 %v224
    %281 = vmatpush.bf16.msra.mxu0 %v220
    %282 = vmatpush.bf16.msra.mxu0 %v216
    %283 = vmatpush.bf16.msra.mxu0 %v212
    %284 = vmatmul.bf16.gmra.mxu0 %v108
    %v285 = vpop.f32.mrf.mxu0
    %v286 = vadd.f32 %v84, %v285
    %v287 = vpop.f32.mrf.mxu0
    %v288 = vadd.f32 %v84, %v287
    %289 = vmatmul.bf16.gmra.mxu0 %v109
    %v290 = vpop.f32.mrf.mxu0
    %v291 = vadd.f32 %v84, %v290
    %v292 = vpop.f32.mrf.mxu0
    %v293 = vadd.f32 %v84, %v292
    %294 = vmatmul.bf16.gmra.mxu0 %v110
    %v295 = vpop.f32.mrf.mxu0
    %v296 = vadd.f32 %v84, %v295
    %v297 = vpop.f32.mrf.mxu0
    %v298 = vadd.f32 %v84, %v297
    %299 = vmatmul.bf16.gmra.mxu0 %v111
    %v300 = vpop.f32.mrf.mxu0
    %v301 = vadd.f32 %v84, %v300
    %v302 = vpop.f32.mrf.mxu0
    %v303 = vadd.f32 %v84, %v302
    %304 = vdwg.mxu0
    %305 = vmatpush.bf16.msra.mxu0 %v241
    %306 = vmatpush.bf16.msra.mxu0 %v237
    %307 = vmatpush.bf16.msra.mxu0 %v233
    %308 = vmatpush.bf16.msra.mxu0 %v229
    %309 = vmatpush.bf16.msra.mxu0 %v225
    %310 = vmatpush.bf16.msra.mxu0 %v221
    %311 = vmatpush.bf16.msra.mxu0 %v217
    %312 = vmatpush.bf16.msra.mxu0 %v213
    %313 = vmatmul.bf16.gmra.mxu0 %v108
    %v314 = vpop.f32.mrf.mxu0
    %v315 = vadd.f32 %v85, %v314
    %v316 = vpop.f32.mrf.mxu0
    %v317 = vadd.f32 %v85, %v316
    %318 = vmatmul.bf16.gmra.mxu0 %v109
    %v319 = vpop.f32.mrf.mxu0
    %v320 = vadd.f32 %v85, %v319
    %v321 = vpop.f32.mrf.mxu0
    %v322 = vadd.f32 %v85, %v321
    %323 = vmatmul.bf16.gmra.mxu0 %v110
    %v324 = vpop.f32.mrf.mxu0
    %v325 = vadd.f32 %v85, %v324
    %v326 = vpop.f32.mrf.mxu0
    %v327 = vadd.f32 %v85, %v326
    %328 = vmatmul.bf16.gmra.mxu0 %v111
    %v329 = vpop.f32.mrf.mxu0
    %v330 = vadd.f32 %v85, %v329
    %v331 = vpop.f32.mrf.mxu0
    %v332 = vadd.f32 %v85, %v331
    %333 = vdwg.mxu0
    %334 = vmatpush.bf16.msra.mxu0 %v242
    %335 = vmatpush.bf16.msra.mxu0 %v238
    %336 = vmatpush.bf16.msra.mxu0 %v234
    %337 = vmatpush.bf16.msra.mxu0 %v230
    %338 = vmatpush.bf16.msra.mxu0 %v226
    %339 = vmatpush.bf16.msra.mxu0 %v222
    %340 = vmatpush.bf16.msra.mxu0 %v218
    %341 = vmatpush.bf16.msra.mxu0 %v214
    %342 = vmatmul.bf16.gmra.mxu0 %v108
    %v343 = vpop.f32.mrf.mxu0
    %v344 = vadd.f32 %v86, %v343
    %v345 = vpop.f32.mrf.mxu0
    %v346 = vadd.f32 %v86, %v345
    %347 = vmatmul.bf16.gmra.mxu0 %v109
    %v348 = vpop.f32.mrf.mxu0
    %v349 = vadd.f32 %v86, %v348
    %v350 = vpop.f32.mrf.mxu0
    %v351 = vadd.f32 %v86, %v350
    %352 = vmatmul.bf16.gmra.mxu0 %v110
    %v353 = vpop.f32.mrf.mxu0
    %v354 = vadd.f32 %v86, %v353
    %v355 = vpop.f32.mrf.mxu0
    %v356 = vadd.f32 %v86, %v355
    %357 = vmatmul.bf16.gmra.mxu0 %v111
    %v358 = vpop.f32.mrf.mxu0
    %v359 = vadd.f32 %v86, %v358
    %v360 = vpop.f32.mrf.mxu0
    %v361 = vadd.f32 %v86, %v360
    %362 = vdwg.mxu0
    %363 = vmatpush.bf16.msra.mxu0 %v243
    %364 = vmatpush.bf16.msra.mxu0 %v239
    %365 = vmatpush.bf16.msra.mxu0 %v235
    %366 = vmatpush.bf16.msra.mxu0 %v231
    %367 = vmatpush.bf16.msra.mxu0 %v227
    %368 = vmatpush.bf16.msra.mxu0 %v223
    %369 = vmatpush.bf16.msra.mxu0 %v219
    %370 = vmatpush.bf16.msra.mxu0 %v215
    %371 = vmatmul.bf16.gmra.mxu0 %v108
    %v372 = vpop.f32.mrf.mxu0
    %v373 = vadd.f32 %v87, %v372
    %v374 = vpop.f32.mrf.mxu0
    %v375 = vadd.f32 %v87, %v374
    %376 = vmatmul.bf16.gmra.mxu0 %v109
    %v377 = vpop.f32.mrf.mxu0
    %v378 = vadd.f32 %v87, %v377
    %v379 = vpop.f32.mrf.mxu0
    %v380 = vadd.f32 %v87, %v379
    %381 = vmatmul.bf16.gmra.mxu0 %v110
    %v382 = vpop.f32.mrf.mxu0
    %v383 = vadd.f32 %v87, %v382
    %v384 = vpop.f32.mrf.mxu0
    %v385 = vadd.f32 %v87, %v384
    %386 = vmatmul.bf16.gmra.mxu0 %v111
    %v387 = vpop.f32.mrf.mxu0
    %v388 = vadd.f32 %v87, %v387
    %v389 = vpop.f32.mrf.mxu0
    %v390 = vadd.f32 %v87, %v389
    %391 = vdwg.mxu0
    %392 = vst [vmem:[#allocation2] sm:$0xff] %v286
    %393 = vst [vmem:[#allocation2 + $0x8] sm:$0xff] %v315
    %394 = vst [vmem:[#allocation2 + $0x10] sm:$0xff] %v344
    %395 = vst [vmem:[#allocation2 + $0x18] sm:$0xff] %v373
    %396 = vst [vmem:[#allocation2 + $0x20] sm:$0xff] %v288
    %397 = vst [vmem:[#allocation2 + $0x28] sm:$0xff] %v317
    %398 = vst [vmem:[#allocation2 + $0x30] sm:$0xff] %v346
    %399 = vst [vmem:[#allocation2 + $0x38] sm:$0xff] %v375
    %400 = vst [vmem:[#allocation2 + $0x40] sm:$0xff] %v291
    %401 = vst [vmem:[#allocation2 + $0x48] sm:$0xff] %v320
    %402 = vst [vmem:[#allocation2 + $0x50] sm:$0xff] %v349
    %403 = vst [vmem:[#allocation2 + $0x58] sm:$0xff] %v378
    %404 = vst [vmem:[#allocation2 + $0x60] sm:$0xff] %v293
    %405 = vst [vmem:[#allocation2 + $0x68] sm:$0xff] %v322
    %406 = vst [vmem:[#allocation2 + $0x70] sm:$0xff] %v351
    %407 = vst [vmem:[#allocation2 + $0x78] sm:$0xff] %v380
    %408 = vst [vmem:[#allocation2 + $0x80] sm:$0xff] %v296
    %409 = vst [vmem:[#allocation2 + $0x88] sm:$0xff] %v325
    %410 = vst [vmem:[#allocation2 + $0x90] sm:$0xff] %v354
    %411 = vst [vmem:[#allocation2 + $0x98] sm:$0xff] %v383
    %412 = vst [vmem:[#allocation2 + $0xa0] sm:$0xff] %v298
    %413 = vst [vmem:[#allocation2 + $0xa8] sm:$0xff] %v327
    %414 = vst [vmem:[#allocation2 + $0xb0] sm:$0xff] %v356
    %415 = vst [vmem:[#allocation2 + $0xb8] sm:$0xff] %v385
    %416 = vst [vmem:[#allocation2 + $0xc0] sm:$0xff] %v301
    %417 = vst [vmem:[#allocation2 + $0xc8] sm:$0xff] %v330
    %418 = vst [vmem:[#allocation2 + $0xd0] sm:$0xff] %v359
    %419 = vst [vmem:[#allocation2 + $0xd8] sm:$0xff] %v388
    %420 = vst [vmem:[#allocation2 + $0xe0] sm:$0xff] %v303
    %421 = vst [vmem:[#allocation2 + $0xe8] sm:$0xff] %v332
    %422 = vst [vmem:[#allocation2 + $0xf0] sm:$0xff] %v361
    %423 = vst [vmem:[#allocation2 + $0xf8] sm:$0xff] %v390
    %s424 = smul.u32 0, 4
    %s425 = smul.addr %s424, 8
    %s426 = scalar_lea.vmem [#allocation2], %s425
    %v427 = vld [vmem:[%s426] sm:$0xff]
    %v428 = vld [vmem:[%s426 + $0x8] sm:$0xff]
    %v429 = vld [vmem:[%s426 + $0x10] sm:$0xff]
    %v430 = vld [vmem:[%s426 + $0x18] sm:$0xff]
    %v431 = vld [vmem:[#allocation4] sm:$0xff]
    %v432 = vpack.c.bf16 %v431, %v431
    %v433 = vld [vmem:[%s4] sm:$0xff]
    %v434 = vld [vmem:[%s4 + $0x8] sm:$0xff]
    %v435 = vld [vmem:[%s4 + $0x10] sm:$0xff]
    %v436 = vld [vmem:[%s4 + $0x18] sm:$0xff]
    %v437 = vld [vmem:[%s4 + $0x20] sm:$0xff]
    %v438 = vld [vmem:[%s4 + $0x28] sm:$0xff]
    %v439 = vld [vmem:[%s4 + $0x30] sm:$0xff]
    %v440 = vld [vmem:[%s4 + $0x38] sm:$0xff]
    %v441 = vld [vmem:[%s4 + $0x40] sm:$0xff]
    %v442 = vld [vmem:[%s4 + $0x48] sm:$0xff]
    %v443 = vld [vmem:[%s4 + $0x50] sm:$0xff]
    %v444 = vld [vmem:[%s4 + $0x58] sm:$0xff]
    %v445 = vld [vmem:[%s4 + $0x60] sm:$0xff]
    %v446 = vld [vmem:[%s4 + $0x68] sm:$0xff]
    %v447 = vld [vmem:[%s4 + $0x70] sm:$0xff]
    %v448 = vld [vmem:[%s4 + $0x78] sm:$0xff]
    %v449 = vld [vmem:[%s4 + $0x80] sm:$0xff]
    %v450 = vld [vmem:[%s4 + $0x88] sm:$0xff]
    %v451 = vld [vmem:[%s4 + $0x90] sm:$0xff]
    %v452 = vld [vmem:[%s4 + $0x98] sm:$0xff]
    %v453 = vld [vmem:[%s4 + $0xa0] sm:$0xff]
    %v454 = vld [vmem:[%s4 + $0xa8] sm:$0xff]
    %v455 = vld [vmem:[%s4 + $0xb0] sm:$0xff]
    %v456 = vld [vmem:[%s4 + $0xb8] sm:$0xff]
    %v457 = vld [vmem:[%s4 + $0xc0] sm:$0xff]
    %v458 = vld [vmem:[%s4 + $0xc8] sm:$0xff]
    %v459 = vld [vmem:[%s4 + $0xd0] sm:$0xff]
    %v460 = vld [vmem:[%s4 + $0xd8] sm:$0xff]
    %v461 = vld [vmem:[%s4 + $0xe0] sm:$0xff]
    %v462 = vld [vmem:[%s4 + $0xe8] sm:$0xff]
    %v463 = vld [vmem:[%s4 + $0xf0] sm:$0xff]
    %v464 = vld [vmem:[%s4 + $0xf8] sm:$0xff]
    %v497 = vunpack.c.l.b16 %v433
    %v498 = vunpack.c.h.b16 %v433
    %v499 = vunpack.c.l.b16 %v434
    %v500 = vunpack.c.h.b16 %v434
    %v501 = vunpack.c.l.b16 %v435
    %v502 = vunpack.c.h.b16 %v435
    %v503 = vunpack.c.l.b16 %v436
    %v504 = vunpack.c.h.b16 %v436
    %v505 = vunpack.c.l.b16 %v437
    %v506 = vunpack.c.h.b16 %v437
    %v507 = vunpack.c.l.b16 %v438
    %v508 = vunpack.c.h.b16 %v438
    %v509 = vunpack.c.l.b16 %v439
    %v510 = vunpack.c.h.b16 %v439
    %v511 = vunpack.c.l.b16 %v440
    %v512 = vunpack.c.h.b16 %v440
    %v513 = vunpack.c.l.b16 %v441
    %v514 = vunpack.c.h.b16 %v441
    %v515 = vunpack.c.l.b16 %v442
    %v516 = vunpack.c.h.b16 %v442
    %v517 = vunpack.c.l.b16 %v443
    %v518 = vunpack.c.h.b16 %v443
    %v519 = vunpack.c.l.b16 %v444
    %v520 = vunpack.c.h.b16 %v444
    %v521 = vunpack.c.l.b16 %v445
    %v522 = vunpack.c.h.b16 %v445
    %v523 = vunpack.c.l.b16 %v446
    %v524 = vunpack.c.h.b16 %v446
    %v525 = vunpack.c.l.b16 %v447
    %v526 = vunpack.c.h.b16 %v447
    %v527 = vunpack.c.l.b16 %v448
    %v528 = vunpack.c.h.b16 %v448
    %v529 = vunpack.c.l.b16 %v449
    %v530 = vunpack.c.h.b16 %v449
    %v531 = vunpack.c.l.b16 %v450
    %v532 = vunpack.c.h.b16 %v450
    %v533 = vunpack.c.l.b16 %v451
    %v534 = vunpack.c.h.b16 %v451
    %v535 = vunpack.c.l.b16 %v452
    %v536 = vunpack.c.h.b16 %v452
    %v537 = vunpack.c.l.b16 %v453
    %v538 = vunpack.c.h.b16 %v453
    %v539 = vunpack.c.l.b16 %v454
    %v540 = vunpack.c.h.b16 %v454
    %v541 = vunpack.c.l.b16 %v455
    %v542 = vunpack.c.h.b16 %v455
    %v543 = vunpack.c.l.b16 %v456
    %v544 = vunpack.c.h.b16 %v456
    %v545 = vunpack.c.l.b16 %v457
    %v546 = vunpack.c.h.b16 %v457
    %v547 = vunpack.c.l.b16 %v458
    %v548 = vunpack.c.h.b16 %v458
    %v549 = vunpack.c.l.b16 %v459
    %v550 = vunpack.c.h.b16 %v459
    %v551 = vunpack.c.l.b16 %v460
    %v552 = vunpack.c.h.b16 %v460
    %v553 = vunpack.c.l.b16 %v461
    %v554 = vunpack.c.h.b16 %v461
    %v555 = vunpack.c.l.b16 %v462
    %v556 = vunpack.c.h.b16 %v462
    %v557 = vunpack.c.l.b16 %v463
    %v558 = vunpack.c.h.b16 %v463
    %v559 = vunpack.c.l.b16 %v464
    %v560 = vunpack.c.h.b16 %v464
    %v561 = vpack.c.b16 %v501, %v497
    %v562 = vpack.c.b16 %v502, %v498
    %v563 = vpack.c.b16 %v503, %v499
    %v564 = vpack.c.b16 %v504, %v500
    %v565 = vpack.c.b16 %v509, %v505
    %v566 = vpack.c.b16 %v510, %v506
    %v567 = vpack.c.b16 %v511, %v507
    %v568 = vpack.c.b16 %v512, %v508
    %v569 = vpack.c.b16 %v517, %v513
    %v570 = vpack.c.b16 %v518, %v514
    %v571 = vpack.c.b16 %v519, %v515
    %v572 = vpack.c.b16 %v520, %v516
    %v573 = vpack.c.b16 %v525, %v521
    %v574 = vpack.c.b16 %v526, %v522
    %v575 = vpack.c.b16 %v527, %v523
    %v576 = vpack.c.b16 %v528, %v524
    %v577 = vpack.c.b16 %v533, %v529
    %v578 = vpack.c.b16 %v534, %v530
    %v579 = vpack.c.b16 %v535, %v531
    %v580 = vpack.c.b16 %v536, %v532
    %v581 = vpack.c.b16 %v541, %v537
    %v582 = vpack.c.b16 %v542, %v538
    %v583 = vpack.c.b16 %v543, %v539
    %v584 = vpack.c.b16 %v544, %v540
    %v585 = vpack.c.b16 %v549, %v545
    %v586 = vpack.c.b16 %v550, %v546
    %v587 = vpack.c.b16 %v551, %v547
    %v588 = vpack.c.b16 %v552, %v548
    %v589 = vpack.c.b16 %v557, %v553
    %v590 = vpack.c.b16 %v558, %v554
    %v591 = vpack.c.b16 %v559, %v555
    %v592 = vpack.c.b16 %v560, %v556
    %625 = vmatpush.bf16.msra.mxu0 %v589
    %626 = vmatpush.bf16.msra.mxu0 %v585
    %627 = vmatpush.bf16.msra.mxu0 %v581
    %628 = vmatpush.bf16.msra.mxu0 %v577
    %629 = vmatpush.bf16.msra.mxu0 %v573
    %630 = vmatpush.bf16.msra.mxu0 %v569
    %631 = vmatpush.bf16.msra.mxu0 %v565
    %632 = vmatpush.bf16.msra.mxu0 %v561
    %633 = vmatmul.bf16.gmra.mxu0 %v432
    %v634 = vpop.f32.mrf.mxu0
    %v635 = vadd.f32 0.0, %v634
    %v636 = vpop.f32.mrf.mxu0
    %637 = vdwg.mxu0
    %638 = vmatpush.bf16.msra.mxu0 %v590
    %639 = vmatpush.bf16.msra.mxu0 %v586
    %640 = vmatpush.bf16.msra.mxu0 %v582
    %641 = vmatpush.bf16.msra.mxu0 %v578
    %642 = vmatpush.bf16.msra.mxu0 %v574
    %643 = vmatpush.bf16.msra.mxu0 %v570
    %644 = vmatpush.bf16.msra.mxu0 %v566
    %645 = vmatpush.bf16.msra.mxu0 %v562
    %646 = vmatmul.bf16.gmra.mxu0 %v432
    %v647 = vpop.f32.mrf.mxu0
    %v648 = vadd.f32 0.0, %v647
    %v649 = vpop.f32.mrf.mxu0
    %650 = vdwg.mxu0
    %651 = vmatpush.bf16.msra.mxu0 %v591
    %652 = vmatpush.bf16.msra.mxu0 %v587
    %653 = vmatpush.bf16.msra.mxu0 %v583
    %654 = vmatpush.bf16.msra.mxu0 %v579
    %655 = vmatpush.bf16.msra.mxu0 %v575
    %656 = vmatpush.bf16.msra.mxu0 %v571
    %657 = vmatpush.bf16.msra.mxu0 %v567
    %658 = vmatpush.bf16.msra.mxu0 %v563
    %659 = vmatmul.bf16.gmra.mxu0 %v432
    %v660 = vpop.f32.mrf.mxu0
    %v661 = vadd.f32 0.0, %v660
    %v662 = vpop.f32.mrf.mxu0
    %663 = vdwg.mxu0
    %664 = vmatpush.bf16.msra.mxu0 %v592
    %665 = vmatpush.bf16.msra.mxu0 %v588
    %666 = vmatpush.bf16.msra.mxu0 %v584
    %667 = vmatpush.bf16.msra.mxu0 %v580
    %668 = vmatpush.bf16.msra.mxu0 %v576
    %669 = vmatpush.bf16.msra.mxu0 %v572
    %670 = vmatpush.bf16.msra.mxu0 %v568
    %671 = vmatpush.bf16.msra.mxu0 %v564
    %672 = vmatmul.bf16.gmra.mxu0 %v432
    %v673 = vpop.f32.mrf.mxu0
    %v674 = vadd.f32 0.0, %v673
    %v675 = vpop.f32.mrf.mxu0
    %676 = vdwg.mxu0
    %v677 = vadd.f32 %v427, %v635
    %v678 = vadd.f32 %v428, %v648
    %v679 = vadd.f32 %v429, %v661
    %v680 = vadd.f32 %v430, %v674
    %v681 = vxor.u32 %v677, 2147483648
    %v682 = vmul.f32 %v681, 1.442695
    %v683 = vpow.pop %v682
    %v684 = vadd.f32 %v683, 1.0
    %v685 = vrcp.pop %v684
    %v686 = vmul.f32 %v684, %v685
    %v687 = vsub.f32 1.0, %v686
    %v688 = vmul.f32 %v685, %v687
    %v689 = vadd.f32 %v685, %v688
    %vm690 = vweird.f32 %v684
    %vm691 = vweird.f32 %v685
    %vm692 = vmor %vm690, %vm691
    %v693 = vsel %vm692, %v685, %v689
    %v694 = vand.u32 2147483647, %v684
    %vm695 = vcmp.eq.f32.partialorder %v694, 8.507059e+37
    %v696 = vand.u32 %v684, 2147483648
    %v697 = vor.u32 1.1754944e-38, %v696
    %v698 = vsel %vm695, %v697, %v693
    %v699 = vmul.f32 1.0, %v698
    %v700 = vxor.u32 %v678, 2147483648
    %v701 = vmul.f32 %v700, 1.442695
    %v702 = vpow.pop %v701
    %v703 = vadd.f32 %v702, 1.0
    %v704 = vrcp.pop %v703
    %v705 = vmul.f32 %v703, %v704
    %v706 = vsub.f32 1.0, %v705
    %v707 = vmul.f32 %v704, %v706
    %v708 = vadd.f32 %v704, %v707
    %vm709 = vweird.f32 %v703
    %vm710 = vweird.f32 %v704
    %vm711 = vmor %vm709, %vm710
    %v712 = vsel %vm711, %v704, %v708
    %v713 = vand.u32 2147483647, %v703
    %vm714 = vcmp.eq.f32.partialorder %v713, 8.507059e+37
    %v715 = vand.u32 %v703, 2147483648
    %v716 = vor.u32 1.1754944e-38, %v715
    %v717 = vsel %vm714, %v716, %v712
    %v718 = vmul.f32 1.0, %v717
    %v719 = vtanh.pop %v679
    %v720 = vxor.u32 %v680, 2147483648
    %v721 = vmul.f32 %v720, 1.442695
    %v722 = vpow.pop %v721
    %v723 = vadd.f32 %v722, 1.0
    %v724 = vrcp.pop %v723
    %v725 = vmul.f32 %v723, %v724
    %v726 = vsub.f32 1.0, %v725
    %v727 = vmul.f32 %v724, %v726
    %v728 = vadd.f32 %v724, %v727
    %vm729 = vweird.f32 %v723
    %vm730 = vweird.f32 %v724
    %vm731 = vmor %vm729, %vm730
    %v732 = vsel %vm731, %v724, %v728
    %v733 = vand.u32 2147483647, %v723
    %vm734 = vcmp.eq.f32.partialorder %v733, 8.507059e+37
    %v735 = vand.u32 %v723, 2147483648
    %v736 = vor.u32 1.1754944e-38, %v735
    %v737 = vsel %vm734, %v736, %v732
    %v738 = vmul.f32 1.0, %v737
    %v739 = vld [vmem:[#allocation5] sm:$0xff]
    %v740 = vmul.f32 %v718, %v739
    %v741 = vmul.f32 %v699, %v719
    %v742 = vadd.f32 %v740, %v741
    %v743 = vtanh.pop %v742
    %v744 = vmul.f32 %v738, %v743
    %745 = vst [vmem:[#allocation4] sm:$0xff] %v744
    %746 = vst [vmem:[#allocation5] sm:$0xff] %v742
    %747 = vst [vmem:[#allocation3] sm:$0xff] %v744
    %s748 = smul.u32 1, 4
    %s749 = smul.addr %s748, 8
    %s750 = scalar_lea.vmem [#allocation2], %s749
    %v751 = vld [vmem:[%s750] sm:$0xff]
    %v752 = vld [vmem:[%s750 + $0x8] sm:$0xff]
    %v753 = vld [vmem:[%s750 + $0x10] sm:$0xff]
    %v754 = vld [vmem:[%s750 + $0x18] sm:$0xff]
    %v755 = vld [vmem:[#allocation4] sm:$0xff]
    %v756 = vpack.c.bf16 %v755, %v755
    %v757 = vld [vmem:[%s4] sm:$0xff]
    %v758 = vld [vmem:[%s4 + $0x8] sm:$0xff]
    %v759 = vld [vmem:[%s4 + $0x10] sm:$0xff]
    %v760 = vld [vmem:[%s4 + $0x18] sm:$0xff]
    %v761 = vld [vmem:[%s4 + $0x20] sm:$0xff]
    %v762 = vld [vmem:[%s4 + $0x28] sm:$0xff]
    %v763 = vld [vmem:[%s4 + $0x30] sm:$0xff]
    %v764 = vld [vmem:[%s4 + $0x38] sm:$0xff]
    %v765 = vld [vmem:[%s4 + $0x40] sm:$0xff]
    %v766 = vld [vmem:[%s4 + $0x48] sm:$0xff]
    %v767 = vld [vmem:[%s4 + $0x50] sm:$0xff]
    %v768 = vld [vmem:[%s4 + $0x58] sm:$0xff]
    %v769 = vld [vmem:[%s4 + $0x60] sm:$0xff]
    %v770 = vld [vmem:[%s4 + $0x68] sm:$0xff]
    %v771 = vld [vmem:[%s4 + $0x70] sm:$0xff]
    %v772 = vld [vmem:[%s4 + $0x78] sm:$0xff]
    %v773 = vld [vmem:[%s4 + $0x80] sm:$0xff]
    %v774 = vld [vmem:[%s4 + $0x88] sm:$0xff]
    %v775 = vld [vmem:[%s4 + $0x90] sm:$0xff]
    %v776 = vld [vmem:[%s4 + $0x98] sm:$0xff]
    %v777 = vld [vmem:[%s4 + $0xa0] sm:$0xff]
    %v778 = vld [vmem:[%s4 + $0xa8] sm:$0xff]
    %v779 = vld [vmem:[%s4 + $0xb0] sm:$0xff]
    %v780 = vld [vmem:[%s4 + $0xb8] sm:$0xff]
    %v781 = vld [vmem:[%s4 + $0xc0] sm:$0xff]
    %v782 = vld [vmem:[%s4 + $0xc8] sm:$0xff]
    %v783 = vld [vmem:[%s4 + $0xd0] sm:$0xff]
    %v784 = vld [vmem:[%s4 + $0xd8] sm:$0xff]
    %v785 = vld [vmem:[%s4 + $0xe0] sm:$0xff]
    %v786 = vld [vmem:[%s4 + $0xe8] sm:$0xff]
    %v787 = vld [vmem:[%s4 + $0xf0] sm:$0xff]
    %v788 = vld [vmem:[%s4 + $0xf8] sm:$0xff]
    %v821 = vunpack.c.l.b16 %v757
    %v822 = vunpack.c.h.b16 %v757
    %v823 = vunpack.c.l.b16 %v758
    %v824 = vunpack.c.h.b16 %v758
    %v825 = vunpack.c.l.b16 %v759
    %v826 = vunpack.c.h.b16 %v759
    %v827 = vunpack.c.l.b16 %v760
    %v828 = vunpack.c.h.b16 %v760
    %v829 = vunpack.c.l.b16 %v761
    %v830 = vunpack.c.h.b16 %v761
    %v831 = vunpack.c.l.b16 %v762
    %v832 = vunpack.c.h.b16 %v762
    %v833 = vunpack.c.l.b16 %v763
    %v834 = vunpack.c.h.b16 %v763
    %v835 = vunpack.c.l.b16 %v764
    %v836 = vunpack.c.h.b16 %v764
    %v837 = vunpack.c.l.b16 %v765
    %v838 = vunpack.c.h.b16 %v765
    %v839 = vunpack.c.l.b16 %v766
    %v840 = vunpack.c.h.b16 %v766
    %v841 = vunpack.c.l.b16 %v767
    %v842 = vunpack.c.h.b16 %v767
    %v843 = vunpack.c.l.b16 %v768
    %v844 = vunpack.c.h.b16 %v768
    %v845 = vunpack.c.l.b16 %v769
    %v846 = vunpack.c.h.b16 %v769
    %v847 = vunpack.c.l.b16 %v770
    %v848 = vunpack.c.h.b16 %v770
    %v849 = vunpack.c.l.b16 %v771
    %v850 = vunpack.c.h.b16 %v771
    %v851 = vunpack.c.l.b16 %v772
    %v852 = vunpack.c.h.b16 %v772
    %v853 = vunpack.c.l.b16 %v773
    %v854 = vunpack.c.h.b16 %v773
    %v855 = vunpack.c.l.b16 %v774
    %v856 = vunpack.c.h.b16 %v774
    %v857 = vunpack.c.l.b16 %v775
    %v858 = vunpack.c.h.b16 %v775
    %v859 = vunpack.c.l.b16 %v776
    %v860 = vunpack.c.h.b16 %v776
    %v861 = vunpack.c.l.b16 %v777
    %v862 = vunpack.c.h.b16 %v777
    %v863 = vunpack.c.l.b16 %v778
    %v864 = vunpack.c.h.b16 %v778
    %v865 = vunpack.c.l.b16 %v779
    %v866 = vunpack.c.h.b16 %v779
    %v867 = vunpack.c.l.b16 %v780
    %v868 = vunpack.c.h.b16 %v780
    %v869 = vunpack.c.l.b16 %v781
    %v870 = vunpack.c.h.b16 %v781
    %v871 = vunpack.c.l.b16 %v782
    %v872 = vunpack.c.h.b16 %v782
    %v873 = vunpack.c.l.b16 %v783
    %v874 = vunpack.c.h.b16 %v783
    %v875 = vunpack.c.l.b16 %v784
    %v876 = vunpack.c.h.b16 %v784
    %v877 = vunpack.c.l.b16 %v785
    %v878 = vunpack.c.h.b16 %v785
    %v879 = vunpack.c.l.b16 %v786
    %v880 = vunpack.c.h.b16 %v786
    %v881 = vunpack.c.l.b16 %v787
    %v882 = vunpack.c.h.b16 %v787
    %v883 = vunpack.c.l.b16 %v788
    %v884 = vunpack.c.h.b16 %v788
    %v885 = vpack.c.b16 %v825, %v821
    %v886 = vpack.c.b16 %v826, %v822
    %v887 = vpack.c.b16 %v827, %v823
    %v888 = vpack.c.b16 %v828, %v824
    %v889 = vpack.c.b16 %v833, %v829
    %v890 = vpack.c.b16 %v834, %v830
    %v891 = vpack.c.b16 %v835, %v831
    %v892 = vpack.c.b16 %v836, %v832
    %v893 = vpack.c.b16 %v841, %v837
    %v894 = vpack.c.b16 %v842, %v838
    %v895 = vpack.c.b16 %v843, %v839
    %v896 = vpack.c.b16 %v844, %v840
    %v897 = vpack.c.b16 %v849, %v845
    %v898 = vpack.c.b16 %v850, %v846
    %v899 = vpack.c.b16 %v851, %v847
    %v900 = vpack.c.b16 %v852, %v848
    %v901 = vpack.c.b16 %v857, %v853
    %v902 = vpack.c.b16 %v858, %v854
    %v903 = vpack.c.b16 %v859, %v855
    %v904 = vpack.c.b16 %v860, %v856
    %v905 = vpack.c.b16 %v865, %v861
    %v906 = vpack.c.b16 %v866, %v862
    %v907 = vpack.c.b16 %v867, %v863
    %v908 = vpack.c.b16 %v868, %v864
    %v909 = vpack.c.b16 %v873, %v869
    %v910 = vpack.c.b16 %v874, %v870
    %v911 = vpack.c.b16 %v875, %v871
    %v912 = vpack.c.b16 %v876, %v872
    %v913 = vpack.c.b16 %v881, %v877
    %v914 = vpack.c.b16 %v882, %v878
    %v915 = vpack.c.b16 %v883, %v879
    %v916 = vpack.c.b16 %v884, %v880
    %949 = vmatpush.bf16.msra.mxu0 %v913
    %950 = vmatpush.bf16.msra.mxu0 %v909
    %951 = vmatpush.bf16.msra.mxu0 %v905
    %952 = vmatpush.bf16.msra.mxu0 %v901
    %953 = vmatpush.bf16.msra.mxu0 %v897
    %954 = vmatpush.bf16.msra.mxu0 %v893
    %955 = vmatpush.bf16.msra.mxu0 %v889
    %956 = vmatpush.bf16.msra.mxu0 %v885
    %957 = vmatmul.bf16.gmra.mxu0 %v756
    %v958 = vpop.f32.mrf.mxu0
    %v959 = vadd.f32 0.0, %v958
    %v960 = vpop.f32.mrf.mxu0
    %961 = vdwg.mxu0
    %962 = vmatpush.bf16.msra.mxu0 %v914
    %963 = vmatpush.bf16.msra.mxu0 %v910
    %964 = vmatpush.bf16.msra.mxu0 %v906
    %965 = vmatpush.bf16.msra.mxu0 %v902
    %966 = vmatpush.bf16.msra.mxu0 %v898
    %967 = vmatpush.bf16.msra.mxu0 %v894
    %968 = vmatpush.bf16.msra.mxu0 %v890
    %969 = vmatpush.bf16.msra.mxu0 %v886
    %970 = vmatmul.bf16.gmra.mxu0 %v756
    %v971 = vpop.f32.mrf.mxu0
    %v972 = vadd.f32 0.0, %v971
    %v973 = vpop.f32.mrf.mxu0
    %974 = vdwg.mxu0
    %975 = vmatpush.bf16.msra.mxu0 %v915
    %976 = vmatpush.bf16.msra.mxu0 %v911
    %977 = vmatpush.bf16.msra.mxu0 %v907
    %978 = vmatpush.bf16.msra.mxu0 %v903
    %979 = vmatpush.bf16.msra.mxu0 %v899
    %980 = vmatpush.bf16.msra.mxu0 %v895
    %981 = vmatpush.bf16.msra.mxu0 %v891
    %982 = vmatpush.bf16.msra.mxu0 %v887
    %983 = vmatmul.bf16.gmra.mxu0 %v756
    %v984 = vpop.f32.mrf.mxu0
    %v985 = vadd.f32 0.0, %v984
    %v986 = vpop.f32.mrf.mxu0
    %987 = vdwg.mxu0
    %988 = vmatpush.bf16.msra.mxu0 %v916
    %989 = vmatpush.bf16.msra.mxu0 %v912
    %990 = vmatpush.bf16.msra.mxu0 %v908
    %991 = vmatpush.bf16.msra.mxu0 %v904
    %992 = vmatpush.bf16.msra.mxu0 %v900
    %993 = vmatpush.bf16.msra.mxu0 %v896
    %994 = vmatpush.bf16.msra.mxu0 %v892
    %995 = vmatpush.bf16.msra.mxu0 %v888
    %996 = vmatmul.bf16.gmra.mxu0 %v756
    %v997 = vpop.f32.mrf.mxu0
    %v998 = vadd.f32 0.0, %v997
    %v999 = vpop.f32.mrf.mxu0
    %1000 = vdwg.mxu0
    %v1001 = vadd.f32 %v751, %v959
    %v1002 = vadd.f32 %v752, %v972
    %v1003 = vadd.f32 %v753, %v985
    %v1004 = vadd.f32 %v754, %v998
    %v1005 = vxor.u32 %v1001, 2147483648
    %v1006 = vmul.f32 %v1005, 1.442695
    %v1007 = vpow.pop %v1006
    %v1008 = vadd.f32 %v1007, 1.0
    %v1009 = vrcp.pop %v1008
    %v1010 = vmul.f32 %v1008, %v1009
    %v1011 = vsub.f32 1.0, %v1010
    %v1012 = vmul.f32 %v1009, %v1011
    %v1013 = vadd.f32 %v1009, %v1012
    %vm1014 = vweird.f32 %v1008
    %vm1015 = vweird.f32 %v1009
    %vm1016 = vmor %vm1014, %vm1015
    %v1017 = vsel %vm1016, %v1009, %v1013
    %v1018 = vand.u32 2147483647, %v1008
    %vm1019 = vcmp.eq.f32.partialorder %v1018, 8.507059e+37
    %v1020 = vand.u32 %v1008, 2147483648
    %v1021 = vor.u32 1.1754944e-38, %v1020
    %v1022 = vsel %vm1019, %v1021, %v1017
    %v1023 = vmul.f32 1.0, %v1022
    %v1024 = vxor.u32 %v1002, 2147483648
    %v1025 = vmul.f32 %v1024, 1.442695
    %v1026 = vpow.pop %v1025
    %v1027 = vadd.f32 %v1026, 1.0
    %v1028 = vrcp.pop %v1027
    %v1029 = vmul.f32 %v1027, %v1028
    %v1030 = vsub.f32 1.0, %v1029
    %v1031 = vmul.f32 %v1028, %v1030
    %v1032 = vadd.f32 %v1028, %v1031
    %vm1033 = vweird.f32 %v1027
    %vm1034 = vweird.f32 %v1028
    %vm1035 = vmor %vm1033, %vm1034
    %v1036 = vsel %vm1035, %v1028, %v1032
    %v1037 = vand.u32 2147483647, %v1027
    %vm1038 = vcmp.eq.f32.partialorder %v1037, 8.507059e+37
    %v1039 = vand.u32 %v1027, 2147483648
    %v1040 = vor.u32 1.1754944e-38, %v1039
    %v1041 = vsel %vm1038, %v1040, %v1036
    %v1042 = vmul.f32 1.0, %v1041
    %v1043 = vtanh.pop %v1003
    %v1044 = vxor.u32 %v1004, 2147483648
    %v1045 = vmul.f32 %v1044, 1.442695
    %v1046 = vpow.pop %v1045
    %v1047 = vadd.f32 %v1046, 1.0
    %v1048 = vrcp.pop %v1047
    %v1049 = vmul.f32 %v1047, %v1048
    %v1050 = vsub.f32 1.0, %v1049
    %v1051 = vmul.f32 %v1048, %v1050
    %v1052 = vadd.f32 %v1048, %v1051
    %vm1053 = vweird.f32 %v1047
    %vm1054 = vweird.f32 %v1048
    %vm1055 = vmor %vm1053, %vm1054
    %v1056 = vsel %vm1055, %v1048, %v1052
    %v1057 = vand.u32 2147483647, %v1047
    %vm1058 = vcmp.eq.f32.partialorder %v1057, 8.507059e+37
    %v1059 = vand.u32 %v1047, 2147483648
    %v1060 = vor.u32 1.1754944e-38, %v1059
    %v1061 = vsel %vm1058, %v1060, %v1056
    %v1062 = vmul.f32 1.0, %v1061
    %v1063 = vld [vmem:[#allocation5] sm:$0xff]
    %v1064 = vmul.f32 %v1042, %v1063
    %v1065 = vmul.f32 %v1023, %v1043
    %v1066 = vadd.f32 %v1064, %v1065
    %v1067 = vtanh.pop %v1066
    %v1068 = vmul.f32 %v1062, %v1067
    %1069 = vst [vmem:[#allocation4] sm:$0xff] %v1068
    %1070 = vst [vmem:[#allocation5] sm:$0xff] %v1066
    %s1071 = scalar_lea.vmem [#allocation3], 8
    %1072 = vst [vmem:[%s1071] sm:$0xff] %v1068
    %s1073 = smul.u32 2, 4
    %s1074 = smul.addr %s1073, 8
    %s1075 = scalar_lea.vmem [#allocation2], %s1074
    %v1076 = vld [vmem:[%s1075] sm:$0xff]
    %v1077 = vld [vmem:[%s1075 + $0x8] sm:$0xff]
    %v1078 = vld [vmem:[%s1075 + $0x10] sm:$0xff]
    %v1079 = vld [vmem:[%s1075 + $0x18] sm:$0xff]
    %v1080 = vld [vmem:[#allocation4] sm:$0xff]
    %v1081 = vpack.c.bf16 %v1080, %v1080
    %v1082 = vld [vmem:[%s4] sm:$0xff]
    %v1083 = vld [vmem:[%s4 + $0x8] sm:$0xff]
    %v1084 = vld [vmem:[%s4 + $0x10] sm:$0xff]
    %v1085 = vld [vmem:[%s4 + $0x18] sm:$0xff]
    %v1086 = vld [vmem:[%s4 + $0x20] sm:$0xff]
    %v1087 = vld [vmem:[%s4 + $0x28] sm:$0xff]
    %v1088 = vld [vmem:[%s4 + $0x30] sm:$0xff]
    %v1089 = vld [vmem:[%s4 + $0x38] sm:$0xff]
    %v1090 = vld [vmem:[%s4 + $0x40] sm:$0xff]
    %v1091 = vld [vmem:[%s4 + $0x48] sm:$0xff]
    %v1092 = vld [vmem:[%s4 + $0x50] sm:$0xff]
    %v1093 = vld [vmem:[%s4 + $0x58] sm:$0xff]
    %v1094 = vld [vmem:[%s4 + $0x60] sm:$0xff]
    %v1095 = vld [vmem:[%s4 + $0x68] sm:$0xff]
    %v1096 = vld [vmem:[%s4 + $0x70] sm:$0xff]
    %v1097 = vld [vmem:[%s4 + $0x78] sm:$0xff]
    %v1098 = vld [vmem:[%s4 + $0x80] sm:$0xff]
    %v1099 = vld [vmem:[%s4 + $0x88] sm:$0xff]
    %v1100 = vld [vmem:[%s4 + $0x90] sm:$0xff]
    %v1101 = vld [vmem:[%s4 + $0x98] sm:$0xff]
    %v1102 = vld [vmem:[%s4 + $0xa0] sm:$0xff]
    %v1103 = vld [vmem:[%s4 + $0xa8] sm:$0xff]
    %v1104 = vld [vmem:[%s4 + $0xb0] sm:$0xff]
    %v1105 = vld [vmem:[%s4 + $0xb8] sm:$0xff]
    %v1106 = vld [vmem:[%s4 + $0xc0] sm:$0xff]
    %v1107 = vld [vmem:[%s4 + $0xc8] sm:$0xff]
    %v1108 = vld [vmem:[%s4 + $0xd0] sm:$0xff]
    %v1109 = vld [vmem:[%s4 + $0xd8] sm:$0xff]
    %v1110 = vld [vmem:[%s4 + $0xe0] sm:$0xff]
    %v1111 = vld [vmem:[%s4 + $0xe8] sm:$0xff]
    %v1112 = vld [vmem:[%s4 + $0xf0] sm:$0xff]
    %v1113 = vld [vmem:[%s4 + $0xf8] sm:$0xff]
    %v1146 = vunpack.c.l.b16 %v1082
    %v1147 = vunpack.c.h.b16 %v1082
    %v1148 = vunpack.c.l.b16 %v1083
    %v1149 = vunpack.c.h.b16 %v1083
    %v1150 = vunpack.c.l.b16 %v1084
    %v1151 = vunpack.c.h.b16 %v1084
    %v1152 = vunpack.c.l.b16 %v1085
    %v1153 = vunpack.c.h.b16 %v1085
    %v1154 = vunpack.c.l.b16 %v1086
    %v1155 = vunpack.c.h.b16 %v1086
    %v1156 = vunpack.c.l.b16 %v1087
    %v1157 = vunpack.c.h.b16 %v1087
    %v1158 = vunpack.c.l.b16 %v1088
    %v1159 = vunpack.c.h.b16 %v1088
    %v1160 = vunpack.c.l.b16 %v1089
    %v1161 = vunpack.c.h.b16 %v1089
    %v1162 = vunpack.c.l.b16 %v1090
    %v1163 = vunpack.c.h.b16 %v1090
    %v1164 = vunpack.c.l.b16 %v1091
    %v1165 = vunpack.c.h.b16 %v1091
    %v1166 = vunpack.c.l.b16 %v1092
    %v1167 = vunpack.c.h.b16 %v1092
    %v1168 = vunpack.c.l.b16 %v1093
    %v1169 = vunpack.c.h.b16 %v1093
    %v1170 = vunpack.c.l.b16 %v1094
    %v1171 = vunpack.c.h.b16 %v1094
    %v1172 = vunpack.c.l.b16 %v1095
    %v1173 = vunpack.c.h.b16 %v1095
    %v1174 = vunpack.c.l.b16 %v1096
    %v1175 = vunpack.c.h.b16 %v1096
    %v1176 = vunpack.c.l.b16 %v1097
    %v1177 = vunpack.c.h.b16 %v1097
    %v1178 = vunpack.c.l.b16 %v1098
    %v1179 = vunpack.c.h.b16 %v1098
    %v1180 = vunpack.c.l.b16 %v1099
    %v1181 = vunpack.c.h.b16 %v1099
    %v1182 = vunpack.c.l.b16 %v1100
    %v1183 = vunpack.c.h.b16 %v1100
    %v1184 = vunpack.c.l.b16 %v1101
    %v1185 = vunpack.c.h.b16 %v1101
    %v1186 = vunpack.c.l.b16 %v1102
    %v1187 = vunpack.c.h.b16 %v1102
    %v1188 = vunpack.c.l.b16 %v1103
    %v1189 = vunpack.c.h.b16 %v1103
    %v1190 = vunpack.c.l.b16 %v1104
    %v1191 = vunpack.c.h.b16 %v1104
    %v1192 = vunpack.c.l.b16 %v1105
    %v1193 = vunpack.c.h.b16 %v1105
    %v1194 = vunpack.c.l.b16 %v1106
    %v1195 = vunpack.c.h.b16 %v1106
    %v1196 = vunpack.c.l.b16 %v1107
    %v1197 = vunpack.c.h.b16 %v1107
    %v1198 = vunpack.c.l.b16 %v1108
    %v1199 = vunpack.c.h.b16 %v1108
    %v1200 = vunpack.c.l.b16 %v1109
    %v1201 = vunpack.c.h.b16 %v1109
    %v1202 = vunpack.c.l.b16 %v1110
    %v1203 = vunpack.c.h.b16 %v1110
    %v1204 = vunpack.c.l.b16 %v1111
    %v1205 = vunpack.c.h.b16 %v1111
    %v1206 = vunpack.c.l.b16 %v1112
    %v1207 = vunpack.c.h.b16 %v1112
    %v1208 = vunpack.c.l.b16 %v1113
    %v1209 = vunpack.c.h.b16 %v1113
    %v1210 = vpack.c.b16 %v1150, %v1146
    %v1211 = vpack.c.b16 %v1151, %v1147
    %v1212 = vpack.c.b16 %v1152, %v1148
    %v1213 = vpack.c.b16 %v1153, %v1149
    %v1214 = vpack.c.b16 %v1158, %v1154
    %v1215 = vpack.c.b16 %v1159, %v1155
    %v1216 = vpack.c.b16 %v1160, %v1156
    %v1217 = vpack.c.b16 %v1161, %v1157
    %v1218 = vpack.c.b16 %v1166, %v1162
    %v1219 = vpack.c.b16 %v1167, %v1163
    %v1220 = vpack.c.b16 %v1168, %v1164
    %v1221 = vpack.c.b16 %v1169, %v1165
    %v1222 = vpack.c.b16 %v1174, %v1170
    %v1223 = vpack.c.b16 %v1175, %v1171
    %v1224 = vpack.c.b16 %v1176, %v1172
    %v1225 = vpack.c.b16 %v1177, %v1173
    %v1226 = vpack.c.b16 %v1182, %v1178
    %v1227 = vpack.c.b16 %v1183, %v1179
    %v1228 = vpack.c.b16 %v1184, %v1180
    %v1229 = vpack.c.b16 %v1185, %v1181
    %v1230 = vpack.c.b16 %v1190, %v1186
    %v1231 = vpack.c.b16 %v1191, %v1187
    %v1232 = vpack.c.b16 %v1192, %v1188
    %v1233 = vpack.c.b16 %v1193, %v1189
    %v1234 = vpack.c.b16 %v1198, %v1194
    %v1235 = vpack.c.b16 %v1199, %v1195
    %v1236 = vpack.c.b16 %v1200, %v1196
    %v1237 = vpack.c.b16 %v1201, %v1197
    %v1238 = vpack.c.b16 %v1206, %v1202
    %v1239 = vpack.c.b16 %v1207, %v1203
    %v1240 = vpack.c.b16 %v1208, %v1204
    %v1241 = vpack.c.b16 %v1209, %v1205
    %1274 = vmatpush.bf16.msra.mxu0 %v1238
    %1275 = vmatpush.bf16.msra.mxu0 %v1234
    %1276 = vmatpush.bf16.msra.mxu0 %v1230
    %1277 = vmatpush.bf16.msra.mxu0 %v1226
    %1278 = vmatpush.bf16.msra.mxu0 %v1222
    %1279 = vmatpush.bf16.msra.mxu0 %v1218
    %1280 = vmatpush.bf16.msra.mxu0 %v1214
    %1281 = vmatpush.bf16.msra.mxu0 %v1210
    %1282 = vmatmul.bf16.gmra.mxu0 %v1081
    %v1283 = vpop.f32.mrf.mxu0
    %v1284 = vadd.f32 0.0, %v1283
    %v1285 = vpop.f32.mrf.mxu0
    %1286 = vdwg.mxu0
    %1287 = vmatpush.bf16.msra.mxu0 %v1239
    %1288 = vmatpush.bf16.msra.mxu0 %v1235
    %1289 = vmatpush.bf16.msra.mxu0 %v1231
    %1290 = vmatpush.bf16.msra.mxu0 %v1227
    %1291 = vmatpush.bf16.msra.mxu0 %v1223
    %1292 = vmatpush.bf16.msra.mxu0 %v1219
    %1293 = vmatpush.bf16.msra.mxu0 %v1215
    %1294 = vmatpush.bf16.msra.mxu0 %v1211
    %1295 = vmatmul.bf16.gmra.mxu0 %v1081
    %v1296 = vpop.f32.mrf.mxu0
    %v1297 = vadd.f32 0.0, %v1296
    %v1298 = vpop.f32.mrf.mxu0
    %1299 = vdwg.mxu0
    %1300 = vmatpush.bf16.msra.mxu0 %v1240
    %1301 = vmatpush.bf16.msra.mxu0 %v1236
    %1302 = vmatpush.bf16.msra.mxu0 %v1232
    %1303 = vmatpush.bf16.msra.mxu0 %v1228
    %1304 = vmatpush.bf16.msra.mxu0 %v1224
    %1305 = vmatpush.bf16.msra.mxu0 %v1220
    %1306 = vmatpush.bf16.msra.mxu0 %v1216
    %1307 = vmatpush.bf16.msra.mxu0 %v1212
    %1308 = vmatmul.bf16.gmra.mxu0 %v1081
    %v1309 = vpop.f32.mrf.mxu0
    %v1310 = vadd.f32 0.0, %v1309
    %v1311 = vpop.f32.mrf.mxu0
    %1312 = vdwg.mxu0
    %1313 = vmatpush.bf16.msra.mxu0 %v1241
    %1314 = vmatpush.bf16.msra.mxu0 %v1237
    %1315 = vmatpush.bf16.msra.mxu0 %v1233
    %1316 = vmatpush.bf16.msra.mxu0 %v1229
    %1317 = vmatpush.bf16.msra.mxu0 %v1225
    %1318 = vmatpush.bf16.msra.mxu0 %v1221
    %1319 = vmatpush.bf16.msra.mxu0 %v1217
    %1320 = vmatpush.bf16.msra.mxu0 %v1213
    %1321 = vmatmul.bf16.gmra.mxu0 %v1081
    %v1322 = vpop.f32.mrf.mxu0
    %v1323 = vadd.f32 0.0, %v1322
    %v1324 = vpop.f32.mrf.mxu0
    %1325 = vdwg.mxu0
    %v1326 = vadd.f32 %v1076, %v1284
    %v1327 = vadd.f32 %v1077, %v1297
    %v1328 = vadd.f32 %v1078, %v1310
    %v1329 = vadd.f32 %v1079, %v1323
    %v1330 = vxor.u32 %v1326, 2147483648
    %v1331 = vmul.f32 %v1330, 1.442695
    %v1332 = vpow.pop %v1331
    %v1333 = vadd.f32 %v1332, 1.0
    %v1334 = vrcp.pop %v1333
    %v1335 = vmul.f32 %v1333, %v1334
    %v1336 = vsub.f32 1.0, %v1335
    %v1337 = vmul.f32 %v1334, %v1336
    %v1338 = vadd.f32 %v1334, %v1337
    %vm1339 = vweird.f32 %v1333
    %vm1340 = vweird.f32 %v1334
    %vm1341 = vmor %vm1339, %vm1340
    %v1342 = vsel %vm1341, %v1334, %v1338
    %v1343 = vand.u32 2147483647, %v1333
    %vm1344 = vcmp.eq.f32.partialorder %v1343, 8.507059e+37
    %v1345 = vand.u32 %v1333, 2147483648
    %v1346 = vor.u32 1.1754944e-38, %v1345
    %v1347 = vsel %vm1344, %v1346, %v1342
    %v1348 = vmul.f32 1.0, %v1347
    %v1349 = vxor.u32 %v1327, 2147483648
    %v1350 = vmul.f32 %v1349, 1.442695
    %v1351 = vpow.pop %v1350
    %v1352 = vadd.f32 %v1351, 1.0
    %v1353 = vrcp.pop %v1352
    %v1354 = vmul.f32 %v1352, %v1353
    %v1355 = vsub.f32 1.0, %v1354
    %v1356 = vmul.f32 %v1353, %v1355
    %v1357 = vadd.f32 %v1353, %v1356
    %vm1358 = vweird.f32 %v1352
    %vm1359 = vweird.f32 %v1353
    %vm1360 = vmor %vm1358, %vm1359
    %v1361 = vsel %vm1360, %v1353, %v1357
    %v1362 = vand.u32 2147483647, %v1352
    %vm1363 = vcmp.eq.f32.partialorder %v1362, 8.507059e+37
    %v1364 = vand.u32 %v1352, 2147483648
    %v1365 = vor.u32 1.1754944e-38, %v1364
    %v1366 = vsel %vm1363, %v1365, %v1361
    %v1367 = vmul.f32 1.0, %v1366
    %v1368 = vtanh.pop %v1328
    %v1369 = vxor.u32 %v1329, 2147483648
    %v1370 = vmul.f32 %v1369, 1.442695
    %v1371 = vpow.pop %v1370
    %v1372 = vadd.f32 %v1371, 1.0
    %v1373 = vrcp.pop %v1372
    %v1374 = vmul.f32 %v1372, %v1373
    %v1375 = vsub.f32 1.0, %v1374
    %v1376 = vmul.f32 %v1373, %v1375
    %v1377 = vadd.f32 %v1373, %v1376
    %vm1378 = vweird.f32 %v1372
    %vm1379 = vweird.f32 %v1373
    %vm1380 = vmor %vm1378, %vm1379
    %v1381 = vsel %vm1380, %v1373, %v1377
    %v1382 = vand.u32 2147483647, %v1372
    %vm1383 = vcmp.eq.f32.partialorder %v1382, 8.507059e+37
    %v1384 = vand.u32 %v1372, 2147483648
    %v1385 = vor.u32 1.1754944e-38, %v1384
    %v1386 = vsel %vm1383, %v1385, %v1381
    %v1387 = vmul.f32 1.0, %v1386
    %v1388 = vld [vmem:[#allocation5] sm:$0xff]
    %v1389 = vmul.f32 %v1367, %v1388
    %v1390 = vmul.f32 %v1348, %v1368
    %v1391 = vadd.f32 %v1389, %v1390
    %v1392 = vtanh.pop %v1391
    %v1393 = vmul.f32 %v1387, %v1392
    %1394 = vst [vmem:[#allocation4] sm:$0xff] %v1393
    %1395 = vst [vmem:[#allocation5] sm:$0xff] %v1391
    %s1396 = scalar_lea.vmem [#allocation3], 16
    %1397 = vst [vmem:[%s1396] sm:$0xff] %v1393
    %s1398 = smul.u32 3, 4
    %s1399 = smul.addr %s1398, 8
    %s1400 = scalar_lea.vmem [#allocation2], %s1399
    %v1401 = vld [vmem:[%s1400] sm:$0xff]
    %v1402 = vld [vmem:[%s1400 + $0x8] sm:$0xff]
    %v1403 = vld [vmem:[%s1400 + $0x10] sm:$0xff]
    %v1404 = vld [vmem:[%s1400 + $0x18] sm:$0xff]
    %v1405 = vld [vmem:[#allocation4] sm:$0xff]
    %v1406 = vpack.c.bf16 %v1405, %v1405
    %v1407 = vld [vmem:[%s4] sm:$0xff]
    %v1408 = vld [vmem:[%s4 + $0x8] sm:$0xff]
    %v1409 = vld [vmem:[%s4 + $0x10] sm:$0xff]
    %v1410 = vld [vmem:[%s4 + $0x18] sm:$0xff]
    %v1411 = vld [vmem:[%s4 + $0x20] sm:$0xff]
    %v1412 = vld [vmem:[%s4 + $0x28] sm:$0xff]
    %v1413 = vld [vmem:[%s4 + $0x30] sm:$0xff]
    %v1414 = vld [vmem:[%s4 + $0x38] sm:$0xff]
    %v1415 = vld [vmem:[%s4 + $0x40] sm:$0xff]
    %v1416 = vld [vmem:[%s4 + $0x48] sm:$0xff]
    %v1417 = vld [vmem:[%s4 + $0x50] sm:$0xff]
    %v1418 = vld [vmem:[%s4 + $0x58] sm:$0xff]
    %v1419 = vld [vmem:[%s4 + $0x60] sm:$0xff]
    %v1420 = vld [vmem:[%s4 + $0x68] sm:$0xff]
    %v1421 = vld [vmem:[%s4 + $0x70] sm:$0xff]
    %v1422 = vld [vmem:[%s4 + $0x78] sm:$0xff]
    %v1423 = vld [vmem:[%s4 + $0x80] sm:$0xff]
    %v1424 = vld [vmem:[%s4 + $0x88] sm:$0xff]
    %v1425 = vld [vmem:[%s4 + $0x90] sm:$0xff]
    %v1426 = vld [vmem:[%s4 + $0x98] sm:$0xff]
    %v1427 = vld [vmem:[%s4 + $0xa0] sm:$0xff]
    %v1428 = vld [vmem:[%s4 + $0xa8] sm:$0xff]
    %v1429 = vld [vmem:[%s4 + $0xb0] sm:$0xff]
    %v1430 = vld [vmem:[%s4 + $0xb8] sm:$0xff]
    %v1431 = vld [vmem:[%s4 + $0xc0] sm:$0xff]
    %v1432 = vld [vmem:[%s4 + $0xc8] sm:$0xff]
    %v1433 = vld [vmem:[%s4 + $0xd0] sm:$0xff]
    %v1434 = vld [vmem:[%s4 + $0xd8] sm:$0xff]
    %v1435 = vld [vmem:[%s4 + $0xe0] sm:$0xff]
    %v1436 = vld [vmem:[%s4 + $0xe8] sm:$0xff]
    %v1437 = vld [vmem:[%s4 + $0xf0] sm:$0xff]
    %v1438 = vld [vmem:[%s4 + $0xf8] sm:$0xff]
    %v1471 = vunpack.c.l.b16 %v1407
    %v1472 = vunpack.c.h.b16 %v1407
    %v1473 = vunpack.c.l.b16 %v1408
    %v1474 = vunpack.c.h.b16 %v1408
    %v1475 = vunpack.c.l.b16 %v1409
    %v1476 = vunpack.c.h.b16 %v1409
    %v1477 = vunpack.c.l.b16 %v1410
    %v1478 = vunpack.c.h.b16 %v1410
    %v1479 = vunpack.c.l.b16 %v1411
    %v1480 = vunpack.c.h.b16 %v1411
    %v1481 = vunpack.c.l.b16 %v1412
    %v1482 = vunpack.c.h.b16 %v1412
    %v1483 = vunpack.c.l.b16 %v1413
    %v1484 = vunpack.c.h.b16 %v1413
    %v1485 = vunpack.c.l.b16 %v1414
    %v1486 = vunpack.c.h.b16 %v1414
    %v1487 = vunpack.c.l.b16 %v1415
    %v1488 = vunpack.c.h.b16 %v1415
    %v1489 = vunpack.c.l.b16 %v1416
    %v1490 = vunpack.c.h.b16 %v1416
    %v1491 = vunpack.c.l.b16 %v1417
    %v1492 = vunpack.c.h.b16 %v1417
    %v1493 = vunpack.c.l.b16 %v1418
    %v1494 = vunpack.c.h.b16 %v1418
    %v1495 = vunpack.c.l.b16 %v1419
    %v1496 = vunpack.c.h.b16 %v1419
    %v1497 = vunpack.c.l.b16 %v1420
    %v1498 = vunpack.c.h.b16 %v1420
    %v1499 = vunpack.c.l.b16 %v1421
    %v1500 = vunpack.c.h.b16 %v1421
    %v1501 = vunpack.c.l.b16 %v1422
    %v1502 = vunpack.c.h.b16 %v1422
    %v1503 = vunpack.c.l.b16 %v1423
    %v1504 = vunpack.c.h.b16 %v1423
    %v1505 = vunpack.c.l.b16 %v1424
    %v1506 = vunpack.c.h.b16 %v1424
    %v1507 = vunpack.c.l.b16 %v1425
    %v1508 = vunpack.c.h.b16 %v1425
    %v1509 = vunpack.c.l.b16 %v1426
    %v1510 = vunpack.c.h.b16 %v1426
    %v1511 = vunpack.c.l.b16 %v1427
    %v1512 = vunpack.c.h.b16 %v1427
    %v1513 = vunpack.c.l.b16 %v1428
    %v1514 = vunpack.c.h.b16 %v1428
    %v1515 = vunpack.c.l.b16 %v1429
    %v1516 = vunpack.c.h.b16 %v1429
    %v1517 = vunpack.c.l.b16 %v1430
    %v1518 = vunpack.c.h.b16 %v1430
    %v1519 = vunpack.c.l.b16 %v1431
    %v1520 = vunpack.c.h.b16 %v1431
    %v1521 = vunpack.c.l.b16 %v1432
    %v1522 = vunpack.c.h.b16 %v1432
    %v1523 = vunpack.c.l.b16 %v1433
    %v1524 = vunpack.c.h.b16 %v1433
    %v1525 = vunpack.c.l.b16 %v1434
    %v1526 = vunpack.c.h.b16 %v1434
    %v1527 = vunpack.c.l.b16 %v1435
    %v1528 = vunpack.c.h.b16 %v1435
    %v1529 = vunpack.c.l.b16 %v1436
    %v1530 = vunpack.c.h.b16 %v1436
    %v1531 = vunpack.c.l.b16 %v1437
    %v1532 = vunpack.c.h.b16 %v1437
    %v1533 = vunpack.c.l.b16 %v1438
    %v1534 = vunpack.c.h.b16 %v1438
    %v1535 = vpack.c.b16 %v1475, %v1471
    %v1536 = vpack.c.b16 %v1476, %v1472
    %v1537 = vpack.c.b16 %v1477, %v1473
    %v1538 = vpack.c.b16 %v1478, %v1474
    %v1539 = vpack.c.b16 %v1483, %v1479
    %v1540 = vpack.c.b16 %v1484, %v1480
    %v1541 = vpack.c.b16 %v1485, %v1481
    %v1542 = vpack.c.b16 %v1486, %v1482
    %v1543 = vpack.c.b16 %v1491, %v1487
    %v1544 = vpack.c.b16 %v1492, %v1488
    %v1545 = vpack.c.b16 %v1493, %v1489
    %v1546 = vpack.c.b16 %v1494, %v1490
    %v1547 = vpack.c.b16 %v1499, %v1495
    %v1548 = vpack.c.b16 %v1500, %v1496
    %v1549 = vpack.c.b16 %v1501, %v1497
    %v1550 = vpack.c.b16 %v1502, %v1498
    %v1551 = vpack.c.b16 %v1507, %v1503
    %v1552 = vpack.c.b16 %v1508, %v1504
    %v1553 = vpack.c.b16 %v1509, %v1505
    %v1554 = vpack.c.b16 %v1510, %v1506
    %v1555 = vpack.c.b16 %v1515, %v1511
    %v1556 = vpack.c.b16 %v1516, %v1512
    %v1557 = vpack.c.b16 %v1517, %v1513
    %v1558 = vpack.c.b16 %v1518, %v1514
    %v1559 = vpack.c.b16 %v1523, %v1519
    %v1560 = vpack.c.b16 %v1524, %v1520
    %v1561 = vpack.c.b16 %v1525, %v1521
    %v1562 = vpack.c.b16 %v1526, %v1522
    %v1563 = vpack.c.b16 %v1531, %v1527
    %v1564 = vpack.c.b16 %v1532, %v1528
    %v1565 = vpack.c.b16 %v1533, %v1529
    %v1566 = vpack.c.b16 %v1534, %v1530
    %1599 = vmatpush.bf16.msra.mxu0 %v1563
    %1600 = vmatpush.bf16.msra.mxu0 %v1559
    %1601 = vmatpush.bf16.msra.mxu0 %v1555
    %1602 = vmatpush.bf16.msra.mxu0 %v1551
    %1603 = vmatpush.bf16.msra.mxu0 %v1547
    %1604 = vmatpush.bf16.msra.mxu0 %v1543
    %1605 = vmatpush.bf16.msra.mxu0 %v1539
    %1606 = vmatpush.bf16.msra.mxu0 %v1535
    %1607 = vmatmul.bf16.gmra.mxu0 %v1406
    %v1608 = vpop.f32.mrf.mxu0
    %v1609 = vadd.f32 0.0, %v1608
    %v1610 = vpop.f32.mrf.mxu0
    %1611 = vdwg.mxu0
    %1612 = vmatpush.bf16.msra.mxu0 %v1564
    %1613 = vmatpush.bf16.msra.mxu0 %v1560
    %1614 = vmatpush.bf16.msra.mxu0 %v1556
    %1615 = vmatpush.bf16.msra.mxu0 %v1552
    %1616 = vmatpush.bf16.msra.mxu0 %v1548
    %1617 = vmatpush.bf16.msra.mxu0 %v1544
    %1618 = vmatpush.bf16.msra.mxu0 %v1540
    %1619 = vmatpush.bf16.msra.mxu0 %v1536
    %1620 = vmatmul.bf16.gmra.mxu0 %v1406
    %v1621 = vpop.f32.mrf.mxu0
    %v1622 = vadd.f32 0.0, %v1621
    %v1623 = vpop.f32.mrf.mxu0
    %1624 = vdwg.mxu0
    %1625 = vmatpush.bf16.msra.mxu0 %v1565
    %1626 = vmatpush.bf16.msra.mxu0 %v1561
    %1627 = vmatpush.bf16.msra.mxu0 %v1557
    %1628 = vmatpush.bf16.msra.mxu0 %v1553
    %1629 = vmatpush.bf16.msra.mxu0 %v1549
    %1630 = vmatpush.bf16.msra.mxu0 %v1545
    %1631 = vmatpush.bf16.msra.mxu0 %v1541
    %1632 = vmatpush.bf16.msra.mxu0 %v1537
    %1633 = vmatmul.bf16.gmra.mxu0 %v1406
    %v1634 = vpop.f32.mrf.mxu0
    %v1635 = vadd.f32 0.0, %v1634
    %v1636 = vpop.f32.mrf.mxu0
    %1637 = vdwg.mxu0
    %1638 = vmatpush.bf16.msra.mxu0 %v1566
    %1639 = vmatpush.bf16.msra.mxu0 %v1562
    %1640 = vmatpush.bf16.msra.mxu0 %v1558
    %1641 = vmatpush.bf16.msra.mxu0 %v1554
    %1642 = vmatpush.bf16.msra.mxu0 %v1550
    %1643 = vmatpush.bf16.msra.mxu0 %v1546
    %1644 = vmatpush.bf16.msra.mxu0 %v1542
    %1645 = vmatpush.bf16.msra.mxu0 %v1538
    %1646 = vmatmul.bf16.gmra.mxu0 %v1406
    %v1647 = vpop.f32.mrf.mxu0
    %v1648 = vadd.f32 0.0, %v1647
    %v1649 = vpop.f32.mrf.mxu0
    %1650 = vdwg.mxu0
    %v1651 = vadd.f32 %v1401, %v1609
    %v1652 = vadd.f32 %v1402, %v1622
    %v1653 = vadd.f32 %v1403, %v1635
    %v1654 = vadd.f32 %v1404, %v1648
    %v1655 = vxor.u32 %v1651, 2147483648
    %v1656 = vmul.f32 %v1655, 1.442695
    %v1657 = vpow.pop %v1656
    %v1658 = vadd.f32 %v1657, 1.0
    %v1659 = vrcp.pop %v1658
    %v1660 = vmul.f32 %v1658, %v1659
    %v1661 = vsub.f32 1.0, %v1660
    %v1662 = vmul.f32 %v1659, %v1661
    %v1663 = vadd.f32 %v1659, %v1662
    %vm1664 = vweird.f32 %v1658
    %vm1665 = vweird.f32 %v1659
    %vm1666 = vmor %vm1664, %vm1665
    %v1667 = vsel %vm1666, %v1659, %v1663
    %v1668 = vand.u32 2147483647, %v1658
    %vm1669 = vcmp.eq.f32.partialorder %v1668, 8.507059e+37
    %v1670 = vand.u32 %v1658, 2147483648
    %v1671 = vor.u32 1.1754944e-38, %v1670
    %v1672 = vsel %vm1669, %v1671, %v1667
    %v1673 = vmul.f32 1.0, %v1672
    %v1674 = vxor.u32 %v1652, 2147483648
    %v1675 = vmul.f32 %v1674, 1.442695
    %v1676 = vpow.pop %v1675
    %v1677 = vadd.f32 %v1676, 1.0
    %v1678 = vrcp.pop %v1677
    %v1679 = vmul.f32 %v1677, %v1678
    %v1680 = vsub.f32 1.0, %v1679
    %v1681 = vmul.f32 %v1678, %v1680
    %v1682 = vadd.f32 %v1678, %v1681
    %vm1683 = vweird.f32 %v1677
    %vm1684 = vweird.f32 %v1678
    %vm1685 = vmor %vm1683, %vm1684
    %v1686 = vsel %vm1685, %v1678, %v1682
    %v1687 = vand.u32 2147483647, %v1677
    %vm1688 = vcmp.eq.f32.partialorder %v1687, 8.507059e+37
    %v1689 = vand.u32 %v1677, 2147483648
    %v1690 = vor.u32 1.1754944e-38, %v1689
    %v1691 = vsel %vm1688, %v1690, %v1686
    %v1692 = vmul.f32 1.0, %v1691
    %v1693 = vtanh.pop %v1653
    %v1694 = vxor.u32 %v1654, 2147483648
    %v1695 = vmul.f32 %v1694, 1.442695
    %v1696 = vpow.pop %v1695
    %v1697 = vadd.f32 %v1696, 1.0
    %v1698 = vrcp.pop %v1697
    %v1699 = vmul.f32 %v1697, %v1698
    %v1700 = vsub.f32 1.0, %v1699
    %v1701 = vmul.f32 %v1698, %v1700
    %v1702 = vadd.f32 %v1698, %v1701
    %vm1703 = vweird.f32 %v1697
    %vm1704 = vweird.f32 %v1698
    %vm1705 = vmor %vm1703, %vm1704
    %v1706 = vsel %vm1705, %v1698, %v1702
    %v1707 = vand.u32 2147483647, %v1697
    %vm1708 = vcmp.eq.f32.partialorder %v1707, 8.507059e+37
    %v1709 = vand.u32 %v1697, 2147483648
    %v1710 = vor.u32 1.1754944e-38, %v1709
    %v1711 = vsel %vm1708, %v1710, %v1706
    %v1712 = vmul.f32 1.0, %v1711
    %v1713 = vld [vmem:[#allocation5] sm:$0xff]
    %v1714 = vmul.f32 %v1692, %v1713
    %v1715 = vmul.f32 %v1673, %v1693
    %v1716 = vadd.f32 %v1714, %v1715
    %v1717 = vtanh.pop %v1716
    %v1718 = vmul.f32 %v1712, %v1717
    %1719 = vst [vmem:[#allocation4] sm:$0xff] %v1718
    %1720 = vst [vmem:[#allocation5] sm:$0xff] %v1716
    %s1721 = scalar_lea.vmem [#allocation3], 24
    %1722 = vst [vmem:[%s1721] sm:$0xff] %v1718
    %s1723 = smul.u32 4, 4
    %s1724 = smul.addr %s1723, 8
    %s1725 = scalar_lea.vmem [#allocation2], %s1724
    %v1726 = vld [vmem:[%s1725] sm:$0xff]
    %v1727 = vld [vmem:[%s1725 + $0x8] sm:$0xff]
    %v1728 = vld [vmem:[%s1725 + $0x10] sm:$0xff]
    %v1729 = vld [vmem:[%s1725 + $0x18] sm:$0xff]
    %v1730 = vld [vmem:[#allocation4] sm:$0xff]
    %v1731 = vpack.c.bf16 %v1730, %v1730
    %v1732 = vld [vmem:[%s4] sm:$0xff]
    %v1733 = vld [vmem:[%s4 + $0x8] sm:$0xff]
    %v1734 = vld [vmem:[%s4 + $0x10] sm:$0xff]
    %v1735 = vld [vmem:[%s4 + $0x18] sm:$0xff]
    %v1736 = vld [vmem:[%s4 + $0x20] sm:$0xff]
    %v1737 = vld [vmem:[%s4 + $0x28] sm:$0xff]
    %v1738 = vld [vmem:[%s4 + $0x30] sm:$0xff]
    %v1739 = vld [vmem:[%s4 + $0x38] sm:$0xff]
    %v1740 = vld [vmem:[%s4 + $0x40] sm:$0xff]
    %v1741 = vld [vmem:[%s4 + $0x48] sm:$0xff]
    %v1742 = vld [vmem:[%s4 + $0x50] sm:$0xff]
    %v1743 = vld [vmem:[%s4 + $0x58] sm:$0xff]
    %v1744 = vld [vmem:[%s4 + $0x60] sm:$0xff]
    %v1745 = vld [vmem:[%s4 + $0x68] sm:$0xff]
    %v1746 = vld [vmem:[%s4 + $0x70] sm:$0xff]
    %v1747 = vld [vmem:[%s4 + $0x78] sm:$0xff]
    %v1748 = vld [vmem:[%s4 + $0x80] sm:$0xff]
    %v1749 = vld [vmem:[%s4 + $0x88] sm:$0xff]
    %v1750 = vld [vmem:[%s4 + $0x90] sm:$0xff]
    %v1751 = vld [vmem:[%s4 + $0x98] sm:$0xff]
    %v1752 = vld [vmem:[%s4 + $0xa0] sm:$0xff]
    %v1753 = vld [vmem:[%s4 + $0xa8] sm:$0xff]
    %v1754 = vld [vmem:[%s4 + $0xb0] sm:$0xff]
    %v1755 = vld [vmem:[%s4 + $0xb8] sm:$0xff]
    %v1756 = vld [vmem:[%s4 + $0xc0] sm:$0xff]
    %v1757 = vld [vmem:[%s4 + $0xc8] sm:$0xff]
    %v1758 = vld [vmem:[%s4 + $0xd0] sm:$0xff]
    %v1759 = vld [vmem:[%s4 + $0xd8] sm:$0xff]
    %v1760 = vld [vmem:[%s4 + $0xe0] sm:$0xff]
    %v1761 = vld [vmem:[%s4 + $0xe8] sm:$0xff]
    %v1762 = vld [vmem:[%s4 + $0xf0] sm:$0xff]
    %v1763 = vld [vmem:[%s4 + $0xf8] sm:$0xff]
    %v1796 = vunpack.c.l.b16 %v1732
    %v1797 = vunpack.c.h.b16 %v1732
    %v1798 = vunpack.c.l.b16 %v1733
    %v1799 = vunpack.c.h.b16 %v1733
    %v1800 = vunpack.c.l.b16 %v1734
    %v1801 = vunpack.c.h.b16 %v1734
    %v1802 = vunpack.c.l.b16 %v1735
    %v1803 = vunpack.c.h.b16 %v1735
    %v1804 = vunpack.c.l.b16 %v1736
    %v1805 = vunpack.c.h.b16 %v1736
    %v1806 = vunpack.c.l.b16 %v1737
    %v1807 = vunpack.c.h.b16 %v1737
    %v1808 = vunpack.c.l.b16 %v1738
    %v1809 = vunpack.c.h.b16 %v1738
    %v1810 = vunpack.c.l.b16 %v1739
    %v1811 = vunpack.c.h.b16 %v1739
    %v1812 = vunpack.c.l.b16 %v1740
    %v1813 = vunpack.c.h.b16 %v1740
    %v1814 = vunpack.c.l.b16 %v1741
    %v1815 = vunpack.c.h.b16 %v1741
    %v1816 = vunpack.c.l.b16 %v1742
    %v1817 = vunpack.c.h.b16 %v1742
    %v1818 = vunpack.c.l.b16 %v1743
    %v1819 = vunpack.c.h.b16 %v1743
    %v1820 = vunpack.c.l.b16 %v1744
    %v1821 = vunpack.c.h.b16 %v1744
    %v1822 = vunpack.c.l.b16 %v1745
    %v1823 = vunpack.c.h.b16 %v1745
    %v1824 = vunpack.c.l.b16 %v1746
    %v1825 = vunpack.c.h.b16 %v1746
    %v1826 = vunpack.c.l.b16 %v1747
    %v1827 = vunpack.c.h.b16 %v1747
    %v1828 = vunpack.c.l.b16 %v1748
    %v1829 = vunpack.c.h.b16 %v1748
    %v1830 = vunpack.c.l.b16 %v1749
    %v1831 = vunpack.c.h.b16 %v1749
    %v1832 = vunpack.c.l.b16 %v1750
    %v1833 = vunpack.c.h.b16 %v1750
    %v1834 = vunpack.c.l.b16 %v1751
    %v1835 = vunpack.c.h.b16 %v1751
    %v1836 = vunpack.c.l.b16 %v1752
    %v1837 = vunpack.c.h.b16 %v1752
    %v1838 = vunpack.c.l.b16 %v1753
    %v1839 = vunpack.c.h.b16 %v1753
    %v1840 = vunpack.c.l.b16 %v1754
    %v1841 = vunpack.c.h.b16 %v1754
    %v1842 = vunpack.c.l.b16 %v1755
    %v1843 = vunpack.c.h.b16 %v1755
    %v1844 = vunpack.c.l.b16 %v1756
    %v1845 = vunpack.c.h.b16 %v1756
    %v1846 = vunpack.c.l.b16 %v1757
    %v1847 = vunpack.c.h.b16 %v1757
    %v1848 = vunpack.c.l.b16 %v1758
    %v1849 = vunpack.c.h.b16 %v1758
    %v1850 = vunpack.c.l.b16 %v1759
    %v1851 = vunpack.c.h.b16 %v1759
    %v1852 = vunpack.c.l.b16 %v1760
    %v1853 = vunpack.c.h.b16 %v1760
    %v1854 = vunpack.c.l.b16 %v1761
    %v1855 = vunpack.c.h.b16 %v1761
    %v1856 = vunpack.c.l.b16 %v1762
    %v1857 = vunpack.c.h.b16 %v1762
    %v1858 = vunpack.c.l.b16 %v1763
    %v1859 = vunpack.c.h.b16 %v1763
    %v1860 = vpack.c.b16 %v1800, %v1796
    %v1861 = vpack.c.b16 %v1801, %v1797
    %v1862 = vpack.c.b16 %v1802, %v1798
    %v1863 = vpack.c.b16 %v1803, %v1799
    %v1864 = vpack.c.b16 %v1808, %v1804
    %v1865 = vpack.c.b16 %v1809, %v1805
    %v1866 = vpack.c.b16 %v1810, %v1806
    %v1867 = vpack.c.b16 %v1811, %v1807
    %v1868 = vpack.c.b16 %v1816, %v1812
    %v1869 = vpack.c.b16 %v1817, %v1813
    %v1870 = vpack.c.b16 %v1818, %v1814
    %v1871 = vpack.c.b16 %v1819, %v1815
    %v1872 = vpack.c.b16 %v1824, %v1820
    %v1873 = vpack.c.b16 %v1825, %v1821
    %v1874 = vpack.c.b16 %v1826, %v1822
    %v1875 = vpack.c.b16 %v1827, %v1823
    %v1876 = vpack.c.b16 %v1832, %v1828
    %v1877 = vpack.c.b16 %v1833, %v1829
    %v1878 = vpack.c.b16 %v1834, %v1830
    %v1879 = vpack.c.b16 %v1835, %v1831
    %v1880 = vpack.c.b16 %v1840, %v1836
    %v1881 = vpack.c.b16 %v1841, %v1837
    %v1882 = vpack.c.b16 %v1842, %v1838
    %v1883 = vpack.c.b16 %v1843, %v1839
    %v1884 = vpack.c.b16 %v1848, %v1844
    %v1885 = vpack.c.b16 %v1849, %v1845
    %v1886 = vpack.c.b16 %v1850, %v1846
    %v1887 = vpack.c.b16 %v1851, %v1847
    %v1888 = vpack.c.b16 %v1856, %v1852
    %v1889 = vpack.c.b16 %v1857, %v1853
    %v1890 = vpack.c.b16 %v1858, %v1854
    %v1891 = vpack.c.b16 %v1859, %v1855
    %1924 = vmatpush.bf16.msra.mxu0 %v1888
    %1925 = vmatpush.bf16.msra.mxu0 %v1884
    %1926 = vmatpush.bf16.msra.mxu0 %v1880
    %1927 = vmatpush.bf16.msra.mxu0 %v1876
    %1928 = vmatpush.bf16.msra.mxu0 %v1872
    %1929 = vmatpush.bf16.msra.mxu0 %v1868
    %1930 = vmatpush.bf16.msra.mxu0 %v1864
    %1931 = vmatpush.bf16.msra.mxu0 %v1860
    %1932 = vmatmul.bf16.gmra.mxu0 %v1731
    %v1933 = vpop.f32.mrf.mxu0
    %v1934 = vadd.f32 0.0, %v1933
    %v1935 = vpop.f32.mrf.mxu0
    %1936 = vdwg.mxu0
    %1937 = vmatpush.bf16.msra.mxu0 %v1889
    %1938 = vmatpush.bf16.msra.mxu0 %v1885
    %1939 = vmatpush.bf16.msra.mxu0 %v1881
    %1940 = vmatpush.bf16.msra.mxu0 %v1877
    %1941 = vmatpush.bf16.msra.mxu0 %v1873
    %1942 = vmatpush.bf16.msra.mxu0 %v1869
    %1943 = vmatpush.bf16.msra.mxu0 %v1865
    %1944 = vmatpush.bf16.msra.mxu0 %v1861
    %1945 = vmatmul.bf16.gmra.mxu0 %v1731
    %v1946 = vpop.f32.mrf.mxu0
    %v1947 = vadd.f32 0.0, %v1946
    %v1948 = vpop.f32.mrf.mxu0
    %1949 = vdwg.mxu0
    %1950 = vmatpush.bf16.msra.mxu0 %v1890
    %1951 = vmatpush.bf16.msra.mxu0 %v1886
    %1952 = vmatpush.bf16.msra.mxu0 %v1882
    %1953 = vmatpush.bf16.msra.mxu0 %v1878
    %1954 = vmatpush.bf16.msra.mxu0 %v1874
    %1955 = vmatpush.bf16.msra.mxu0 %v1870
    %1956 = vmatpush.bf16.msra.mxu0 %v1866
    %1957 = vmatpush.bf16.msra.mxu0 %v1862
    %1958 = vmatmul.bf16.gmra.mxu0 %v1731
    %v1959 = vpop.f32.mrf.mxu0
    %v1960 = vadd.f32 0.0, %v1959
    %v1961 = vpop.f32.mrf.mxu0
    %1962 = vdwg.mxu0
    %1963 = vmatpush.bf16.msra.mxu0 %v1891
    %1964 = vmatpush.bf16.msra.mxu0 %v1887
    %1965 = vmatpush.bf16.msra.mxu0 %v1883
    %1966 = vmatpush.bf16.msra.mxu0 %v1879
    %1967 = vmatpush.bf16.msra.mxu0 %v1875
    %1968 = vmatpush.bf16.msra.mxu0 %v1871
    %1969 = vmatpush.bf16.msra.mxu0 %v1867
    %1970 = vmatpush.bf16.msra.mxu0 %v1863
    %1971 = vmatmul.bf16.gmra.mxu0 %v1731
    %v1972 = vpop.f32.mrf.mxu0
    %v1973 = vadd.f32 0.0, %v1972
    %v1974 = vpop.f32.mrf.mxu0
    %1975 = vdwg.mxu0
    %v1976 = vadd.f32 %v1726, %v1934
    %v1977 = vadd.f32 %v1727, %v1947
    %v1978 = vadd.f32 %v1728, %v1960
    %v1979 = vadd.f32 %v1729, %v1973
    %v1980 = vxor.u32 %v1976, 2147483648
    %v1981 = vmul.f32 %v1980, 1.442695
    %v1982 = vpow.pop %v1981
    %v1983 = vadd.f32 %v1982, 1.0
    %v1984 = vrcp.pop %v1983
    %v1985 = vmul.f32 %v1983, %v1984
    %v1986 = vsub.f32 1.0, %v1985
    %v1987 = vmul.f32 %v1984, %v1986
    %v1988 = vadd.f32 %v1984, %v1987
    %vm1989 = vweird.f32 %v1983
    %vm1990 = vweird.f32 %v1984
    %vm1991 = vmor %vm1989, %vm1990
    %v1992 = vsel %vm1991, %v1984, %v1988
    %v1993 = vand.u32 2147483647, %v1983
    %vm1994 = vcmp.eq.f32.partialorder %v1993, 8.507059e+37
    %v1995 = vand.u32 %v1983, 2147483648
    %v1996 = vor.u32 1.1754944e-38, %v1995
    %v1997 = vsel %vm1994, %v1996, %v1992
    %v1998 = vmul.f32 1.0, %v1997
    %v1999 = vxor.u32 %v1977, 2147483648
    %v2000 = vmul.f32 %v1999, 1.442695
    %v2001 = vpow.pop %v2000
    %v2002 = vadd.f32 %v2001, 1.0
    %v2003 = vrcp.pop %v2002
    %v2004 = vmul.f32 %v2002, %v2003
    %v2005 = vsub.f32 1.0, %v2004
    %v2006 = vmul.f32 %v2003, %v2005
    %v2007 = vadd.f32 %v2003, %v2006
    %vm2008 = vweird.f32 %v2002
    %vm2009 = vweird.f32 %v2003
    %vm2010 = vmor %vm2008, %vm2009
    %v2011 = vsel %vm2010, %v2003, %v2007
    %v2012 = vand.u32 2147483647, %v2002
    %vm2013 = vcmp.eq.f32.partialorder %v2012, 8.507059e+37
    %v2014 = vand.u32 %v2002, 2147483648
    %v2015 = vor.u32 1.1754944e-38, %v2014
    %v2016 = vsel %vm2013, %v2015, %v2011
    %v2017 = vmul.f32 1.0, %v2016
    %v2018 = vtanh.pop %v1978
    %v2019 = vxor.u32 %v1979, 2147483648
    %v2020 = vmul.f32 %v2019, 1.442695
    %v2021 = vpow.pop %v2020
    %v2022 = vadd.f32 %v2021, 1.0
    %v2023 = vrcp.pop %v2022
    %v2024 = vmul.f32 %v2022, %v2023
    %v2025 = vsub.f32 1.0, %v2024
    %v2026 = vmul.f32 %v2023, %v2025
    %v2027 = vadd.f32 %v2023, %v2026
    %vm2028 = vweird.f32 %v2022
    %vm2029 = vweird.f32 %v2023
    %vm2030 = vmor %vm2028, %vm2029
    %v2031 = vsel %vm2030, %v2023, %v2027
    %v2032 = vand.u32 2147483647, %v2022
    %vm2033 = vcmp.eq.f32.partialorder %v2032, 8.507059e+37
    %v2034 = vand.u32 %v2022, 2147483648
    %v2035 = vor.u32 1.1754944e-38, %v2034
    %v2036 = vsel %vm2033, %v2035, %v2031
    %v2037 = vmul.f32 1.0, %v2036
    %v2038 = vld [vmem:[#allocation5] sm:$0xff]
    %v2039 = vmul.f32 %v2017, %v2038
    %v2040 = vmul.f32 %v1998, %v2018
    %v2041 = vadd.f32 %v2039, %v2040
    %v2042 = vtanh.pop %v2041
    %v2043 = vmul.f32 %v2037, %v2042
    %2044 = vst [vmem:[#allocation4] sm:$0xff] %v2043
    %2045 = vst [vmem:[#allocation5] sm:$0xff] %v2041
    %s2046 = scalar_lea.vmem [#allocation3], 32
    %2047 = vst [vmem:[%s2046] sm:$0xff] %v2043
    %s2048 = smul.u32 5, 4
    %s2049 = smul.addr %s2048, 8
    %s2050 = scalar_lea.vmem [#allocation2], %s2049
    %v2051 = vld [vmem:[%s2050] sm:$0xff]
    %v2052 = vld [vmem:[%s2050 + $0x8] sm:$0xff]
    %v2053 = vld [vmem:[%s2050 + $0x10] sm:$0xff]
    %v2054 = vld [vmem:[%s2050 + $0x18] sm:$0xff]
    %v2055 = vld [vmem:[#allocation4] sm:$0xff]
    %v2056 = vpack.c.bf16 %v2055, %v2055
    %v2057 = vld [vmem:[%s4] sm:$0xff]
    %v2058 = vld [vmem:[%s4 + $0x8] sm:$0xff]
    %v2059 = vld [vmem:[%s4 + $0x10] sm:$0xff]
    %v2060 = vld [vmem:[%s4 + $0x18] sm:$0xff]
    %v2061 = vld [vmem:[%s4 + $0x20] sm:$0xff]
    %v2062 = vld [vmem:[%s4 + $0x28] sm:$0xff]
    %v2063 = vld [vmem:[%s4 + $0x30] sm:$0xff]
    %v2064 = vld [vmem:[%s4 + $0x38] sm:$0xff]
    %v2065 = vld [vmem:[%s4 + $0x40] sm:$0xff]
    %v2066 = vld [vmem:[%s4 + $0x48] sm:$0xff]
    %v2067 = vld [vmem:[%s4 + $0x50] sm:$0xff]
    %v2068 = vld [vmem:[%s4 + $0x58] sm:$0xff]
    %v2069 = vld [vmem:[%s4 + $0x60] sm:$0xff]
    %v2070 = vld [vmem:[%s4 + $0x68] sm:$0xff]
    %v2071 = vld [vmem:[%s4 + $0x70] sm:$0xff]
    %v2072 = vld [vmem:[%s4 + $0x78] sm:$0xff]
    %v2073 = vld [vmem:[%s4 + $0x80] sm:$0xff]
    %v2074 = vld [vmem:[%s4 + $0x88] sm:$0xff]
    %v2075 = vld [vmem:[%s4 + $0x90] sm:$0xff]
    %v2076 = vld [vmem:[%s4 + $0x98] sm:$0xff]
    %v2077 = vld [vmem:[%s4 + $0xa0] sm:$0xff]
    %v2078 = vld [vmem:[%s4 + $0xa8] sm:$0xff]
    %v2079 = vld [vmem:[%s4 + $0xb0] sm:$0xff]
    %v2080 = vld [vmem:[%s4 + $0xb8] sm:$0xff]
    %v2081 = vld [vmem:[%s4 + $0xc0] sm:$0xff]
    %v2082 = vld [vmem:[%s4 + $0xc8] sm:$0xff]
    %v2083 = vld [vmem:[%s4 + $0xd0] sm:$0xff]
    %v2084 = vld [vmem:[%s4 + $0xd8] sm:$0xff]
    %v2085 = vld [vmem:[%s4 + $0xe0] sm:$0xff]
    %v2086 = vld [vmem:[%s4 + $0xe8] sm:$0xff]
    %v2087 = vld [vmem:[%s4 + $0xf0] sm:$0xff]
    %v2088 = vld [vmem:[%s4 + $0xf8] sm:$0xff]
    %v2121 = vunpack.c.l.b16 %v2057
    %v2122 = vunpack.c.h.b16 %v2057
    %v2123 = vunpack.c.l.b16 %v2058
    %v2124 = vunpack.c.h.b16 %v2058
    %v2125 = vunpack.c.l.b16 %v2059
    %v2126 = vunpack.c.h.b16 %v2059
    %v2127 = vunpack.c.l.b16 %v2060
    %v2128 = vunpack.c.h.b16 %v2060
    %v2129 = vunpack.c.l.b16 %v2061
    %v2130 = vunpack.c.h.b16 %v2061
    %v2131 = vunpack.c.l.b16 %v2062
    %v2132 = vunpack.c.h.b16 %v2062
    %v2133 = vunpack.c.l.b16 %v2063
    %v2134 = vunpack.c.h.b16 %v2063
    %v2135 = vunpack.c.l.b16 %v2064
    %v2136 = vunpack.c.h.b16 %v2064
    %v2137 = vunpack.c.l.b16 %v2065
    %v2138 = vunpack.c.h.b16 %v2065
    %v2139 = vunpack.c.l.b16 %v2066
    %v2140 = vunpack.c.h.b16 %v2066
    %v2141 = vunpack.c.l.b16 %v2067
    %v2142 = vunpack.c.h.b16 %v2067
    %v2143 = vunpack.c.l.b16 %v2068
    %v2144 = vunpack.c.h.b16 %v2068
    %v2145 = vunpack.c.l.b16 %v2069
    %v2146 = vunpack.c.h.b16 %v2069
    %v2147 = vunpack.c.l.b16 %v2070
    %v2148 = vunpack.c.h.b16 %v2070
    %v2149 = vunpack.c.l.b16 %v2071
    %v2150 = vunpack.c.h.b16 %v2071
    %v2151 = vunpack.c.l.b16 %v2072
    %v2152 = vunpack.c.h.b16 %v2072
    %v2153 = vunpack.c.l.b16 %v2073
    %v2154 = vunpack.c.h.b16 %v2073
    %v2155 = vunpack.c.l.b16 %v2074
    %v2156 = vunpack.c.h.b16 %v2074
    %v2157 = vunpack.c.l.b16 %v2075
    %v2158 = vunpack.c.h.b16 %v2075
    %v2159 = vunpack.c.l.b16 %v2076
    %v2160 = vunpack.c.h.b16 %v2076
    %v2161 = vunpack.c.l.b16 %v2077
    %v2162 = vunpack.c.h.b16 %v2077
    %v2163 = vunpack.c.l.b16 %v2078
    %v2164 = vunpack.c.h.b16 %v2078
    %v2165 = vunpack.c.l.b16 %v2079
    %v2166 = vunpack.c.h.b16 %v2079
    %v2167 = vunpack.c.l.b16 %v2080
    %v2168 = vunpack.c.h.b16 %v2080
    %v2169 = vunpack.c.l.b16 %v2081
    %v2170 = vunpack.c.h.b16 %v2081
    %v2171 = vunpack.c.l.b16 %v2082
    %v2172 = vunpack.c.h.b16 %v2082
    %v2173 = vunpack.c.l.b16 %v2083
    %v2174 = vunpack.c.h.b16 %v2083
    %v2175 = vunpack.c.l.b16 %v2084
    %v2176 = vunpack.c.h.b16 %v2084
    %v2177 = vunpack.c.l.b16 %v2085
    %v2178 = vunpack.c.h.b16 %v2085
    %v2179 = vunpack.c.l.b16 %v2086
    %v2180 = vunpack.c.h.b16 %v2086
    %v2181 = vunpack.c.l.b16 %v2087
    %v2182 = vunpack.c.h.b16 %v2087
    %v2183 = vunpack.c.l.b16 %v2088
    %v2184 = vunpack.c.h.b16 %v2088
    %v2185 = vpack.c.b16 %v2125, %v2121
    %v2186 = vpack.c.b16 %v2126, %v2122
    %v2187 = vpack.c.b16 %v2127, %v2123
    %v2188 = vpack.c.b16 %v2128, %v2124
    %v2189 = vpack.c.b16 %v2133, %v2129
    %v2190 = vpack.c.b16 %v2134, %v2130
    %v2191 = vpack.c.b16 %v2135, %v2131
    %v2192 = vpack.c.b16 %v2136, %v2132
    %v2193 = vpack.c.b16 %v2141, %v2137
    %v2194 = vpack.c.b16 %v2142, %v2138
    %v2195 = vpack.c.b16 %v2143, %v2139
    %v2196 = vpack.c.b16 %v2144, %v2140
    %v2197 = vpack.c.b16 %v2149, %v2145
    %v2198 = vpack.c.b16 %v2150, %v2146
    %v2199 = vpack.c.b16 %v2151, %v2147
    %v2200 = vpack.c.b16 %v2152, %v2148
    %v2201 = vpack.c.b16 %v2157, %v2153
    %v2202 = vpack.c.b16 %v2158, %v2154
    %v2203 = vpack.c.b16 %v2159, %v2155
    %v2204 = vpack.c.b16 %v2160, %v2156
    %v2205 = vpack.c.b16 %v2165, %v2161
    %v2206 = vpack.c.b16 %v2166, %v2162
    %v2207 = vpack.c.b16 %v2167, %v2163
    %v2208 = vpack.c.b16 %v2168, %v2164
    %v2209 = vpack.c.b16 %v2173, %v2169
    %v2210 = vpack.c.b16 %v2174, %v2170
    %v2211 = vpack.c.b16 %v2175, %v2171
    %v2212 = vpack.c.b16 %v2176, %v2172
    %v2213 = vpack.c.b16 %v2181, %v2177
    %v2214 = vpack.c.b16 %v2182, %v2178
    %v2215 = vpack.c.b16 %v2183, %v2179
    %v2216 = vpack.c.b16 %v2184, %v2180
    %2249 = vmatpush.bf16.msra.mxu0 %v2213
    %2250 = vmatpush.bf16.msra.mxu0 %v2209
    %2251 = vmatpush.bf16.msra.mxu0 %v2205
    %2252 = vmatpush.bf16.msra.mxu0 %v2201
    %2253 = vmatpush.bf16.msra.mxu0 %v2197
    %2254 = vmatpush.bf16.msra.mxu0 %v2193
    %2255 = vmatpush.bf16.msra.mxu0 %v2189
    %2256 = vmatpush.bf16.msra.mxu0 %v2185
    %2257 = vmatmul.bf16.gmra.mxu0 %v2056
    %v2258 = vpop.f32.mrf.mxu0
    %v2259 = vadd.f32 0.0, %v2258
    %v2260 = vpop.f32.mrf.mxu0
    %2261 = vdwg.mxu0
    %2262 = vmatpush.bf16.msra.mxu0 %v2214
    %2263 = vmatpush.bf16.msra.mxu0 %v2210
    %2264 = vmatpush.bf16.msra.mxu0 %v2206
    %2265 = vmatpush.bf16.msra.mxu0 %v2202
    %2266 = vmatpush.bf16.msra.mxu0 %v2198
    %2267 = vmatpush.bf16.msra.mxu0 %v2194
    %2268 = vmatpush.bf16.msra.mxu0 %v2190
    %2269 = vmatpush.bf16.msra.mxu0 %v2186
    %2270 = vmatmul.bf16.gmra.mxu0 %v2056
    %v2271 = vpop.f32.mrf.mxu0
    %v2272 = vadd.f32 0.0, %v2271
    %v2273 = vpop.f32.mrf.mxu0
    %2274 = vdwg.mxu0
    %2275 = vmatpush.bf16.msra.mxu0 %v2215
    %2276 = vmatpush.bf16.msra.mxu0 %v2211
    %2277 = vmatpush.bf16.msra.mxu0 %v2207
    %2278 = vmatpush.bf16.msra.mxu0 %v2203
    %2279 = vmatpush.bf16.msra.mxu0 %v2199
    %2280 = vmatpush.bf16.msra.mxu0 %v2195
    %2281 = vmatpush.bf16.msra.mxu0 %v2191
    %2282 = vmatpush.bf16.msra.mxu0 %v2187
    %2283 = vmatmul.bf16.gmra.mxu0 %v2056
    %v2284 = vpop.f32.mrf.mxu0
    %v2285 = vadd.f32 0.0, %v2284
    %v2286 = vpop.f32.mrf.mxu0
    %2287 = vdwg.mxu0
    %2288 = vmatpush.bf16.msra.mxu0 %v2216
    %2289 = vmatpush.bf16.msra.mxu0 %v2212
    %2290 = vmatpush.bf16.msra.mxu0 %v2208
    %2291 = vmatpush.bf16.msra.mxu0 %v2204
    %2292 = vmatpush.bf16.msra.mxu0 %v2200
    %2293 = vmatpush.bf16.msra.mxu0 %v2196
    %2294 = vmatpush.bf16.msra.mxu0 %v2192
    %2295 = vmatpush.bf16.msra.mxu0 %v2188
    %2296 = vmatmul.bf16.gmra.mxu0 %v2056
    %v2297 = vpop.f32.mrf.mxu0
    %v2298 = vadd.f32 0.0, %v2297
    %v2299 = vpop.f32.mrf.mxu0
    %2300 = vdwg.mxu0
    %v2301 = vadd.f32 %v2051, %v2259
    %v2302 = vadd.f32 %v2052, %v2272
    %v2303 = vadd.f32 %v2053, %v2285
    %v2304 = vadd.f32 %v2054, %v2298
    %v2305 = vxor.u32 %v2301, 2147483648
    %v2306 = vmul.f32 %v2305, 1.442695
    %v2307 = vpow.pop %v2306
    %v2308 = vadd.f32 %v2307, 1.0
    %v2309 = vrcp.pop %v2308
    %v2310 = vmul.f32 %v2308, %v2309
    %v2311 = vsub.f32 1.0, %v2310
    %v2312 = vmul.f32 %v2309, %v2311
    %v2313 = vadd.f32 %v2309, %v2312
    %vm2314 = vweird.f32 %v2308
    %vm2315 = vweird.f32 %v2309
    %vm2316 = vmor %vm2314, %vm2315
    %v2317 = vsel %vm2316, %v2309, %v2313
    %v2318 = vand.u32 2147483647, %v2308
    %vm2319 = vcmp.eq.f32.partialorder %v2318, 8.507059e+37
    %v2320 = vand.u32 %v2308, 2147483648
    %v2321 = vor.u32 1.1754944e-38, %v2320
    %v2322 = vsel %vm2319, %v2321, %v2317
    %v2323 = vmul.f32 1.0, %v2322
    %v2324 = vxor.u32 %v2302, 2147483648
    %v2325 = vmul.f32 %v2324, 1.442695
    %v2326 = vpow.pop %v2325
    %v2327 = vadd.f32 %v2326, 1.0
    %v2328 = vrcp.pop %v2327
    %v2329 = vmul.f32 %v2327, %v2328
    %v2330 = vsub.f32 1.0, %v2329
    %v2331 = vmul.f32 %v2328, %v2330
    %v2332 = vadd.f32 %v2328, %v2331
    %vm2333 = vweird.f32 %v2327
    %vm2334 = vweird.f32 %v2328
    %vm2335 = vmor %vm2333, %vm2334
    %v2336 = vsel %vm2335, %v2328, %v2332
    %v2337 = vand.u32 2147483647, %v2327
    %vm2338 = vcmp.eq.f32.partialorder %v2337, 8.507059e+37
    %v2339 = vand.u32 %v2327, 2147483648
    %v2340 = vor.u32 1.1754944e-38, %v2339
    %v2341 = vsel %vm2338, %v2340, %v2336
    %v2342 = vmul.f32 1.0, %v2341
    %v2343 = vtanh.pop %v2303
    %v2344 = vxor.u32 %v2304, 2147483648
    %v2345 = vmul.f32 %v2344, 1.442695
    %v2346 = vpow.pop %v2345
    %v2347 = vadd.f32 %v2346, 1.0
    %v2348 = vrcp.pop %v2347
    %v2349 = vmul.f32 %v2347, %v2348
    %v2350 = vsub.f32 1.0, %v2349
    %v2351 = vmul.f32 %v2348, %v2350
    %v2352 = vadd.f32 %v2348, %v2351
    %vm2353 = vweird.f32 %v2347
    %vm2354 = vweird.f32 %v2348
    %vm2355 = vmor %vm2353, %vm2354
    %v2356 = vsel %vm2355, %v2348, %v2352
    %v2357 = vand.u32 2147483647, %v2347
    %vm2358 = vcmp.eq.f32.partialorder %v2357, 8.507059e+37
    %v2359 = vand.u32 %v2347, 2147483648
    %v2360 = vor.u32 1.1754944e-38, %v2359
    %v2361 = vsel %vm2358, %v2360, %v2356
    %v2362 = vmul.f32 1.0, %v2361
    %v2363 = vld [vmem:[#allocation5] sm:$0xff]
    %v2364 = vmul.f32 %v2342, %v2363
    %v2365 = vmul.f32 %v2323, %v2343
    %v2366 = vadd.f32 %v2364, %v2365
    %v2367 = vtanh.pop %v2366
    %v2368 = vmul.f32 %v2362, %v2367
    %2369 = vst [vmem:[#allocation4] sm:$0xff] %v2368
    %2370 = vst [vmem:[#allocation5] sm:$0xff] %v2366
    %s2371 = scalar_lea.vmem [#allocation3], 40
    %2372 = vst [vmem:[%s2371] sm:$0xff] %v2368
    %s2373 = smul.u32 6, 4
    %s2374 = smul.addr %s2373, 8
    %s2375 = scalar_lea.vmem [#allocation2], %s2374
    %v2376 = vld [vmem:[%s2375] sm:$0xff]
    %v2377 = vld [vmem:[%s2375 + $0x8] sm:$0xff]
    %v2378 = vld [vmem:[%s2375 + $0x10] sm:$0xff]
    %v2379 = vld [vmem:[%s2375 + $0x18] sm:$0xff]
    %v2380 = vld [vmem:[#allocation4] sm:$0xff]
    %v2381 = vpack.c.bf16 %v2380, %v2380
    %v2382 = vld [vmem:[%s4] sm:$0xff]
    %v2383 = vld [vmem:[%s4 + $0x8] sm:$0xff]
    %v2384 = vld [vmem:[%s4 + $0x10] sm:$0xff]
    %v2385 = vld [vmem:[%s4 + $0x18] sm:$0xff]
    %v2386 = vld [vmem:[%s4 + $0x20] sm:$0xff]
    %v2387 = vld [vmem:[%s4 + $0x28] sm:$0xff]
    %v2388 = vld [vmem:[%s4 + $0x30] sm:$0xff]
    %v2389 = vld [vmem:[%s4 + $0x38] sm:$0xff]
    %v2390 = vld [vmem:[%s4 + $0x40] sm:$0xff]
    %v2391 = vld [vmem:[%s4 + $0x48] sm:$0xff]
    %v2392 = vld [vmem:[%s4 + $0x50] sm:$0xff]
    %v2393 = vld [vmem:[%s4 + $0x58] sm:$0xff]
    %v2394 = vld [vmem:[%s4 + $0x60] sm:$0xff]
    %v2395 = vld [vmem:[%s4 + $0x68] sm:$0xff]
    %v2396 = vld [vmem:[%s4 + $0x70] sm:$0xff]
    %v2397 = vld [vmem:[%s4 + $0x78] sm:$0xff]
    %v2398 = vld [vmem:[%s4 + $0x80] sm:$0xff]
    %v2399 = vld [vmem:[%s4 + $0x88] sm:$0xff]
    %v2400 = vld [vmem:[%s4 + $0x90] sm:$0xff]
    %v2401 = vld [vmem:[%s4 + $0x98] sm:$0xff]
    %v2402 = vld [vmem:[%s4 + $0xa0] sm:$0xff]
    %v2403 = vld [vmem:[%s4 + $0xa8] sm:$0xff]
    %v2404 = vld [vmem:[%s4 + $0xb0] sm:$0xff]
    %v2405 = vld [vmem:[%s4 + $0xb8] sm:$0xff]
    %v2406 = vld [vmem:[%s4 + $0xc0] sm:$0xff]
    %v2407 = vld [vmem:[%s4 + $0xc8] sm:$0xff]
    %v2408 = vld [vmem:[%s4 + $0xd0] sm:$0xff]
    %v2409 = vld [vmem:[%s4 + $0xd8] sm:$0xff]
    %v2410 = vld [vmem:[%s4 + $0xe0] sm:$0xff]
    %v2411 = vld [vmem:[%s4 + $0xe8] sm:$0xff]
    %v2412 = vld [vmem:[%s4 + $0xf0] sm:$0xff]
    %v2413 = vld [vmem:[%s4 + $0xf8] sm:$0xff]
    %v2446 = vunpack.c.l.b16 %v2382
    %v2447 = vunpack.c.h.b16 %v2382
    %v2448 = vunpack.c.l.b16 %v2383
    %v2449 = vunpack.c.h.b16 %v2383
    %v2450 = vunpack.c.l.b16 %v2384
    %v2451 = vunpack.c.h.b16 %v2384
    %v2452 = vunpack.c.l.b16 %v2385
    %v2453 = vunpack.c.h.b16 %v2385
    %v2454 = vunpack.c.l.b16 %v2386
    %v2455 = vunpack.c.h.b16 %v2386
    %v2456 = vunpack.c.l.b16 %v2387
    %v2457 = vunpack.c.h.b16 %v2387
    %v2458 = vunpack.c.l.b16 %v2388
    %v2459 = vunpack.c.h.b16 %v2388
    %v2460 = vunpack.c.l.b16 %v2389
    %v2461 = vunpack.c.h.b16 %v2389
    %v2462 = vunpack.c.l.b16 %v2390
    %v2463 = vunpack.c.h.b16 %v2390
    %v2464 = vunpack.c.l.b16 %v2391
    %v2465 = vunpack.c.h.b16 %v2391
    %v2466 = vunpack.c.l.b16 %v2392
    %v2467 = vunpack.c.h.b16 %v2392
    %v2468 = vunpack.c.l.b16 %v2393
    %v2469 = vunpack.c.h.b16 %v2393
    %v2470 = vunpack.c.l.b16 %v2394
    %v2471 = vunpack.c.h.b16 %v2394
    %v2472 = vunpack.c.l.b16 %v2395
    %v2473 = vunpack.c.h.b16 %v2395
    %v2474 = vunpack.c.l.b16 %v2396
    %v2475 = vunpack.c.h.b16 %v2396
    %v2476 = vunpack.c.l.b16 %v2397
    %v2477 = vunpack.c.h.b16 %v2397
    %v2478 = vunpack.c.l.b16 %v2398
    %v2479 = vunpack.c.h.b16 %v2398
    %v2480 = vunpack.c.l.b16 %v2399
    %v2481 = vunpack.c.h.b16 %v2399
    %v2482 = vunpack.c.l.b16 %v2400
    %v2483 = vunpack.c.h.b16 %v2400
    %v2484 = vunpack.c.l.b16 %v2401
    %v2485 = vunpack.c.h.b16 %v2401
    %v2486 = vunpack.c.l.b16 %v2402
    %v2487 = vunpack.c.h.b16 %v2402
    %v2488 = vunpack.c.l.b16 %v2403
    %v2489 = vunpack.c.h.b16 %v2403
    %v2490 = vunpack.c.l.b16 %v2404
    %v2491 = vunpack.c.h.b16 %v2404
    %v2492 = vunpack.c.l.b16 %v2405
    %v2493 = vunpack.c.h.b16 %v2405
    %v2494 = vunpack.c.l.b16 %v2406
    %v2495 = vunpack.c.h.b16 %v2406
    %v2496 = vunpack.c.l.b16 %v2407
    %v2497 = vunpack.c.h.b16 %v2407
    %v2498 = vunpack.c.l.b16 %v2408
    %v2499 = vunpack.c.h.b16 %v2408
    %v2500 = vunpack.c.l.b16 %v2409
    %v2501 = vunpack.c.h.b16 %v2409
    %v2502 = vunpack.c.l.b16 %v2410
    %v2503 = vunpack.c.h.b16 %v2410
    %v2504 = vunpack.c.l.b16 %v2411
    %v2505 = vunpack.c.h.b16 %v2411
    %v2506 = vunpack.c.l.b16 %v2412
    %v2507 = vunpack.c.h.b16 %v2412
    %v2508 = vunpack.c.l.b16 %v2413
    %v2509 = vunpack.c.h.b16 %v2413
    %v2510 = vpack.c.b16 %v2450, %v2446
    %v2511 = vpack.c.b16 %v2451, %v2447
    %v2512 = vpack.c.b16 %v2452, %v2448
    %v2513 = vpack.c.b16 %v2453, %v2449
    %v2514 = vpack.c.b16 %v2458, %v2454
    %v2515 = vpack.c.b16 %v2459, %v2455
    %v2516 = vpack.c.b16 %v2460, %v2456
    %v2517 = vpack.c.b16 %v2461, %v2457
    %v2518 = vpack.c.b16 %v2466, %v2462
    %v2519 = vpack.c.b16 %v2467, %v2463
    %v2520 = vpack.c.b16 %v2468, %v2464
    %v2521 = vpack.c.b16 %v2469, %v2465
    %v2522 = vpack.c.b16 %v2474, %v2470
    %v2523 = vpack.c.b16 %v2475, %v2471
    %v2524 = vpack.c.b16 %v2476, %v2472
    %v2525 = vpack.c.b16 %v2477, %v2473
    %v2526 = vpack.c.b16 %v2482, %v2478
    %v2527 = vpack.c.b16 %v2483, %v2479
    %v2528 = vpack.c.b16 %v2484, %v2480
    %v2529 = vpack.c.b16 %v2485, %v2481
    %v2530 = vpack.c.b16 %v2490, %v2486
    %v2531 = vpack.c.b16 %v2491, %v2487
    %v2532 = vpack.c.b16 %v2492, %v2488
    %v2533 = vpack.c.b16 %v2493, %v2489
    %v2534 = vpack.c.b16 %v2498, %v2494
    %v2535 = vpack.c.b16 %v2499, %v2495
    %v2536 = vpack.c.b16 %v2500, %v2496
    %v2537 = vpack.c.b16 %v2501, %v2497
    %v2538 = vpack.c.b16 %v2506, %v2502
    %v2539 = vpack.c.b16 %v2507, %v2503
    %v2540 = vpack.c.b16 %v2508, %v2504
    %v2541 = vpack.c.b16 %v2509, %v2505
    %2574 = vmatpush.bf16.msra.mxu0 %v2538
    %2575 = vmatpush.bf16.msra.mxu0 %v2534
    %2576 = vmatpush.bf16.msra.mxu0 %v2530
    %2577 = vmatpush.bf16.msra.mxu0 %v2526
    %2578 = vmatpush.bf16.msra.mxu0 %v2522
    %2579 = vmatpush.bf16.msra.mxu0 %v2518
    %2580 = vmatpush.bf16.msra.mxu0 %v2514
    %2581 = vmatpush.bf16.msra.mxu0 %v2510
    %2582 = vmatmul.bf16.gmra.mxu0 %v2381
    %v2583 = vpop.f32.mrf.mxu0
    %v2584 = vadd.f32 0.0, %v2583
    %v2585 = vpop.f32.mrf.mxu0
    %2586 = vdwg.mxu0
    %2587 = vmatpush.bf16.msra.mxu0 %v2539
    %2588 = vmatpush.bf16.msra.mxu0 %v2535
    %2589 = vmatpush.bf16.msra.mxu0 %v2531
    %2590 = vmatpush.bf16.msra.mxu0 %v2527
    %2591 = vmatpush.bf16.msra.mxu0 %v2523
    %2592 = vmatpush.bf16.msra.mxu0 %v2519
    %2593 = vmatpush.bf16.msra.mxu0 %v2515
    %2594 = vmatpush.bf16.msra.mxu0 %v2511
    %2595 = vmatmul.bf16.gmra.mxu0 %v2381
    %v2596 = vpop.f32.mrf.mxu0
    %v2597 = vadd.f32 0.0, %v2596
    %v2598 = vpop.f32.mrf.mxu0
    %2599 = vdwg.mxu0
    %2600 = vmatpush.bf16.msra.mxu0 %v2540
    %2601 = vmatpush.bf16.msra.mxu0 %v2536
    %2602 = vmatpush.bf16.msra.mxu0 %v2532
    %2603 = vmatpush.bf16.msra.mxu0 %v2528
    %2604 = vmatpush.bf16.msra.mxu0 %v2524
    %2605 = vmatpush.bf16.msra.mxu0 %v2520
    %2606 = vmatpush.bf16.msra.mxu0 %v2516
    %2607 = vmatpush.bf16.msra.mxu0 %v2512
    %2608 = vmatmul.bf16.gmra.mxu0 %v2381
    %v2609 = vpop.f32.mrf.mxu0
    %v2610 = vadd.f32 0.0, %v2609
    %v2611 = vpop.f32.mrf.mxu0
    %2612 = vdwg.mxu0
    %2613 = vmatpush.bf16.msra.mxu0 %v2541
    %2614 = vmatpush.bf16.msra.mxu0 %v2537
    %2615 = vmatpush.bf16.msra.mxu0 %v2533
    %2616 = vmatpush.bf16.msra.mxu0 %v2529
    %2617 = vmatpush.bf16.msra.mxu0 %v2525
    %2618 = vmatpush.bf16.msra.mxu0 %v2521
    %2619 = vmatpush.bf16.msra.mxu0 %v2517
    %2620 = vmatpush.bf16.msra.mxu0 %v2513
    %2621 = vmatmul.bf16.gmra.mxu0 %v2381
    %v2622 = vpop.f32.mrf.mxu0
    %v2623 = vadd.f32 0.0, %v2622
    %v2624 = vpop.f32.mrf.mxu0
    %2625 = vdwg.mxu0
    %v2626 = vadd.f32 %v2376, %v2584
    %v2627 = vadd.f32 %v2377, %v2597
    %v2628 = vadd.f32 %v2378, %v2610
    %v2629 = vadd.f32 %v2379, %v2623
    %v2630 = vxor.u32 %v2626, 2147483648
    %v2631 = vmul.f32 %v2630, 1.442695
    %v2632 = vpow.pop %v2631
    %v2633 = vadd.f32 %v2632, 1.0
    %v2634 = vrcp.pop %v2633
    %v2635 = vmul.f32 %v2633, %v2634
    %v2636 = vsub.f32 1.0, %v2635
    %v2637 = vmul.f32 %v2634, %v2636
    %v2638 = vadd.f32 %v2634, %v2637
    %vm2639 = vweird.f32 %v2633
    %vm2640 = vweird.f32 %v2634
    %vm2641 = vmor %vm2639, %vm2640
    %v2642 = vsel %vm2641, %v2634, %v2638
    %v2643 = vand.u32 2147483647, %v2633
    %vm2644 = vcmp.eq.f32.partialorder %v2643, 8.507059e+37
    %v2645 = vand.u32 %v2633, 2147483648
    %v2646 = vor.u32 1.1754944e-38, %v2645
    %v2647 = vsel %vm2644, %v2646, %v2642
    %v2648 = vmul.f32 1.0, %v2647
    %v2649 = vxor.u32 %v2627, 2147483648
    %v2650 = vmul.f32 %v2649, 1.442695
    %v2651 = vpow.pop %v2650
    %v2652 = vadd.f32 %v2651, 1.0
    %v2653 = vrcp.pop %v2652
    %v2654 = vmul.f32 %v2652, %v2653
    %v2655 = vsub.f32 1.0, %v2654
    %v2656 = vmul.f32 %v2653, %v2655
    %v2657 = vadd.f32 %v2653, %v2656
    %vm2658 = vweird.f32 %v2652
    %vm2659 = vweird.f32 %v2653
    %vm2660 = vmor %vm2658, %vm2659
    %v2661 = vsel %vm2660, %v2653, %v2657
    %v2662 = vand.u32 2147483647, %v2652
    %vm2663 = vcmp.eq.f32.partialorder %v2662, 8.507059e+37
    %v2664 = vand.u32 %v2652, 2147483648
    %v2665 = vor.u32 1.1754944e-38, %v2664
    %v2666 = vsel %vm2663, %v2665, %v2661
    %v2667 = vmul.f32 1.0, %v2666
    %v2668 = vtanh.pop %v2628
    %v2669 = vxor.u32 %v2629, 2147483648
    %v2670 = vmul.f32 %v2669, 1.442695
    %v2671 = vpow.pop %v2670
    %v2672 = vadd.f32 %v2671, 1.0
    %v2673 = vrcp.pop %v2672
    %v2674 = vmul.f32 %v2672, %v2673
    %v2675 = vsub.f32 1.0, %v2674
    %v2676 = vmul.f32 %v2673, %v2675
    %v2677 = vadd.f32 %v2673, %v2676
    %vm2678 = vweird.f32 %v2672
    %vm2679 = vweird.f32 %v2673
    %vm2680 = vmor %vm2678, %vm2679
    %v2681 = vsel %vm2680, %v2673, %v2677
    %v2682 = vand.u32 2147483647, %v2672
    %vm2683 = vcmp.eq.f32.partialorder %v2682, 8.507059e+37
    %v2684 = vand.u32 %v2672, 2147483648
    %v2685 = vor.u32 1.1754944e-38, %v2684
    %v2686 = vsel %vm2683, %v2685, %v2681
    %v2687 = vmul.f32 1.0, %v2686
    %v2688 = vld [vmem:[#allocation5] sm:$0xff]
    %v2689 = vmul.f32 %v2667, %v2688
    %v2690 = vmul.f32 %v2648, %v2668
    %v2691 = vadd.f32 %v2689, %v2690
    %v2692 = vtanh.pop %v2691
    %v2693 = vmul.f32 %v2687, %v2692
    %2694 = vst [vmem:[#allocation4] sm:$0xff] %v2693
    %2695 = vst [vmem:[#allocation5] sm:$0xff] %v2691
    %s2696 = scalar_lea.vmem [#allocation3], 48
    %2697 = vst [vmem:[%s2696] sm:$0xff] %v2693
    %s2698 = smul.u32 7, 4
    %s2699 = smul.addr %s2698, 8
    %s2700 = scalar_lea.vmem [#allocation2], %s2699
    %v2701 = vld [vmem:[%s2700] sm:$0xff]
    %v2702 = vld [vmem:[%s2700 + $0x8] sm:$0xff]
    %v2703 = vld [vmem:[%s2700 + $0x10] sm:$0xff]
    %v2704 = vld [vmem:[%s2700 + $0x18] sm:$0xff]
    %v2705 = vld [vmem:[#allocation4] sm:$0xff]
    %v2706 = vpack.c.bf16 %v2705, %v2705
    %v2707 = vld [vmem:[%s4] sm:$0xff]
    %v2708 = vld [vmem:[%s4 + $0x8] sm:$0xff]
    %v2709 = vld [vmem:[%s4 + $0x10] sm:$0xff]
    %v2710 = vld [vmem:[%s4 + $0x18] sm:$0xff]
    %v2711 = vld [vmem:[%s4 + $0x20] sm:$0xff]
    %v2712 = vld [vmem:[%s4 + $0x28] sm:$0xff]
    %v2713 = vld [vmem:[%s4 + $0x30] sm:$0xff]
    %v2714 = vld [vmem:[%s4 + $0x38] sm:$0xff]
    %v2715 = vld [vmem:[%s4 + $0x40] sm:$0xff]
    %v2716 = vld [vmem:[%s4 + $0x48] sm:$0xff]
    %v2717 = vld [vmem:[%s4 + $0x50] sm:$0xff]
    %v2718 = vld [vmem:[%s4 + $0x58] sm:$0xff]
    %v2719 = vld [vmem:[%s4 + $0x60] sm:$0xff]
    %v2720 = vld [vmem:[%s4 + $0x68] sm:$0xff]
    %v2721 = vld [vmem:[%s4 + $0x70] sm:$0xff]
    %v2722 = vld [vmem:[%s4 + $0x78] sm:$0xff]
    %v2723 = vld [vmem:[%s4 + $0x80] sm:$0xff]
    %v2724 = vld [vmem:[%s4 + $0x88] sm:$0xff]
    %v2725 = vld [vmem:[%s4 + $0x90] sm:$0xff]
    %v2726 = vld [vmem:[%s4 + $0x98] sm:$0xff]
    %v2727 = vld [vmem:[%s4 + $0xa0] sm:$0xff]
    %v2728 = vld [vmem:[%s4 + $0xa8] sm:$0xff]
    %v2729 = vld [vmem:[%s4 + $0xb0] sm:$0xff]
    %v2730 = vld [vmem:[%s4 + $0xb8] sm:$0xff]
    %v2731 = vld [vmem:[%s4 + $0xc0] sm:$0xff]
    %v2732 = vld [vmem:[%s4 + $0xc8] sm:$0xff]
    %v2733 = vld [vmem:[%s4 + $0xd0] sm:$0xff]
    %v2734 = vld [vmem:[%s4 + $0xd8] sm:$0xff]
    %v2735 = vld [vmem:[%s4 + $0xe0] sm:$0xff]
    %v2736 = vld [vmem:[%s4 + $0xe8] sm:$0xff]
    %v2737 = vld [vmem:[%s4 + $0xf0] sm:$0xff]
    %v2738 = vld [vmem:[%s4 + $0xf8] sm:$0xff]
    %v2771 = vunpack.c.l.b16 %v2707
    %v2772 = vunpack.c.h.b16 %v2707
    %v2773 = vunpack.c.l.b16 %v2708
    %v2774 = vunpack.c.h.b16 %v2708
    %v2775 = vunpack.c.l.b16 %v2709
    %v2776 = vunpack.c.h.b16 %v2709
    %v2777 = vunpack.c.l.b16 %v2710
    %v2778 = vunpack.c.h.b16 %v2710
    %v2779 = vunpack.c.l.b16 %v2711
    %v2780 = vunpack.c.h.b16 %v2711
    %v2781 = vunpack.c.l.b16 %v2712
    %v2782 = vunpack.c.h.b16 %v2712
    %v2783 = vunpack.c.l.b16 %v2713
    %v2784 = vunpack.c.h.b16 %v2713
    %v2785 = vunpack.c.l.b16 %v2714
    %v2786 = vunpack.c.h.b16 %v2714
    %v2787 = vunpack.c.l.b16 %v2715
    %v2788 = vunpack.c.h.b16 %v2715
    %v2789 = vunpack.c.l.b16 %v2716
    %v2790 = vunpack.c.h.b16 %v2716
    %v2791 = vunpack.c.l.b16 %v2717
    %v2792 = vunpack.c.h.b16 %v2717
    %v2793 = vunpack.c.l.b16 %v2718
    %v2794 = vunpack.c.h.b16 %v2718
    %v2795 = vunpack.c.l.b16 %v2719
    %v2796 = vunpack.c.h.b16 %v2719
    %v2797 = vunpack.c.l.b16 %v2720
    %v2798 = vunpack.c.h.b16 %v2720
    %v2799 = vunpack.c.l.b16 %v2721
    %v2800 = vunpack.c.h.b16 %v2721
    %v2801 = vunpack.c.l.b16 %v2722
    %v2802 = vunpack.c.h.b16 %v2722
    %v2803 = vunpack.c.l.b16 %v2723
    %v2804 = vunpack.c.h.b16 %v2723
    %v2805 = vunpack.c.l.b16 %v2724
    %v2806 = vunpack.c.h.b16 %v2724
    %v2807 = vunpack.c.l.b16 %v2725
    %v2808 = vunpack.c.h.b16 %v2725
    %v2809 = vunpack.c.l.b16 %v2726
    %v2810 = vunpack.c.h.b16 %v2726
    %v2811 = vunpack.c.l.b16 %v2727
    %v2812 = vunpack.c.h.b16 %v2727
    %v2813 = vunpack.c.l.b16 %v2728
    %v2814 = vunpack.c.h.b16 %v2728
    %v2815 = vunpack.c.l.b16 %v2729
    %v2816 = vunpack.c.h.b16 %v2729
    %v2817 = vunpack.c.l.b16 %v2730
    %v2818 = vunpack.c.h.b16 %v2730
    %v2819 = vunpack.c.l.b16 %v2731
    %v2820 = vunpack.c.h.b16 %v2731
    %v2821 = vunpack.c.l.b16 %v2732
    %v2822 = vunpack.c.h.b16 %v2732
    %v2823 = vunpack.c.l.b16 %v2733
    %v2824 = vunpack.c.h.b16 %v2733
    %v2825 = vunpack.c.l.b16 %v2734
    %v2826 = vunpack.c.h.b16 %v2734
    %v2827 = vunpack.c.l.b16 %v2735
    %v2828 = vunpack.c.h.b16 %v2735
    %v2829 = vunpack.c.l.b16 %v2736
    %v2830 = vunpack.c.h.b16 %v2736
    %v2831 = vunpack.c.l.b16 %v2737
    %v2832 = vunpack.c.h.b16 %v2737
    %v2833 = vunpack.c.l.b16 %v2738
    %v2834 = vunpack.c.h.b16 %v2738
    %v2835 = vpack.c.b16 %v2775, %v2771
    %v2836 = vpack.c.b16 %v2776, %v2772
    %v2837 = vpack.c.b16 %v2777, %v2773
    %v2838 = vpack.c.b16 %v2778, %v2774
    %v2839 = vpack.c.b16 %v2783, %v2779
    %v2840 = vpack.c.b16 %v2784, %v2780
    %v2841 = vpack.c.b16 %v2785, %v2781
    %v2842 = vpack.c.b16 %v2786, %v2782
    %v2843 = vpack.c.b16 %v2791, %v2787
    %v2844 = vpack.c.b16 %v2792, %v2788
    %v2845 = vpack.c.b16 %v2793, %v2789
    %v2846 = vpack.c.b16 %v2794, %v2790
    %v2847 = vpack.c.b16 %v2799, %v2795
    %v2848 = vpack.c.b16 %v2800, %v2796
    %v2849 = vpack.c.b16 %v2801, %v2797
    %v2850 = vpack.c.b16 %v2802, %v2798
    %v2851 = vpack.c.b16 %v2807, %v2803
    %v2852 = vpack.c.b16 %v2808, %v2804
    %v2853 = vpack.c.b16 %v2809, %v2805
    %v2854 = vpack.c.b16 %v2810, %v2806
    %v2855 = vpack.c.b16 %v2815, %v2811
    %v2856 = vpack.c.b16 %v2816, %v2812
    %v2857 = vpack.c.b16 %v2817, %v2813
    %v2858 = vpack.c.b16 %v2818, %v2814
    %v2859 = vpack.c.b16 %v2823, %v2819
    %v2860 = vpack.c.b16 %v2824, %v2820
    %v2861 = vpack.c.b16 %v2825, %v2821
    %v2862 = vpack.c.b16 %v2826, %v2822
    %v2863 = vpack.c.b16 %v2831, %v2827
    %v2864 = vpack.c.b16 %v2832, %v2828
    %v2865 = vpack.c.b16 %v2833, %v2829
    %v2866 = vpack.c.b16 %v2834, %v2830
    %2899 = vmatpush.bf16.msra.mxu0 %v2863
    %2900 = vmatpush.bf16.msra.mxu0 %v2859
    %2901 = vmatpush.bf16.msra.mxu0 %v2855
    %2902 = vmatpush.bf16.msra.mxu0 %v2851
    %2903 = vmatpush.bf16.msra.mxu0 %v2847
    %2904 = vmatpush.bf16.msra.mxu0 %v2843
    %2905 = vmatpush.bf16.msra.mxu0 %v2839
    %2906 = vmatpush.bf16.msra.mxu0 %v2835
    %2907 = vmatmul.bf16.gmra.mxu0 %v2706
    %v2908 = vpop.f32.mrf.mxu0
    %v2909 = vadd.f32 0.0, %v2908
    %v2910 = vpop.f32.mrf.mxu0
    %2911 = vdwg.mxu0
    %2912 = vmatpush.bf16.msra.mxu0 %v2864
    %2913 = vmatpush.bf16.msra.mxu0 %v2860
    %2914 = vmatpush.bf16.msra.mxu0 %v2856
    %2915 = vmatpush.bf16.msra.mxu0 %v2852
    %2916 = vmatpush.bf16.msra.mxu0 %v2848
    %2917 = vmatpush.bf16.msra.mxu0 %v2844
    %2918 = vmatpush.bf16.msra.mxu0 %v2840
    %2919 = vmatpush.bf16.msra.mxu0 %v2836
    %2920 = vmatmul.bf16.gmra.mxu0 %v2706
    %v2921 = vpop.f32.mrf.mxu0
    %v2922 = vadd.f32 0.0, %v2921
    %v2923 = vpop.f32.mrf.mxu0
    %2924 = vdwg.mxu0
    %2925 = vmatpush.bf16.msra.mxu0 %v2865
    %2926 = vmatpush.bf16.msra.mxu0 %v2861
    %2927 = vmatpush.bf16.msra.mxu0 %v2857
    %2928 = vmatpush.bf16.msra.mxu0 %v2853
    %2929 = vmatpush.bf16.msra.mxu0 %v2849
    %2930 = vmatpush.bf16.msra.mxu0 %v2845
    %2931 = vmatpush.bf16.msra.mxu0 %v2841
    %2932 = vmatpush.bf16.msra.mxu0 %v2837
    %2933 = vmatmul.bf16.gmra.mxu0 %v2706
    %v2934 = vpop.f32.mrf.mxu0
    %v2935 = vadd.f32 0.0, %v2934
    %v2936 = vpop.f32.mrf.mxu0
    %2937 = vdwg.mxu0
    %2938 = vmatpush.bf16.msra.mxu0 %v2866
    %2939 = vmatpush.bf16.msra.mxu0 %v2862
    %2940 = vmatpush.bf16.msra.mxu0 %v2858
    %2941 = vmatpush.bf16.msra.mxu0 %v2854
    %2942 = vmatpush.bf16.msra.mxu0 %v2850
    %2943 = vmatpush.bf16.msra.mxu0 %v2846
    %2944 = vmatpush.bf16.msra.mxu0 %v2842
    %2945 = vmatpush.bf16.msra.mxu0 %v2838
    %2946 = vmatmul.bf16.gmra.mxu0 %v2706
    %v2947 = vpop.f32.mrf.mxu0
    %v2948 = vadd.f32 0.0, %v2947
    %v2949 = vpop.f32.mrf.mxu0
    %2950 = vdwg.mxu0
    %v2951 = vadd.f32 %v2701, %v2909
    %v2952 = vadd.f32 %v2702, %v2922
    %v2953 = vadd.f32 %v2703, %v2935
    %v2954 = vadd.f32 %v2704, %v2948
    %v2955 = vxor.u32 %v2951, 2147483648
    %v2956 = vmul.f32 %v2955, 1.442695
    %v2957 = vpow.pop %v2956
    %v2958 = vadd.f32 %v2957, 1.0
    %v2959 = vrcp.pop %v2958
    %v2960 = vmul.f32 %v2958, %v2959
    %v2961 = vsub.f32 1.0, %v2960
    %v2962 = vmul.f32 %v2959, %v2961
    %v2963 = vadd.f32 %v2959, %v2962
    %vm2964 = vweird.f32 %v2958
    %vm2965 = vweird.f32 %v2959
    %vm2966 = vmor %vm2964, %vm2965
    %v2967 = vsel %vm2966, %v2959, %v2963
    %v2968 = vand.u32 2147483647, %v2958
    %vm2969 = vcmp.eq.f32.partialorder %v2968, 8.507059e+37
    %v2970 = vand.u32 %v2958, 2147483648
    %v2971 = vor.u32 1.1754944e-38, %v2970
    %v2972 = vsel %vm2969, %v2971, %v2967
    %v2973 = vmul.f32 1.0, %v2972
    %v2974 = vxor.u32 %v2952, 2147483648
    %v2975 = vmul.f32 %v2974, 1.442695
    %v2976 = vpow.pop %v2975
    %v2977 = vadd.f32 %v2976, 1.0
    %v2978 = vrcp.pop %v2977
    %v2979 = vmul.f32 %v2977, %v2978
    %v2980 = vsub.f32 1.0, %v2979
    %v2981 = vmul.f32 %v2978, %v2980
    %v2982 = vadd.f32 %v2978, %v2981
    %vm2983 = vweird.f32 %v2977
    %vm2984 = vweird.f32 %v2978
    %vm2985 = vmor %vm2983, %vm2984
    %v2986 = vsel %vm2985, %v2978, %v2982
    %v2987 = vand.u32 2147483647, %v2977
    %vm2988 = vcmp.eq.f32.partialorder %v2987, 8.507059e+37
    %v2989 = vand.u32 %v2977, 2147483648
    %v2990 = vor.u32 1.1754944e-38, %v2989
    %v2991 = vsel %vm2988, %v2990, %v2986
    %v2992 = vmul.f32 1.0, %v2991
    %v2993 = vtanh.pop %v2953
    %v2994 = vxor.u32 %v2954, 2147483648
    %v2995 = vmul.f32 %v2994, 1.442695
    %v2996 = vpow.pop %v2995
    %v2997 = vadd.f32 %v2996, 1.0
    %v2998 = vrcp.pop %v2997
    %v2999 = vmul.f32 %v2997, %v2998
    %v3000 = vsub.f32 1.0, %v2999
    %v3001 = vmul.f32 %v2998, %v3000
    %v3002 = vadd.f32 %v2998, %v3001
    %vm3003 = vweird.f32 %v2997
    %vm3004 = vweird.f32 %v2998
    %vm3005 = vmor %vm3003, %vm3004
    %v3006 = vsel %vm3005, %v2998, %v3002
    %v3007 = vand.u32 2147483647, %v2997
    %vm3008 = vcmp.eq.f32.partialorder %v3007, 8.507059e+37
    %v3009 = vand.u32 %v2997, 2147483648
    %v3010 = vor.u32 1.1754944e-38, %v3009
    %v3011 = vsel %vm3008, %v3010, %v3006
    %v3012 = vmul.f32 1.0, %v3011
    %v3013 = vld [vmem:[#allocation5] sm:$0xff]
    %v3014 = vmul.f32 %v2992, %v3013
    %v3015 = vmul.f32 %v2973, %v2993
    %v3016 = vadd.f32 %v3014, %v3015
    %v3017 = vtanh.pop %v3016
    %v3018 = vmul.f32 %v3012, %v3017
    %3019 = vst [vmem:[#allocation4] sm:$0xff] %v3018
    %3020 = vst [vmem:[#allocation5] sm:$0xff] %v3016
    %s3021 = scalar_lea.vmem [#allocation3], 56
    %3022 = vst [vmem:[%s3021] sm:$0xff] %v3018
    %v3023 = vld [vmem:[#allocation4] sm:$0xff]
    %3024 = vst [vmem:[#allocation8] sm:$0xff] %v3023
    %v3025 = vld [vmem:[#allocation5] sm:$0xff]
    %3026 = vst [vmem:[#allocation10] sm:$0xff] %v3025
    %v3027 = vld [vmem:[#allocation3] sm:$0xff]
    %v3028 = vld [vmem:[#allocation3 + $0x8] sm:$0xff]
    %v3029 = vld [vmem:[#allocation3 + $0x10] sm:$0xff]
    %v3030 = vld [vmem:[#allocation3 + $0x18] sm:$0xff]
    %v3031 = vld [vmem:[#allocation3 + $0x20] sm:$0xff]
    %v3032 = vld [vmem:[#allocation3 + $0x28] sm:$0xff]
    %v3033 = vld [vmem:[#allocation3 + $0x30] sm:$0xff]
    %v3034 = vld [vmem:[#allocation3 + $0x38] sm:$0xff]
    %v3035 = vpack.c.bf16 %v3028, %v3027
    %v3036 = vpack.c.bf16 %v3030, %v3029
    %v3037 = vpack.c.bf16 %v3032, %v3031
    %v3038 = vpack.c.bf16 %v3034, %v3033
    %v3039 = vld [vmem:[%s6] sm:$0xff]
    %v3040 = vld [vmem:[%s6 + $0x8] sm:$0xff]
    %v3041 = vld [vmem:[%s6 + $0x10] sm:$0xff]
    %v3042 = vld [vmem:[%s6 + $0x18] sm:$0xff]
    %v3043 = vld [vmem:[%s6 + $0x20] sm:$0xff]
    %v3044 = vld [vmem:[%s6 + $0x28] sm:$0xff]
    %v3045 = vld [vmem:[%s6 + $0x30] sm:$0xff]
    %v3046 = vld [vmem:[%s6 + $0x38] sm:$0xff]
    %v3047 = vld [vmem:[%s6 + $0x40] sm:$0xff]
    %v3048 = vld [vmem:[%s6 + $0x48] sm:$0xff]
    %v3049 = vld [vmem:[%s6 + $0x50] sm:$0xff]
    %v3050 = vld [vmem:[%s6 + $0x58] sm:$0xff]
    %v3051 = vld [vmem:[%s6 + $0x60] sm:$0xff]
    %v3052 = vld [vmem:[%s6 + $0x68] sm:$0xff]
    %v3053 = vld [vmem:[%s6 + $0x70] sm:$0xff]
    %v3054 = vld [vmem:[%s6 + $0x78] sm:$0xff]
    %v3071 = vunpack.c.l.b16 %v3039
    %v3072 = vunpack.c.h.b16 %v3039
    %v3073 = vunpack.c.l.b16 %v3040
    %v3074 = vunpack.c.h.b16 %v3040
    %v3075 = vunpack.c.l.b16 %v3041
    %v3076 = vunpack.c.h.b16 %v3041
    %v3077 = vunpack.c.l.b16 %v3042
    %v3078 = vunpack.c.h.b16 %v3042
    %v3079 = vunpack.c.l.b16 %v3043
    %v3080 = vunpack.c.h.b16 %v3043
    %v3081 = vunpack.c.l.b16 %v3044
    %v3082 = vunpack.c.h.b16 %v3044
    %v3083 = vunpack.c.l.b16 %v3045
    %v3084 = vunpack.c.h.b16 %v3045
    %v3085 = vunpack.c.l.b16 %v3046
    %v3086 = vunpack.c.h.b16 %v3046
    %v3087 = vunpack.c.l.b16 %v3047
    %v3088 = vunpack.c.h.b16 %v3047
    %v3089 = vunpack.c.l.b16 %v3048
    %v3090 = vunpack.c.h.b16 %v3048
    %v3091 = vunpack.c.l.b16 %v3049
    %v3092 = vunpack.c.h.b16 %v3049
    %v3093 = vunpack.c.l.b16 %v3050
    %v3094 = vunpack.c.h.b16 %v3050
    %v3095 = vunpack.c.l.b16 %v3051
    %v3096 = vunpack.c.h.b16 %v3051
    %v3097 = vunpack.c.l.b16 %v3052
    %v3098 = vunpack.c.h.b16 %v3052
    %v3099 = vunpack.c.l.b16 %v3053
    %v3100 = vunpack.c.h.b16 %v3053
    %v3101 = vunpack.c.l.b16 %v3054
    %v3102 = vunpack.c.h.b16 %v3054
    %v3103 = vpack.c.b16 %v3073, %v3071
    %v3104 = vpack.c.b16 %v3074, %v3072
    %v3105 = vpack.c.b16 %v3077, %v3075
    %v3106 = vpack.c.b16 %v3078, %v3076
    %v3107 = vpack.c.b16 %v3081, %v3079
    %v3108 = vpack.c.b16 %v3082, %v3080
    %v3109 = vpack.c.b16 %v3085, %v3083
    %v3110 = vpack.c.b16 %v3086, %v3084
    %v3111 = vpack.c.b16 %v3089, %v3087
    %v3112 = vpack.c.b16 %v3090, %v3088
    %v3113 = vpack.c.b16 %v3093, %v3091
    %v3114 = vpack.c.b16 %v3094, %v3092
    %v3115 = vpack.c.b16 %v3097, %v3095
    %v3116 = vpack.c.b16 %v3098, %v3096
    %v3117 = vpack.c.b16 %v3101, %v3099
    %v3118 = vpack.c.b16 %v3102, %v3100
    %3135 = vmatpush.bf16.msra.mxu0 %v3117
    %3136 = vmatpush.bf16.msra.mxu0 %v3115
    %3137 = vmatpush.bf16.msra.mxu0 %v3113
    %3138 = vmatpush.bf16.msra.mxu0 %v3111
    %3139 = vmatpush.bf16.msra.mxu0 %v3109
    %3140 = vmatpush.bf16.msra.mxu0 %v3107
    %3141 = vmatpush.bf16.msra.mxu0 %v3105
    %3142 = vmatpush.bf16.msra.mxu0 %v3103
    %3143 = vmatmul.bf16.gmra.mxu0 %v3035
    %v3144 = vpop.f32.mrf.mxu0
    %v3145 = vadd.f32 0.0, %v3144
    %v3146 = vpop.f32.mrf.mxu0
    %v3147 = vadd.f32 0.0, %v3146
    %3148 = vmatmul.bf16.gmra.mxu0 %v3036
    %v3149 = vpop.f32.mrf.mxu0
    %v3150 = vadd.f32 0.0, %v3149
    %v3151 = vpop.f32.mrf.mxu0
    %v3152 = vadd.f32 0.0, %v3151
    %3153 = vmatmul.bf16.gmra.mxu0 %v3037
    %v3154 = vpop.f32.mrf.mxu0
    %v3155 = vadd.f32 0.0, %v3154
    %v3156 = vpop.f32.mrf.mxu0
    %v3157 = vadd.f32 0.0, %v3156
    %3158 = vmatmul.bf16.gmra.mxu0 %v3038
    %v3159 = vpop.f32.mrf.mxu0
    %v3160 = vadd.f32 0.0, %v3159
    %v3161 = vpop.f32.mrf.mxu0
    %v3162 = vadd.f32 0.0, %v3161
    %3163 = vdwg.mxu0
    %3164 = vmatpush.bf16.msra.mxu0 %v3118
    %3165 = vmatpush.bf16.msra.mxu0 %v3116
    %3166 = vmatpush.bf16.msra.mxu0 %v3114
    %3167 = vmatpush.bf16.msra.mxu0 %v3112
    %3168 = vmatpush.bf16.msra.mxu0 %v3110
    %3169 = vmatpush.bf16.msra.mxu0 %v3108
    %3170 = vmatpush.bf16.msra.mxu0 %v3106
    %3171 = vmatpush.bf16.msra.mxu0 %v3104
    %3172 = vmatmul.bf16.gmra.mxu0 %v3035
    %v3173 = vpop.f32.mrf.mxu0
    %v3174 = vadd.f32 0.0, %v3173
    %v3175 = vpop.f32.mrf.mxu0
    %v3176 = vadd.f32 0.0, %v3175
    %3177 = vmatmul.bf16.gmra.mxu0 %v3036
    %v3178 = vpop.f32.mrf.mxu0
    %v3179 = vadd.f32 0.0, %v3178
    %v3180 = vpop.f32.mrf.mxu0
    %v3181 = vadd.f32 0.0, %v3180
    %3182 = vmatmul.bf16.gmra.mxu0 %v3037
    %v3183 = vpop.f32.mrf.mxu0
    %v3184 = vadd.f32 0.0, %v3183
    %v3185 = vpop.f32.mrf.mxu0
    %v3186 = vadd.f32 0.0, %v3185
    %3187 = vmatmul.bf16.gmra.mxu0 %v3038
    %v3188 = vpop.f32.mrf.mxu0
    %v3189 = vadd.f32 0.0, %v3188
    %v3190 = vpop.f32.mrf.mxu0
    %v3191 = vadd.f32 0.0, %v3190
    %3192 = vdwg.mxu0
    %v3193 = vld [vmem:[%s7] sm:$0x3]
    %v3195 = vperm.slane %v3193, 0
    %v3196 = vperm.slane %v3193, 1
    %v3199 = vadd.f32 %v3145, %v3195
    %v3200 = vadd.f32 %v3174, %v3196
    %v3201 = vadd.f32 %v3147, %v3195
    %v3202 = vadd.f32 %v3176, %v3196
    %v3203 = vadd.f32 %v3150, %v3195
    %v3204 = vadd.f32 %v3179, %v3196
    %v3205 = vadd.f32 %v3152, %v3195
    %v3206 = vadd.f32 %v3181, %v3196
    %v3207 = vadd.f32 %v3155, %v3195
    %v3208 = vadd.f32 %v3184, %v3196
    %v3209 = vadd.f32 %v3157, %v3195
    %v3210 = vadd.f32 %v3186, %v3196
    %v3211 = vadd.f32 %v3160, %v3195
    %v3212 = vadd.f32 %v3189, %v3196
    %v3213 = vadd.f32 %v3162, %v3195
    %v3214 = vadd.f32 %v3191, %v3196
    %v3215 = vrot.slane %v3199, 4
    %v3216 = vmax.f32 %v3199, %v3215
    %v3217 = vrot.slane %v3216, 2
    %v3218 = vmax.f32 %v3216, %v3217
    %v3219 = vrot.slane %v3218, 1
    %v3220 = vmax.f32 %v3218, %v3219
    %v3221 = vrot.slane %v3200, 4
    %v3222 = vmax.f32 %v3200, %v3221
    %v3223 = vrot.slane %v3222, 2
    %v3224 = vmax.f32 %v3222, %v3223
    %v3225 = vrot.slane %v3224, 1
    %v3226 = vmax.f32 %v3224, %v3225
    %v3227 = vrot.slane %v3201, 4
    %v3228 = vmax.f32 %v3201, %v3227
    %v3229 = vrot.slane %v3228, 2
    %v3230 = vmax.f32 %v3228, %v3229
    %v3231 = vrot.slane %v3230, 1
    %v3232 = vmax.f32 %v3230, %v3231
    %v3233 = vrot.slane %v3202, 4
    %v3234 = vmax.f32 %v3202, %v3233
    %v3235 = vrot.slane %v3234, 2
    %v3236 = vmax.f32 %v3234, %v3235
    %v3237 = vrot.slane %v3236, 1
    %v3238 = vmax.f32 %v3236, %v3237
    %v3239 = vrot.slane %v3203, 4
    %v3240 = vmax.f32 %v3203, %v3239
    %v3241 = vrot.slane %v3240, 2
    %v3242 = vmax.f32 %v3240, %v3241
    %v3243 = vrot.slane %v3242, 1
    %v3244 = vmax.f32 %v3242, %v3243
    %v3245 = vrot.slane %v3204, 4
    %v3246 = vmax.f32 %v3204, %v3245
    %v3247 = vrot.slane %v3246, 2
    %v3248 = vmax.f32 %v3246, %v3247
    %v3249 = vrot.slane %v3248, 1
    %v3250 = vmax.f32 %v3248, %v3249
    %v3251 = vrot.slane %v3205, 4
    %v3252 = vmax.f32 %v3205, %v3251
    %v3253 = vrot.slane %v3252, 2
    %v3254 = vmax.f32 %v3252, %v3253
    %v3255 = vrot.slane %v3254, 1
    %v3256 = vmax.f32 %v3254, %v3255
    %v3257 = vrot.slane %v3206, 4
    %v3258 = vmax.f32 %v3206, %v3257
    %v3259 = vrot.slane %v3258, 2
    %v3260 = vmax.f32 %v3258, %v3259
    %v3261 = vrot.slane %v3260, 1
    %v3262 = vmax.f32 %v3260, %v3261
    %v3263 = vrot.slane %v3207, 4
    %v3264 = vmax.f32 %v3207, %v3263
    %v3265 = vrot.slane %v3264, 2
    %v3266 = vmax.f32 %v3264, %v3265
    %v3267 = vrot.slane %v3266, 1
    %v3268 = vmax.f32 %v3266, %v3267
    %v3269 = vrot.slane %v3208, 4
    %v3270 = vmax.f32 %v3208, %v3269
    %v3271 = vrot.slane %v3270, 2
    %v3272 = vmax.f32 %v3270, %v3271
    %v3273 = vrot.slane %v3272, 1
    %v3274 = vmax.f32 %v3272, %v3273
    %v3275 = vrot.slane %v3209, 4
    %v3276 = vmax.f32 %v3209, %v3275
    %v3277 = vrot.slane %v3276, 2
    %v3278 = vmax.f32 %v3276, %v3277
    %v3279 = vrot.slane %v3278, 1
    %v3280 = vmax.f32 %v3278, %v3279
    %v3281 = vrot.slane %v3210, 4
    %v3282 = vmax.f32 %v3210, %v3281
    %v3283 = vrot.slane %v3282, 2
    %v3284 = vmax.f32 %v3282, %v3283
    %v3285 = vrot.slane %v3284, 1
    %v3286 = vmax.f32 %v3284, %v3285
    %v3287 = vrot.slane %v3211, 4
    %v3288 = vmax.f32 %v3211, %v3287
    %v3289 = vrot.slane %v3288, 2
    %v3290 = vmax.f32 %v3288, %v3289
    %v3291 = vrot.slane %v3290, 1
    %v3292 = vmax.f32 %v3290, %v3291
    %v3293 = vrot.slane %v3212, 4
    %v3294 = vmax.f32 %v3212, %v3293
    %v3295 = vrot.slane %v3294, 2
    %v3296 = vmax.f32 %v3294, %v3295
    %v3297 = vrot.slane %v3296, 1
    %v3298 = vmax.f32 %v3296, %v3297
    %v3299 = vrot.slane %v3213, 4
    %v3300 = vmax.f32 %v3213, %v3299
    %v3301 = vrot.slane %v3300, 2
    %v3302 = vmax.f32 %v3300, %v3301
    %v3303 = vrot.slane %v3302, 1
    %v3304 = vmax.f32 %v3302, %v3303
    %v3305 = vrot.slane %v3214, 4
    %v3306 = vmax.f32 %v3214, %v3305
    %v3307 = vrot.slane %v3306, 2
    %v3308 = vmax.f32 %v3306, %v3307
    %v3309 = vrot.slane %v3308, 1
    %v3310 = vmax.f32 %v3308, %v3309
    %v3311 = vsub.f32 %v3199, %v3220
    %v3312 = vsub.f32 %v3200, %v3226
    %v3313 = vsub.f32 %v3201, %v3232
    %v3314 = vsub.f32 %v3202, %v3238
    %v3315 = vsub.f32 %v3203, %v3244
    %v3316 = vsub.f32 %v3204, %v3250
    %v3317 = vsub.f32 %v3205, %v3256
    %v3318 = vsub.f32 %v3206, %v3262
    %v3319 = vsub.f32 %v3207, %v3268
    %v3320 = vsub.f32 %v3208, %v3274
    %v3321 = vsub.f32 %v3209, %v3280
    %v3322 = vsub.f32 %v3210, %v3286
    %v3323 = vsub.f32 %v3211, %v3292
    %v3324 = vsub.f32 %v3212, %v3298
    %v3325 = vsub.f32 %v3213, %v3304
    %v3326 = vsub.f32 %v3214, %v3310
    %v3327 = vmul.f32 %v3311, 1.442695
    %v3328 = vpow.pop %v3327
    %v3329 = vmul.f32 %v3312, 1.442695
    %v3330 = vpow.pop %v3329
    %v3331 = vmul.f32 %v3313, 1.442695
    %v3332 = vpow.pop %v3331
    %v3333 = vmul.f32 %v3314, 1.442695
    %v3334 = vpow.pop %v3333
    %v3335 = vmul.f32 %v3315, 1.442695
    %v3336 = vpow.pop %v3335
    %v3337 = vmul.f32 %v3316, 1.442695
    %v3338 = vpow.pop %v3337
    %v3339 = vmul.f32 %v3317, 1.442695
    %v3340 = vpow.pop %v3339
    %v3341 = vmul.f32 %v3318, 1.442695
    %v3342 = vpow.pop %v3341
    %v3343 = vmul.f32 %v3319, 1.442695
    %v3344 = vpow.pop %v3343
    %v3345 = vmul.f32 %v3320, 1.442695
    %v3346 = vpow.pop %v3345
    %v3347 = vmul.f32 %v3321, 1.442695
    %v3348 = vpow.pop %v3347
    %v3349 = vmul.f32 %v3322, 1.442695
    %v3350 = vpow.pop %v3349
    %v3351 = vmul.f32 %v3323, 1.442695
    %v3352 = vpow.pop %v3351
    %v3353 = vmul.f32 %v3324, 1.442695
    %v3354 = vpow.pop %v3353
    %v3355 = vmul.f32 %v3325, 1.442695
    %v3356 = vpow.pop %v3355
    %v3357 = vmul.f32 %v3326, 1.442695
    %v3358 = vpow.pop %v3357
    %v3359 = vrot.slane %v3328, 4
    %v3360 = vadd.f32 %v3328, %v3359
    %v3361 = vrot.slane %v3360, 2
    %v3362 = vadd.f32 %v3360, %v3361
    %v3363 = vrot.slane %v3362, 1
    %v3364 = vadd.f32 %v3362, %v3363
    %v3365 = vrot.slane %v3330, 4
    %v3366 = vadd.f32 %v3330, %v3365
    %v3367 = vrot.slane %v3366, 2
    %v3368 = vadd.f32 %v3366, %v3367
    %v3369 = vrot.slane %v3368, 1
    %v3370 = vadd.f32 %v3368, %v3369
    %v3371 = vrot.slane %v3332, 4
    %v3372 = vadd.f32 %v3332, %v3371
    %v3373 = vrot.slane %v3372, 2
    %v3374 = vadd.f32 %v3372, %v3373
    %v3375 = vrot.slane %v3374, 1
    %v3376 = vadd.f32 %v3374, %v3375
    %v3377 = vrot.slane %v3334, 4
    %v3378 = vadd.f32 %v3334, %v3377
    %v3379 = vrot.slane %v3378, 2
    %v3380 = vadd.f32 %v3378, %v3379
    %v3381 = vrot.slane %v3380, 1
    %v3382 = vadd.f32 %v3380, %v3381
    %v3383 = vrot.slane %v3336, 4
    %v3384 = vadd.f32 %v3336, %v3383
    %v3385 = vrot.slane %v3384, 2
    %v3386 = vadd.f32 %v3384, %v3385
    %v3387 = vrot.slane %v3386, 1
    %v3388 = vadd.f32 %v3386, %v3387
    %v3389 = vrot.slane %v3338, 4
    %v3390 = vadd.f32 %v3338, %v3389
    %v3391 = vrot.slane %v3390, 2
    %v3392 = vadd.f32 %v3390, %v3391
    %v3393 = vrot.slane %v3392, 1
    %v3394 = vadd.f32 %v3392, %v3393
    %v3395 = vrot.slane %v3340, 4
    %v3396 = vadd.f32 %v3340, %v3395
    %v3397 = vrot.slane %v3396, 2
    %v3398 = vadd.f32 %v3396, %v3397
    %v3399 = vrot.slane %v3398, 1
    %v3400 = vadd.f32 %v3398, %v3399
    %v3401 = vrot.slane %v3342, 4
    %v3402 = vadd.f32 %v3342, %v3401
    %v3403 = vrot.slane %v3402, 2
    %v3404 = vadd.f32 %v3402, %v3403
    %v3405 = vrot.slane %v3404, 1
    %v3406 = vadd.f32 %v3404, %v3405
    %v3407 = vrot.slane %v3344, 4
    %v3408 = vadd.f32 %v3344, %v3407
    %v3409 = vrot.slane %v3408, 2
    %v3410 = vadd.f32 %v3408, %v3409
    %v3411 = vrot.slane %v3410, 1
    %v3412 = vadd.f32 %v3410, %v3411
    %v3413 = vrot.slane %v3346, 4
    %v3414 = vadd.f32 %v3346, %v3413
    %v3415 = vrot.slane %v3414, 2
    %v3416 = vadd.f32 %v3414, %v3415
    %v3417 = vrot.slane %v3416, 1
    %v3418 = vadd.f32 %v3416, %v3417
    %v3419 = vrot.slane %v3348, 4
    %v3420 = vadd.f32 %v3348, %v3419
    %v3421 = vrot.slane %v3420, 2
    %v3422 = vadd.f32 %v3420, %v3421
    %v3423 = vrot.slane %v3422, 1
    %v3424 = vadd.f32 %v3422, %v3423
    %v3425 = vrot.slane %v3350, 4
    %v3426 = vadd.f32 %v3350, %v3425
    %v3427 = vrot.slane %v3426, 2
    %v3428 = vadd.f32 %v3426, %v3427
    %v3429 = vrot.slane %v3428, 1
    %v3430 = vadd.f32 %v3428, %v3429
    %v3431 = vrot.slane %v3352, 4
    %v3432 = vadd.f32 %v3352, %v3431
    %v3433 = vrot.slane %v3432, 2
    %v3434 = vadd.f32 %v3432, %v3433
    %v3435 = vrot.slane %v3434, 1
    %v3436 = vadd.f32 %v3434, %v3435
    %v3437 = vrot.slane %v3354, 4
    %v3438 = vadd.f32 %v3354, %v3437
    %v3439 = vrot.slane %v3438, 2
    %v3440 = vadd.f32 %v3438, %v3439
    %v3441 = vrot.slane %v3440, 1
    %v3442 = vadd.f32 %v3440, %v3441
    %v3443 = vrot.slane %v3356, 4
    %v3444 = vadd.f32 %v3356, %v3443
    %v3445 = vrot.slane %v3444, 2
    %v3446 = vadd.f32 %v3444, %v3445
    %v3447 = vrot.slane %v3446, 1
    %v3448 = vadd.f32 %v3446, %v3447
    %v3449 = vrot.slane %v3358, 4
    %v3450 = vadd.f32 %v3358, %v3449
    %v3451 = vrot.slane %v3450, 2
    %v3452 = vadd.f32 %v3450, %v3451
    %v3453 = vrot.slane %v3452, 1
    %v3454 = vadd.f32 %v3452, %v3453
    %v3455 = vlog2.pop %v3364
    %v3456 = vmul.f32 %v3455, 0.6931472
    %v3457 = vlog2.pop %v3370
    %v3458 = vmul.f32 %v3457, 0.6931472
    %v3459 = vlog2.pop %v3376
    %v3460 = vmul.f32 %v3459, 0.6931472
    %v3461 = vlog2.pop %v3382
    %v3462 = vmul.f32 %v3461, 0.6931472
    %v3463 = vlog2.pop %v3388
    %v3464 = vmul.f32 %v3463, 0.6931472
    %v3465 = vlog2.pop %v3394
    %v3466 = vmul.f32 %v3465, 0.6931472
    %v3467 = vlog2.pop %v3400
    %v3468 = vmul.f32 %v3467, 0.6931472
    %v3469 = vlog2.pop %v3406
    %v3470 = vmul.f32 %v3469, 0.6931472
    %v3471 = vlog2.pop %v3412
    %v3472 = vmul.f32 %v3471, 0.6931472
    %v3473 = vlog2.pop %v3418
    %v3474 = vmul.f32 %v3473, 0.6931472
    %v3475 = vlog2.pop %v3424
    %v3476 = vmul.f32 %v3475, 0.6931472
    %v3477 = vlog2.pop %v3430
    %v3478 = vmul.f32 %v3477, 0.6931472
    %v3479 = vlog2.pop %v3436
    %v3480 = vmul.f32 %v3479, 0.6931472
    %v3481 = vlog2.pop %v3442
    %v3482 = vmul.f32 %v3481, 0.6931472
    %v3483 = vlog2.pop %v3448
    %v3484 = vmul.f32 %v3483, 0.6931472
    %v3485 = vlog2.pop %v3454
    %v3486 = vmul.f32 %v3485, 0.6931472
    %v3487 = vsub.f32 %v3311, %v3456
    %v3488 = vsub.f32 %v3312, %v3458
    %v3489 = vsub.f32 %v3313, %v3460
    %v3490 = vsub.f32 %v3314, %v3462
    %v3491 = vsub.f32 %v3315, %v3464
    %v3492 = vsub.f32 %v3316, %v3466
    %v3493 = vsub.f32 %v3317, %v3468
    %v3494 = vsub.f32 %v3318, %v3470
    %v3495 = vsub.f32 %v3319, %v3472
    %v3496 = vsub.f32 %v3320, %v3474
    %v3497 = vsub.f32 %v3321, %v3476
    %v3498 = vsub.f32 %v3322, %v3478
    %v3499 = vsub.f32 %v3323, %v3480
    %v3500 = vsub.f32 %v3324, %v3482
    %v3501 = vsub.f32 %v3325, %v3484
    %v3502 = vsub.f32 %v3326, %v3486
    %3503 = vst [vmem:[#allocation6] sm:$0xff] %v3487
    %3504 = vst [vmem:[#allocation6 + $0x8] sm:$0xff] %v3488
    %3505 = vst [vmem:[#allocation6 + $0x10] sm:$0xff] %v3489
    %3506 = vst [vmem:[#allocation6 + $0x18] sm:$0xff] %v3490
    %3507 = vst [vmem:[#allocation6 + $0x20] sm:$0xff] %v3491
    %3508 = vst [vmem:[#allocation6 + $0x28] sm:$0xff] %v3492
    %3509 = vst [vmem:[#allocation6 + $0x30] sm:$0xff] %v3493
    %3510 = vst [vmem:[#allocation6 + $0x38] sm:$0xff] %v3494
    %3511 = vst [vmem:[#allocation6 + $0x40] sm:$0xff] %v3495
    %3512 = vst [vmem:[#allocation6 + $0x48] sm:$0xff] %v3496
    %3513 = vst [vmem:[#allocation6 + $0x50] sm:$0xff] %v3497
    %3514 = vst [vmem:[#allocation6 + $0x58] sm:$0xff] %v3498
    %3515 = vst [vmem:[#allocation6 + $0x60] sm:$0xff] %v3499
    %3516 = vst [vmem:[#allocation6 + $0x68] sm:$0xff] %v3500
    %3517 = vst [vmem:[#allocation6 + $0x70] sm:$0xff] %v3501
    %3518 = vst [vmem:[#allocation6 + $0x78] sm:$0xff] %v3502
    // Predicated region
    $region38: #{_lambda_.1} parent=1 // pred_check
      _
    $region39: #{_lambda_.1} parent=1 // pred_check_branch
      %3520 = sbr.rel (0) target = $region41
    $region40: #{_lambda_.1} parent=1 // pred_region
      %3522 = vsyncadd [#allocation7], 0
      %s3523 = sshll.u32 [#allocation6], 4
      %s3524 = int_to_ptr.vmem [resolvable:$true] %s3523
      %s3525 = sshll.u32 %s8, 4
      %s3526 = int_to_ptr.hbm [resolvable:$true] %s3525
      %3531 = dma.vmem_to_hbm [thread:$0]  %s3524, 2048, %s3526, [#allocation7], 256, 256, 16
    $region41: #{_lambda_.1} parent=1 // pred_fallthru
      _
    // Predicated region
    $region42: #{_lambda_.1} parent=1 // pred_check
      _
    $region43: #{_lambda_.1} parent=1 // pred_check_branch
      %3533 = sbr.rel (0) target = $region45
    $region44: #{_lambda_.1} parent=1 // pred_region
      %3535 = vsyncadd [#allocation9], 0
      %s3537 = sshll.u32 [#allocation8], 4
      %s3538 = int_to_ptr.vmem [resolvable:$true] %s3537
      %s3539 = sshll.u32 %s9, 4
      %s3540 = int_to_ptr.hbm [resolvable:$true] %s3539
      %3542 = dma.vmem_to_hbm [thread:$0]  %s3538, 128, %s3540, [#allocation9]
    $region45: #{_lambda_.1} parent=1 // pred_fallthru
      _
    // Predicated region
    $region46: #{_lambda_.1} parent=1 // pred_check
      _
    $region47: #{_lambda_.1} parent=1 // pred_check_branch
      %3544 = sbr.rel (0) target = $region49
    $region48: #{_lambda_.1} parent=1 // pred_region
      %3546 = vsyncadd [#allocation9], 0
      %s3548 = sshll.u32 [#allocation10], 4
      %s3549 = int_to_ptr.vmem [resolvable:$true] %s3548
      %s3550 = sshll.u32 %s10, 4
      %s3551 = int_to_ptr.hbm [resolvable:$true] %s3550
      %3553 = dma.vmem_to_hbm [thread:$0]  %s3549, 128, %s3551, [#allocation9]
    $region49: #{_lambda_.1} parent=1 // pred_fallthru
      _
    // Predicated region
    $region50: #{_lambda_.1} parent=1 // pred_check
      _
    $region51: #{_lambda_.1} parent=1 // pred_check_branch
      %3555 = sbr.rel (0) target = $region53
    $region52: #{_lambda_.1} parent=1 // pred_region
      %3557 = dma.done [#allocation7], 2048
    $region53: #{_lambda_.1} parent=1 // pred_fallthru
      _
    // Predicated region
    $region54: #{_lambda_.1} parent=1 // pred_check
      _
    $region55: #{_lambda_.1} parent=1 // pred_check_branch
      %3559 = sbr.rel (0) target = $region57
    $region56: #{_lambda_.1} parent=1 // pred_region
      %3561 = dma.done [#allocation9], 128
    $region57: #{_lambda_.1} parent=1 // pred_fallthru
      _
    // Predicated region
    $region58: #{_lambda_.1} parent=1 // pred_check
      _
    $region59: #{_lambda_.1} parent=1 // pred_check_branch
      %3563 = sbr.rel (0) target = $region61
    $region60: #{_lambda_.1} parent=1 // pred_region
      %3565 = dma.done [#allocation9], 128
    $region61: #{_lambda_.1} parent=1 // pred_fallthru
      _
    %3566 = vsyncpa [#allocation7], 1
    %3567 = vsyncpa [#allocation9], 1

</llo_original>
